<compile_context>
chip_gen: v7x
topology: tpu7x:2x2x1
jax: 0.10.0
libtpu: 0.0.40
codegen_flags: <defaults>
</compile_context>

<pallas_src>
import functools
import math

import jax
import jax.numpy as jnp
from jax.experimental import pallas as pl
from jax.experimental.pallas import tpu as pltpu

NEG_SLOPE = 0.2  # deconv_block uses nn.LeakyReLU(0.2)


def _round_up(x, m):
    return ((x + m - 1) // m) * m


# -----------------------------------------------------------------------------
# Pallas kernel: tiled GEMM (bf16 MXU inputs, f32 accumulate) + bias + epilogue
# -----------------------------------------------------------------------------
def _gemm_epilogue_kernel(x_ref, w_ref, b_ref, o_ref, *, act):
    # x: [tm, K] bf16, w: [K, tn] bf16, b: [1, tn] f32  ->  o: [tm, tn]
    y = jnp.dot(x_ref[...], w_ref[...], preferred_element_type=jnp.float32)
    y = y + b_ref[...]
    if act == "relu":
        y = jnp.maximum(y, 0.0)
    elif act == "lrelu":
        y = jnp.maximum(y, NEG_SLOPE * y)          # mul+max (no compare/select)
    elif act == "tanh":
        y = jnp.tanh(y)                            # EUP
    o_ref[...] = y.astype(o_ref.dtype)


def gemm_epilogue(x, w, b, *, act="none", out_dtype=jnp.float32):
    """y = act(x @ w + b).  x: [M, K], w: [K, N], b: [1, N].  N must be 128-aligned."""
    M, K = x.shape
    N = w.shape[1]
    assert N % 128 == 0, "pad N to a multiple of 128 for lane-dense output"

    tm = 256 if M >= 256 else _round_up(M, 8)
    tn = 256 if N >= 256 else N
    Mp = _round_up(M, tm)
    if Mp != M:
        x = jnp.pad(x, ((0, Mp - M), (0, 0)))

    x = x.astype(jnp.bfloat16)
    w = w.astype(jnp.bfloat16)
    b = b.astype(jnp.float32)

    grid = (Mp // tm, N // tn)
    out_bytes = Mp * N * jnp.dtype(out_dtype).itemsize
    cost = pl.CostEstimate(
        flops=2 * Mp * K * N,
        transcendentals=(Mp * N if act == "tanh" else 0),
        bytes_accessed=Mp * K * 2 + K * N * 2 + N * 4 + out_bytes,
    )

    out = pl.pallas_call(
        functools.partial(_gemm_epilogue_kernel, act=act),
        out_shape=jax.ShapeDtypeStruct((Mp, N), out_dtype),
        grid=grid,
        in_specs=[
            pl.BlockSpec((tm, K), lambda i, j: (i, 0)),
            pl.BlockSpec((K, tn), lambda i, j: (0, j)),
            pl.BlockSpec((1, tn), lambda i, j: (0, j)),
        ],
        out_specs=pl.BlockSpec((tm, tn), lambda i, j: (i, j)),
        compiler_params=pltpu.CompilerParams(
            dimension_semantics=("parallel", "parallel"),
            vmem_limit_bytes=32 * 1024 * 1024,
        ),
        cost_estimate=cost,
    )(x, w, b)
    return out[:M] if Mp != M else out


# -----------------------------------------------------------------------------
# Decoder forward (matches Decoder.forward: relu(encode) -> deconvs -> tanh)
# -----------------------------------------------------------------------------
def decoder_forward(z, params):
    B = z.shape[0]
    w_enc, b_enc = params["w_enc"], params["b_enc"]
    C0 = params["deconvs"][0][0].shape[0]               # 16 * ch
    m = math.isqrt(w_enc.shape[1] // C0)                 # initial spatial size

    # encode Linear + ReLU; latent dim zero-padded to the weight's K (128).
    zp = jnp.pad(z, ((0, 0), (0, w_enc.shape[0] - z.shape[1])))
    x = gemm_epilogue(zp, w_enc, b_enc, act="relu", out_dtype=jnp.bfloat16)
    # w_enc columns were pre-permuted so this reshape is directly NHWC.
    x = x.reshape(B, m, m, C0)

    n_blocks = len(params["deconvs"])
    for idx, (w_flat, b_flat) in enumerate(params["deconvs"]):
        last = idx == n_blocks - 1
        Bx, H, W, Cin = x.shape
        Cout = w_flat.shape[1] // 4
        # ConvTranspose2d(k=2, s=2) == sub-pixel GEMM + depth-to-space.
        y = gemm_epilogue(
            x.reshape(Bx * H * W, Cin), w_flat, b_flat,
            act="tanh" if last else "lrelu",             # last block: no act, then tanh
            out_dtype=jnp.float32 if last else jnp.bfloat16,
        )
        y = y.reshape(Bx, H, W, 2, 2, Cout)
        # depth-to-space (plain-JAX glue; one 1x activation pass, no 9x expansion)
        x = jnp.transpose(y, (0, 1, 3, 2, 4, 5)).reshape(Bx, 2 * H, 2 * W, Cout)

    x = x[..., :3]                                       # drop Cout padding (32 -> 3)
    return jnp.transpose(x, (0, 3, 1, 2))                # NHWC -> NCHW


# -----------------------------------------------------------------------------
# Deterministic parameter init (shapes from Decoder.__init__, defaults)
# -----------------------------------------------------------------------------
def init_params(key, ch=32, m=2, latent_dim=100):
    params = {}

    # ---- self.encode = nn.Linear(latent_dim, 16*ch*m*m) ----
    din, dout = latent_dim, 16 * ch * m * m
    key, kw, kb = jax.random.split(key, 3)
    scale = 1.0 / math.sqrt(din)
    w_t = scale * jax.random.normal(kw, (dout, din), jnp.float32)   # torch [out, in]
    b_t = scale * jax.random.normal(kb, (dout,), jnp.float32)
    w = w_t.T                                                       # [din, dout]
    din_p = _round_up(din, 128)                                     # pad K 100 -> 128
    w = jnp.pad(w, ((0, din_p - din), (0, 0)))
    # Permute columns from torch's view(B, 16*ch, m, m) ordering (c*m*m + hw) to NHWC
    # flat ordering (hw*16*ch + c) so the GEMM output reshapes straight into NHWC.
    C = 16 * ch
    perm = (jnp.arange(m * m)[:, None] + jnp.arange(C)[None, :] * (m * m)).reshape(-1)
    params["w_enc"] = w[:, perm]
    params["b_enc"] = b_t[perm][None, :]

    # ---- 5x deconv_block: ConvTranspose2d(cin, cout, kernel_size=2, stride=2) ----
    chans = [16 * ch, 16 * ch, 8 * ch, 4 * ch, 2 * ch, 3]
    params["deconvs"] = []
    for cin, cout in zip(chans[:-1], chans[1:]):
        key, kw, kb = jax.random.split(key, 3)
        scale = 1.0 / math.sqrt(cin * 2 * 2)
        w_t = scale * jax.random.normal(kw, (cin, cout, 2, 2), jnp.float32)  # [Cin,Cout,kH,kW]
        b_t = scale * jax.random.normal(kb, (cout,), jnp.float32)
        cout_p = max(cout, 32)                         # pad last layer's Cout 3 -> 32
        if cout_p != cout:
            w_t = jnp.pad(w_t, ((0, 0), (0, cout_p - cout), (0, 0), (0, 0)))
            b_t = jnp.pad(b_t, (0, cout_p - cout))
        # sub-pixel GEMM layout: [Cin, (kh, kw, Cout)]
        w_flat = jnp.transpose(w_t, (0, 2, 3, 1)).reshape(cin, 4 * cout_p)
        b_flat = jnp.tile(b_t, 4)[None, :]
        params["deconvs"].append((w_flat, b_flat))
    return params


if __name__ == "__main__":
    B, LATENT = 2, 100
    key = jax.random.PRNGKey(0)
    k_z, k_par = jax.random.split(key)

    z = jax.random.normal(k_z, (B, LATENT), jnp.float32)
    params = init_params(k_par)

    out = jax.block_until_ready(jax.jit(decoder_forward)(z, params))
    assert out.shape == (B, 3, 64, 64) and out.dtype == jnp.float32
    assert bool(jnp.all(jnp.isfinite(out)))
    assert bool(jnp.all(jnp.abs(out) <= 1.0))           # tanh range
    print("KERNEL_OK")
</pallas_src>

<mosaic_0001>
module attributes {stable_mosaic.version = 11 : i64} {
  func.func @_gemm_epilogue_kernel(%arg0: i32, %arg1: i32, %arg2: memref<8x128xbf16, #tpu.memory_space<vmem>>, %arg3: memref<128x256xbf16, #tpu.memory_space<vmem>>, %arg4: memref<1x256xf32, #tpu.memory_space<vmem>>, %arg5: memref<8x256xbf16, #tpu.memory_space<vmem>>) attributes {dimension_semantics = [#tpu.dimension_semantics<parallel>, #tpu.dimension_semantics<parallel>], iteration_bounds = array<i64: 1, 8>, scalar_prefetch = 0 : i64, scratch_operands = 0 : i64, tpu.core_type = #tpu.core_type<tc>, window_params = [{transform_indices = @transform_0, window_bounds = array<i64: 8, 128>}, {transform_indices = @transform_1, window_bounds = array<i64: 128, 256>}, {transform_indices = @transform_2, window_bounds = array<i64: 1, 256>}, {transform_indices = @transform_3, window_bounds = array<i64: 8, 256>}]} {
    %c0 = arith.constant 0 : index
    %c0_0 = arith.constant 0 : index
    %0 = vector.load %arg2[%c0, %c0_0] : memref<8x128xbf16, #tpu.memory_space<vmem>>, vector<8x128xbf16>
    %c0_1 = arith.constant 0 : index
    %c0_2 = arith.constant 0 : index
    %1 = vector.load %arg3[%c0_1, %c0_2] : memref<128x256xbf16, #tpu.memory_space<vmem>>, vector<128x256xbf16>
    %cst = arith.constant dense<0.000000e+00> : vector<8x256xf32>
    %2 = tpu.matmul %0, %1, %cst {dimension_numbers = #tpu.dot_dimension_numbers<[1], [0], [0], [1], [0, 0, 1, 1], [], []>} : vector<8x128xbf16>, vector<128x256xbf16>, vector<8x256xf32> -> vector<8x256xf32>
    %c0_3 = arith.constant 0 : index
    %c0_4 = arith.constant 0 : index
    %3 = vector.load %arg4[%c0_3, %c0_4] : memref<1x256xf32, #tpu.memory_space<vmem>>, vector<1x256xf32>
    %4 = vector.broadcast %3 : vector<1x256xf32> to vector<8x256xf32>
    %5 = arith.addf %2, %4 : vector<8x256xf32>
    %cst_5 = arith.constant 0.000000e+00 : f32
    %6 = vector.broadcast %cst_5 : f32 to vector<8x256xf32>
    %7 = arith.maximumf %5, %6 : vector<8x256xf32>
    %8 = arith.truncf %7 : vector<8x256xf32> to vector<8x256xbf16>
    %c0_6 = arith.constant 0 : index
    %c0_7 = arith.constant 0 : index
    %9 = vector.load %arg5[%c0_6, %c0_7] : memref<8x256xbf16, #tpu.memory_space<vmem>>, vector<8x256xbf16>
    tpu.vector_store %arg5[%c0_6, %c0_7], %8 {strides = array<i32>} : memref<8x256xbf16, #tpu.memory_space<vmem>>, vector<8x256xbf16>,
    return
  }
  func.func @transform_0(%arg0: i32, %arg1: i32) -> (i32, i32) {
    %c0_i32 = arith.constant 0 : i32
    %c0_i32_0 = arith.constant 0 : i32
    return %arg0, %c0_i32 : i32, i32
  }
  func.func @transform_1(%arg0: i32, %arg1: i32) -> (i32, i32) {
    %c0_i32 = arith.constant 0 : i32
    %c0_i32_0 = arith.constant 0 : i32
    return %c0_i32, %arg1 : i32, i32
  }
  func.func @transform_2(%arg0: i32, %arg1: i32) -> (i32, i32) {
    %c0_i32 = arith.constant 0 : i32
    %c0_i32_0 = arith.constant 0 : i32
    return %c0_i32, %arg1 : i32, i32
  }
  func.func @transform_3(%arg0: i32, %arg1: i32) -> (i32, i32) {
    %c0_i32 = arith.constant 0 : i32
    return %arg0, %arg1 : i32, i32
  }
}

module attributes {stable_mosaic.version = 11 : i64} {
  func.func @_gemm_epilogue_kernel(%arg0: i32, %arg1: i32, %arg2: memref<8x512xbf16, #tpu.memory_space<vmem>>, %arg3: memref<512x256xbf16, #tpu.memory_space<vmem>>, %arg4: memref<1x256xf32, #tpu.memory_space<vmem>>, %arg5: memref<8x256xbf16, #tpu.memory_space<vmem>>) attributes {dimension_semantics = [#tpu.dimension_semantics<parallel>, #tpu.dimension_semantics<parallel>], iteration_bounds = array<i64: 1, 8>, scalar_prefetch = 0 : i64, scratch_operands = 0 : i64, tpu.core_type = #tpu.core_type<tc>, window_params = [{transform_indices = @transform_0, window_bounds = array<i64: 8, 512>}, {transform_indices = @transform_1, window_bounds = array<i64: 512, 256>}, {transform_indices = @transform_2, window_bounds = array<i64: 1, 256>}, {transform_indices = @transform_3, window_bounds = array<i64: 8, 256>}]} {
    %c0 = arith.constant 0 : index
    %c0_0 = arith.constant 0 : index
    %0 = vector.load %arg2[%c0, %c0_0] : memref<8x512xbf16, #tpu.memory_space<vmem>>, vector<8x512xbf16>
    %c0_1 = arith.constant 0 : index
    %c0_2 = arith.constant 0 : index
    %1 = vector.load %arg3[%c0_1, %c0_2] : memref<512x256xbf16, #tpu.memory_space<vmem>>, vector<512x256xbf16>
    %cst = arith.constant dense<0.000000e+00> : vector<8x256xf32>
    %2 = tpu.matmul %0, %1, %cst {dimension_numbers = #tpu.dot_dimension_numbers<[1], [0], [0], [1], [0, 0, 1, 1], [], []>} : vector<8x512xbf16>, vector<512x256xbf16>, vector<8x256xf32> -> vector<8x256xf32>
    %c0_3 = arith.constant 0 : index
    %c0_4 = arith.constant 0 : index
    %3 = vector.load %arg4[%c0_3, %c0_4] : memref<1x256xf32, #tpu.memory_space<vmem>>, vector<1x256xf32>
    %4 = vector.broadcast %3 : vector<1x256xf32> to vector<8x256xf32>
    %5 = arith.addf %2, %4 : vector<8x256xf32>
    %cst_5 = arith.constant 2.000000e-01 : f32
    %6 = vector.broadcast %cst_5 : f32 to vector<8x256xf32>
    %7 = arith.mulf %6, %5 : vector<8x256xf32>
    %8 = arith.maximumf %5, %7 : vector<8x256xf32>
    %9 = arith.truncf %8 : vector<8x256xf32> to vector<8x256xbf16>
    %c0_6 = arith.constant 0 : index
    %c0_7 = arith.constant 0 : index
    %10 = vector.load %arg5[%c0_6, %c0_7] : memref<8x256xbf16, #tpu.memory_space<vmem>>, vector<8x256xbf16>
    tpu.vector_store %arg5[%c0_6, %c0_7], %9 {strides = array<i32>} : memref<8x256xbf16, #tpu.memory_space<vmem>>, vector<8x256xbf16>,
    return
  }
  func.func @transform_0(%arg0: i32, %arg1: i32) -> (i32, i32) {
    %c0_i32 = arith.constant 0 : i32
    %c0_i32_0 = arith.constant 0 : i32
    return %arg0, %c0_i32 : i32, i32
  }
  func.func @transform_1(%arg0: i32, %arg1: i32) -> (i32, i32) {
    %c0_i32 = arith.constant 0 : i32
    %c0_i32_0 = arith.constant 0 : i32
    return %c0_i32, %arg1 : i32, i32
  }
  func.func @transform_2(%arg0: i32, %arg1: i32) -> (i32, i32) {
    %c0_i32 = arith.constant 0 : i32
    %c0_i32_0 = arith.constant 0 : i32
    return %c0_i32, %arg1 : i32, i32
  }
  func.func @transform_3(%arg0: i32, %arg1: i32) -> (i32, i32) {
    %c0_i32 = arith.constant 0 : i32
    return %arg0, %arg1 : i32, i32
  }
}

module attributes {stable_mosaic.version = 11 : i64} {
  func.func @_gemm_epilogue_kernel(%arg0: i32, %arg1: i32, %arg2: memref<32x512xbf16, #tpu.memory_space<vmem>>, %arg3: memref<512x256xbf16, #tpu.memory_space<vmem>>, %arg4: memref<1x256xf32, #tpu.memory_space<vmem>>, %arg5: memref<32x256xbf16, #tpu.memory_space<vmem>>) attributes {dimension_semantics = [#tpu.dimension_semantics<parallel>, #tpu.dimension_semantics<parallel>], iteration_bounds = array<i64: 1, 4>, scalar_prefetch = 0 : i64, scratch_operands = 0 : i64, tpu.core_type = #tpu.core_type<tc>, window_params = [{transform_indices = @transform_0, window_bounds = array<i64: 32, 512>}, {transform_indices = @transform_1, window_bounds = array<i64: 512, 256>}, {transform_indices = @transform_2, window_bounds = array<i64: 1, 256>}, {transform_indices = @transform_3, window_bounds = array<i64: 32, 256>}]} {
    %c0 = arith.constant 0 : index
    %c0_0 = arith.constant 0 : index
    %0 = vector.load %arg2[%c0, %c0_0] : memref<32x512xbf16, #tpu.memory_space<vmem>>, vector<32x512xbf16>
    %c0_1 = arith.constant 0 : index
    %c0_2 = arith.constant 0 : index
    %1 = vector.load %arg3[%c0_1, %c0_2] : memref<512x256xbf16, #tpu.memory_space<vmem>>, vector<512x256xbf16>
    %cst = arith.constant dense<0.000000e+00> : vector<32x256xf32>
    %2 = tpu.matmul %0, %1, %cst {dimension_numbers = #tpu.dot_dimension_numbers<[1], [0], [0], [1], [0, 0, 1, 1], [], []>} : vector<32x512xbf16>, vector<512x256xbf16>, vector<32x256xf32> -> vector<32x256xf32>
    %c0_3 = arith.constant 0 : index
    %c0_4 = arith.constant 0 : index
    %3 = vector.load %arg4[%c0_3, %c0_4] : memref<1x256xf32, #tpu.memory_space<vmem>>, vector<1x256xf32>
    %4 = vector.broadcast %3 : vector<1x256xf32> to vector<32x256xf32>
    %5 = arith.addf %2, %4 : vector<32x256xf32>
    %cst_5 = arith.constant 2.000000e-01 : f32
    %6 = vector.broadcast %cst_5 : f32 to vector<32x256xf32>
    %7 = arith.mulf %6, %5 : vector<32x256xf32>
    %8 = arith.maximumf %5, %7 : vector<32x256xf32>
    %9 = arith.truncf %8 : vector<32x256xf32> to vector<32x256xbf16>
    %c0_6 = arith.constant 0 : index
    %c0_7 = arith.constant 0 : index
    %10 = vector.load %arg5[%c0_6, %c0_7] : memref<32x256xbf16, #tpu.memory_space<vmem>>, vector<32x256xbf16>
    tpu.vector_store %arg5[%c0_6, %c0_7], %9 {strides = array<i32>} : memref<32x256xbf16, #tpu.memory_space<vmem>>, vector<32x256xbf16>,
    return
  }
  func.func @transform_0(%arg0: i32, %arg1: i32) -> (i32, i32) {
    %c0_i32 = arith.constant 0 : i32
    %c0_i32_0 = arith.constant 0 : i32
    return %arg0, %c0_i32 : i32, i32
  }
  func.func @transform_1(%arg0: i32, %arg1: i32) -> (i32, i32) {
    %c0_i32 = arith.constant 0 : i32
    %c0_i32_0 = arith.constant 0 : i32
    return %c0_i32, %arg1 : i32, i32
  }
  func.func @transform_2(%arg0: i32, %arg1: i32) -> (i32, i32) {
    %c0_i32 = arith.constant 0 : i32
    %c0_i32_0 = arith.constant 0 : i32
    return %c0_i32, %arg1 : i32, i32
  }
  func.func @transform_3(%arg0: i32, %arg1: i32) -> (i32, i32) {
    %c0_i32 = arith.constant 0 : i32
    return %arg0, %arg1 : i32, i32
  }
}

module attributes {stable_mosaic.version = 11 : i64} {
  func.func @_gemm_epilogue_kernel(%arg0: i32, %arg1: i32, %arg2: memref<128x256xbf16, #tpu.memory_space<vmem>>, %arg3: memref<256x256xbf16, #tpu.memory_space<vmem>>, %arg4: memref<1x256xf32, #tpu.memory_space<vmem>>, %arg5: memref<128x256xbf16, #tpu.memory_space<vmem>>) attributes {dimension_semantics = [#tpu.dimension_semantics<parallel>, #tpu.dimension_semantics<parallel>], iteration_bounds = array<i64: 1, 2>, scalar_prefetch = 0 : i64, scratch_operands = 0 : i64, tpu.core_type = #tpu.core_type<tc>, window_params = [{transform_indices = @transform_0, window_bounds = array<i64: 128, 256>}, {transform_indices = @transform_1, window_bounds = array<i64: 256, 256>}, {transform_indices = @transform_2, window_bounds = array<i64: 1, 256>}, {transform_indices = @transform_3, window_bounds = array<i64: 128, 256>}]} {
    %c0 = arith.constant 0 : index
    %c0_0 = arith.constant 0 : index
    %0 = vector.load %arg2[%c0, %c0_0] : memref<128x256xbf16, #tpu.memory_space<vmem>>, vector<128x256xbf16>
    %c0_1 = arith.constant 0 : index
    %c0_2 = arith.constant 0 : index
    %1 = vector.load %arg3[%c0_1, %c0_2] : memref<256x256xbf16, #tpu.memory_space<vmem>>, vector<256x256xbf16>
    %cst = arith.constant dense<0.000000e+00> : vector<128x256xf32>
    %2 = tpu.matmul %0, %1, %cst {dimension_numbers = #tpu.dot_dimension_numbers<[1], [0], [0], [1], [0, 0, 1, 1], [], []>} : vector<128x256xbf16>, vector<256x256xbf16>, vector<128x256xf32> -> vector<128x256xf32>
    %c0_3 = arith.constant 0 : index
    %c0_4 = arith.constant 0 : index
    %3 = vector.load %arg4[%c0_3, %c0_4] : memref<1x256xf32, #tpu.memory_space<vmem>>, vector<1x256xf32>
    %4 = vector.broadcast %3 : vector<1x256xf32> to vector<128x256xf32>
    %5 = arith.addf %2, %4 : vector<128x256xf32>
    %cst_5 = arith.constant 2.000000e-01 : f32
    %6 = vector.broadcast %cst_5 : f32 to vector<128x256xf32>
    %7 = arith.mulf %6, %5 : vector<128x256xf32>
    %8 = arith.maximumf %5, %7 : vector<128x256xf32>
    %9 = arith.truncf %8 : vector<128x256xf32> to vector<128x256xbf16>
    %c0_6 = arith.constant 0 : index
    %c0_7 = arith.constant 0 : index
    %10 = vector.load %arg5[%c0_6, %c0_7] : memref<128x256xbf16, #tpu.memory_space<vmem>>, vector<128x256xbf16>
    tpu.vector_store %arg5[%c0_6, %c0_7], %9 {strides = array<i32>} : memref<128x256xbf16, #tpu.memory_space<vmem>>, vector<128x256xbf16>,
    return
  }
  func.func @transform_0(%arg0: i32, %arg1: i32) -> (i32, i32) {
    %c0_i32 = arith.constant 0 : i32
    %c0_i32_0 = arith.constant 0 : i32
    return %arg0, %c0_i32 : i32, i32
  }
  func.func @transform_1(%arg0: i32, %arg1: i32) -> (i32, i32) {
    %c0_i32 = arith.constant 0 : i32
    %c0_i32_0 = arith.constant 0 : i32
    return %c0_i32, %arg1 : i32, i32
  }
  func.func @transform_2(%arg0: i32, %arg1: i32) -> (i32, i32) {
    %c0_i32 = arith.constant 0 : i32
    %c0_i32_0 = arith.constant 0 : i32
    return %c0_i32, %arg1 : i32, i32
  }
  func.func @transform_3(%arg0: i32, %arg1: i32) -> (i32, i32) {
    %c0_i32 = arith.constant 0 : i32
    return %arg0, %arg1 : i32, i32
  }
}

module attributes {stable_mosaic.version = 11 : i64} {
  func.func @_gemm_epilogue_kernel(%arg0: i32, %arg1: i32, %arg2: memref<256x128xbf16, #tpu.memory_space<vmem>>, %arg3: memref<128x256xbf16, #tpu.memory_space<vmem>>, %arg4: memref<1x256xf32, #tpu.memory_space<vmem>>, %arg5: memref<256x256xbf16, #tpu.memory_space<vmem>>) attributes {dimension_semantics = [#tpu.dimension_semantics<parallel>, #tpu.dimension_semantics<parallel>], iteration_bounds = array<i64: 2, 1>, scalar_prefetch = 0 : i64, scratch_operands = 0 : i64, tpu.core_type = #tpu.core_type<tc>, window_params = [{transform_indices = @transform_0, window_bounds = array<i64: 256, 128>}, {transform_indices = @transform_1, window_bounds = array<i64: 128, 256>}, {transform_indices = @transform_2, window_bounds = array<i64: 1, 256>}, {transform_indices = @transform_3, window_bounds = array<i64: 256, 256>}]} {
    %c0 = arith.constant 0 : index
    %c0_0 = arith.constant 0 : index
    %0 = vector.load %arg2[%c0, %c0_0] : memref<256x128xbf16, #tpu.memory_space<vmem>>, vector<256x128xbf16>
    %c0_1 = arith.constant 0 : index
    %c0_2 = arith.constant 0 : index
    %1 = vector.load %arg3[%c0_1, %c0_2] : memref<128x256xbf16, #tpu.memory_space<vmem>>, vector<128x256xbf16>
    %cst = arith.constant dense<0.000000e+00> : vector<256x256xf32>
    %2 = tpu.matmul %0, %1, %cst {dimension_numbers = #tpu.dot_dimension_numbers<[1], [0], [0], [1], [0, 0, 1, 1], [], []>} : vector<256x128xbf16>, vector<128x256xbf16>, vector<256x256xf32> -> vector<256x256xf32>
    %c0_3 = arith.constant 0 : index
    %c0_4 = arith.constant 0 : index
    %3 = vector.load %arg4[%c0_3, %c0_4] : memref<1x256xf32, #tpu.memory_space<vmem>>, vector<1x256xf32>
    %4 = vector.broadcast %3 : vector<1x256xf32> to vector<256x256xf32>
    %5 = arith.addf %2, %4 : vector<256x256xf32>
    %cst_5 = arith.constant 2.000000e-01 : f32
    %6 = vector.broadcast %cst_5 : f32 to vector<256x256xf32>
    %7 = arith.mulf %6, %5 : vector<256x256xf32>
    %8 = arith.maximumf %5, %7 : vector<256x256xf32>
    %9 = arith.truncf %8 : vector<256x256xf32> to vector<256x256xbf16>
    %c0_6 = arith.constant 0 : index
    %c0_7 = arith.constant 0 : index
    %10 = vector.load %arg5[%c0_6, %c0_7] : memref<256x256xbf16, #tpu.memory_space<vmem>>, vector<256x256xbf16>
    tpu.vector_store %arg5[%c0_6, %c0_7], %9 {strides = array<i32>} : memref<256x256xbf16, #tpu.memory_space<vmem>>, vector<256x256xbf16>,
    return
  }
  func.func @transform_0(%arg0: i32, %arg1: i32) -> (i32, i32) {
    %c0_i32 = arith.constant 0 : i32
    %c0_i32_0 = arith.constant 0 : i32
    return %arg0, %c0_i32 : i32, i32
  }
  func.func @transform_1(%arg0: i32, %arg1: i32) -> (i32, i32) {
    %c0_i32 = arith.constant 0 : i32
    %c0_i32_0 = arith.constant 0 : i32
    return %c0_i32, %arg1 : i32, i32
  }
  func.func @transform_2(%arg0: i32, %arg1: i32) -> (i32, i32) {
    %c0_i32 = arith.constant 0 : i32
    %c0_i32_0 = arith.constant 0 : i32
    return %c0_i32, %arg1 : i32, i32
  }
  func.func @transform_3(%arg0: i32, %arg1: i32) -> (i32, i32) {
    %c0_i32 = arith.constant 0 : i32
    return %arg0, %arg1 : i32, i32
  }
}

module attributes {stable_mosaic.version = 11 : i64} {
  func.func @_gemm_epilogue_kernel(%arg0: i32, %arg1: i32, %arg2: memref<256x64xbf16, #tpu.memory_space<vmem>>, %arg3: memref<64x128xbf16, #tpu.memory_space<vmem>>, %arg4: memref<1x128xf32, #tpu.memory_space<vmem>>, %arg5: memref<256x128xf32, #tpu.memory_space<vmem>>) attributes {dimension_semantics = [#tpu.dimension_semantics<parallel>, #tpu.dimension_semantics<parallel>], iteration_bounds = array<i64: 8, 1>, scalar_prefetch = 0 : i64, scratch_operands = 0 : i64, tpu.core_type = #tpu.core_type<tc>, window_params = [{transform_indices = @transform_0, window_bounds = array<i64: 256, 64>}, {transform_indices = @transform_1, window_bounds = array<i64: 64, 128>}, {transform_indices = @transform_2, window_bounds = array<i64: 1, 128>}, {transform_indices = @transform_3, window_bounds = array<i64: 256, 128>}]} {
    %c0 = arith.constant 0 : index
    %c0_0 = arith.constant 0 : index
    %0 = vector.load %arg2[%c0, %c0_0] : memref<256x64xbf16, #tpu.memory_space<vmem>>, vector<256x64xbf16>
    %c0_1 = arith.constant 0 : index
    %c0_2 = arith.constant 0 : index
    %1 = vector.load %arg3[%c0_1, %c0_2] : memref<64x128xbf16, #tpu.memory_space<vmem>>, vector<64x128xbf16>
    %cst = arith.constant dense<0.000000e+00> : vector<256x128xf32>
    %2 = tpu.matmul %0, %1, %cst {dimension_numbers = #tpu.dot_dimension_numbers<[1], [0], [0], [1], [0, 0, 1, 1], [], []>} : vector<256x64xbf16>, vector<64x128xbf16>, vector<256x128xf32> -> vector<256x128xf32>
    %c0_3 = arith.constant 0 : index
    %c0_4 = arith.constant 0 : index
    %3 = vector.load %arg4[%c0_3, %c0_4] : memref<1x128xf32, #tpu.memory_space<vmem>>, vector<1x128xf32>
    %4 = vector.broadcast %3 : vector<1x128xf32> to vector<256x128xf32>
    %5 = arith.addf %2, %4 : vector<256x128xf32>
    %6 = math.tanh %5 : vector<256x128xf32>
    %c0_5 = arith.constant 0 : index
    %c0_6 = arith.constant 0 : index
    %7 = vector.load %arg5[%c0_5, %c0_6] : memref<256x128xf32, #tpu.memory_space<vmem>>, vector<256x128xf32>
    tpu.vector_store %arg5[%c0_5, %c0_6], %6 {strides = array<i32>} : memref<256x128xf32, #tpu.memory_space<vmem>>, vector<256x128xf32>,
    return
  }
  func.func @transform_0(%arg0: i32, %arg1: i32) -> (i32, i32) {
    %c0_i32 = arith.constant 0 : i32
    %c0_i32_0 = arith.constant 0 : i32
    return %arg0, %c0_i32 : i32, i32
  }
  func.func @transform_1(%arg0: i32, %arg1: i32) -> (i32, i32) {
    %c0_i32 = arith.constant 0 : i32
    %c0_i32_0 = arith.constant 0 : i32
    return %c0_i32, %arg1 : i32, i32
  }
  func.func @transform_2(%arg0: i32, %arg1: i32) -> (i32, i32) {
    %c0_i32 = arith.constant 0 : i32
    %c0_i32_0 = arith.constant 0 : i32
    return %c0_i32, %arg1 : i32, i32
  }
  func.func @transform_3(%arg0: i32, %arg1: i32) -> (i32, i32) {
    %c0_i32 = arith.constant 0 : i32
    return %arg0, %arg1 : i32, i32
  }
}

</mosaic_0001>

<llo_original>
// kernel: decoder_forward.6
$region0: #{decoder_forward.6}
  #allocation0 [shape = 'u32[]', space=smem, size = 0x4, offset = 0x4, fixed_abs, tag = 'smem constant byte address 0x4 - core index']
  #allocation1 [shape = 'u32[144,128]{1,0:T(1,128)}', space=vmem, size = 0x12000, scoped, tag = 'internal scratch']
  %s0 = inlined_call_operand.vmem [shape: bf16[8,128], index: 0, kind: input, shape index: {}]
  %s1 = inlined_call_operand.vmem [shape: bf16[128,2048], index: 1, kind: input, shape index: {}]
  %s2 = inlined_call_operand.hbm [shape: f32[1,2048], index: 2, kind: input, shape index: {}]
  %s3 = inlined_call_operand.vmem [shape: bf16[8,2048], index: 3, kind: output, shape index: {}]
  %s4 = sld [smem:[#allocation0]]
  $region87: #{decoder_forward.6} parent=0
    _
  %s6 = ssub.s32 1, %s4
  %s7 = scalar_select 0, %s6, %s4
  $region1: #{decoder_forward.6} parent=0
    #allocation2 [shape = 'u8[131072]{0}', space=vmem, size = 0x20000, scoped, tag = 'input window, operand 1']
    #allocation3 [shape = 'u8[2048]{0}', space=vmem, size = 0x800, scoped, tag = 'input window, operand 2']
    #allocation4 [shape = 's32[2]{0}', space=sflag, size = 0x8, scoped, tag = 'scoped memory for decoder_forward.6']
    %8 = vsyncpa [#allocation4], 0
    %s9 = scalar_lea.sflag [#allocation4], 1
    %10 = vsyncpa %s9, 0
    loop: start=0, step=1, limit=10
    $region2: #{decoder_forward.6} parent=1 // loop_pre_header
      _
    $region3: #{decoder_forward.6} parent=1 // loop_header
      %s12 = sphi 0, %s16
      %p13 = scmp.ge.s32.totalorder %s12, 10
      %s19 = sphi 0, %s31
      %s20 = sphi 0, %s27
      %s21 = sphi 0, %s19
      %s22 = sphi 0, %s20
      %s23 = sphi 0, %s21
      %s24 = sphi 0, %s22
      %s34 = sphi 0, %s36
      %s37 = sphi 0, %s34
      %s38 = sphi 0, %s37
      %s54 = sphi 0, %s38
      %s60 = sphi 0, %s62
      %s63 = sphi 0, %s60
      %s64 = sphi 0, %s63
      %s80 = sphi 0, %s64
      %s86 = sphi 0, %s88
      %s89 = sphi 0, %s86
      %s90 = sphi 0, %s89
      %s106 = sphi 0, %s90
      %s114 = sphi 0, %s116
      %s117 = sphi 0, %s114
      %s118 = sphi 0, %s117
      %s134 = sphi 0, %s118
    $region4: #{decoder_forward.6} parent=1 // loop_header_branch
      %15 = sbr.rel (%p13) target = $region8
    $region5: #{decoder_forward.6} parent=1 // loop_body
      %s17 = ssub.s32 %s12, 1
      %s18 = ssub.s32 %s12, 2
      %s25 = sadd.s32 1, %s20
      %p26 = scmp.ge.s32.totalorder %s25, 8
      %s27 = scalar_select %p26, 0, %s25
      %s28 = sadd.s32 1, %s19
      %s29 = scalar_select %p26, %s28, %s19
      %p30 = scmp.ge.s32.totalorder %s29, 1
      %s31 = scalar_select %p30, 0, %s29
      %s32 = ssub.s32 %s19, %s31
      %p33 = scmp.eq.s32.totalorder %s32, 0
      %s35 = sadd.s32 %s34, 1
      %s36 = scalar_select %p33, %s34, %s35
      %p39 = pneg %p33
      %p40 = scmp.eq.s32.totalorder %s12, 7
      %p41 = por %p39, %p40
      %p42 = scmp.ne.s32.totalorder %s34, %s37
      %p43 = scmp.eq.s32.totalorder %s12, 0
      %p44 = por %p42, %p43
      %p45 = scmp.ne.s32.totalorder %s34, %s37
      %p46 = scmp.eq.s32.totalorder %s17, 7
      %p47 = por %p45, %p46
      %p48 = scmp.ne.s32.totalorder %s37, %s38
      %p49 = scmp.eq.s32.totalorder %s17, 0
      %p50 = por %p48, %p49
      %p51 = scmp.ne.s32.totalorder %s37, %s38
      %p52 = scmp.eq.s32.totalorder %s18, 7
      %p53 = por %p51, %p52
      %p55 = scmp.ne.s32.totalorder %s38, %s54
      %p56 = scmp.eq.s32.totalorder %s18, 0
      %p57 = por %p55, %p56
      %s58 = ssub.s32 %s20, %s27
      %p59 = scmp.eq.s32.totalorder %s58, 0
      %s61 = sadd.s32 %s60, 1
      %s62 = scalar_select %p59, %s60, %s61
      %p65 = pneg %p59
      %p66 = scmp.eq.s32.totalorder %s12, 7
      %p67 = por %p65, %p66
      %p68 = scmp.ne.s32.totalorder %s60, %s63
      %p69 = scmp.eq.s32.totalorder %s12, 0
      %p70 = por %p68, %p69
      %p71 = scmp.ne.s32.totalorder %s60, %s63
      %p72 = scmp.eq.s32.totalorder %s17, 7
      %p73 = por %p71, %p72
      %p74 = scmp.ne.s32.totalorder %s63, %s64
      %p75 = scmp.eq.s32.totalorder %s17, 0
      %p76 = por %p74, %p75
      %p77 = scmp.ne.s32.totalorder %s63, %s64
      %p78 = scmp.eq.s32.totalorder %s18, 7
      %p79 = por %p77, %p78
      %p81 = scmp.ne.s32.totalorder %s64, %s80
      %p82 = scmp.eq.s32.totalorder %s18, 0
      %p83 = por %p81, %p82
      %s84 = ssub.s32 %s20, %s27
      %p85 = scmp.eq.s32.totalorder %s84, 0
      %s87 = sadd.s32 %s86, 1
      %s88 = scalar_select %p85, %s86, %s87
      %p91 = pneg %p85
      %p92 = scmp.eq.s32.totalorder %s12, 7
      %p93 = por %p91, %p92
      %p94 = scmp.ne.s32.totalorder %s86, %s89
      %p95 = scmp.eq.s32.totalorder %s12, 0
      %p96 = por %p94, %p95
      %p97 = scmp.ne.s32.totalorder %s86, %s89
      %p98 = scmp.eq.s32.totalorder %s17, 7
      %p99 = por %p97, %p98
      %p100 = scmp.ne.s32.totalorder %s89, %s90
      %p101 = scmp.eq.s32.totalorder %s17, 0
      %p102 = por %p100, %p101
      %p103 = scmp.ne.s32.totalorder %s89, %s90
      %p104 = scmp.eq.s32.totalorder %s18, 7
      %p105 = por %p103, %p104
      %p107 = scmp.ne.s32.totalorder %s90, %s106
      %p108 = scmp.eq.s32.totalorder %s18, 0
      %p109 = por %p107, %p108
      %s110 = ssub.s32 %s19, %s31
      %s111 = ssub.s32 %s20, %s27
      %s112 = sor.u32 %s110, %s111
      %p113 = scmp.eq.s32.totalorder %s112, 0
      %s115 = sadd.s32 %s114, 1
      %s116 = scalar_select %p113, %s114, %s115
      %p119 = pneg %p113
      %p120 = scmp.eq.s32.totalorder %s12, 7
      %p121 = por %p119, %p120
      %p122 = scmp.ne.s32.totalorder %s114, %s117
      %p123 = scmp.eq.s32.totalorder %s12, 0
      %p124 = por %p122, %p123
      %p125 = scmp.ne.s32.totalorder %s114, %s117
      %p126 = scmp.eq.s32.totalorder %s17, 7
      %p127 = por %p125, %p126
      %p128 = scmp.ne.s32.totalorder %s117, %s118
      %p129 = scmp.eq.s32.totalorder %s17, 0
      %p130 = por %p128, %p129
      %p131 = scmp.ne.s32.totalorder %s117, %s118
      %p132 = scmp.eq.s32.totalorder %s18, 7
      %p133 = por %p131, %p132
      %p135 = scmp.ne.s32.totalorder %s118, %s134
      %p136 = scmp.eq.s32.totalorder %s18, 0
      %p137 = por %p135, %p136
      %p138 = scmp.le.s32.totalorder 1, %s12
      %p139 = scmp.lt.s32.totalorder %s12, 9
      %p140 = pnand %p138, %p139
      %p141 = pneg %p140
      // Predicated region
      $region9: #{decoder_forward.6} parent=5 // pred_check
        _
      $region10: #{decoder_forward.6} parent=5 // pred_check_branch
        %143 = sbr.rel (%p140) target = $region12
      $region11: #{decoder_forward.6} parent=5 // pred_region
        %s144 = ssub.s32 %s12, 1
        // Predicated region
        $region13: #{decoder_forward.6} parent=11 // pred_check
          %p145 = pneg %p50
        $region14: #{decoder_forward.6} parent=11 // pred_check_branch
          %147 = sbr.rel (%p145) target = $region16
        $region15: #{decoder_forward.6} parent=11 // pred_region
          %p148 = scmp.lt.s32.totalorder %s21, 0
          %s149 = scalar_select %p148, %s21, 0
          %s150 = smul.addr %s149, 4
          %s151 = scalar_lea.vmem %s0, %s150
        $region16: #{decoder_forward.6} parent=11 // pred_fallthru
          _
      $region12: #{decoder_forward.6} parent=5 // pred_fallthru
        _
      %p152 = scmp.lt.s32.totalorder %s12, 8
      // Predicated region
      $region17: #{decoder_forward.6} parent=5 // pred_check
        %p153 = pneg %p152
      $region18: #{decoder_forward.6} parent=5 // pred_check_branch
        %155 = sbr.rel (%p153) target = $region20
      $region19: #{decoder_forward.6} parent=5 // pred_region
        // Predicated region
        $region21: #{decoder_forward.6} parent=19 // pred_check
          %p156 = pneg %p70
        $region22: #{decoder_forward.6} parent=19 // pred_check_branch
          %158 = sbr.rel (%p156) target = $region24
        $region23: #{decoder_forward.6} parent=19 // pred_region
          %s159 = sand.u32 %s60, 1
          %s160 = sand.u32 %s60, 1
          %s161 = smul.addr %s160, 128
          %s162 = scalar_lea.vmem [#allocation2], %s161
          %s163 = smul.u32 2, %s20
          %s164 = smul.addr %s163, 4
          %s165 = scalar_lea.vmem %s1, %s164
          // Predicated region
          $region25: #{decoder_forward.6} parent=23 // pred_check
            _
          $region26: #{decoder_forward.6} parent=23 // pred_check_branch
            %167 = sbr.rel (0) target = $region28
          $region27: #{decoder_forward.6} parent=23 // pred_region
            // Predicated region
            $region29: #{decoder_forward.6} parent=27 // pred_check
              _
            $region30: #{decoder_forward.6} parent=27 // pred_check_branch
              %169 = sbr.rel (0) target = $region32
            $region31: #{decoder_forward.6} parent=27 // pred_region
              // Predicated region
              $region44: #{decoder_forward.6} parent=31 // pred_check
                _
              $region45: #{decoder_forward.6} parent=31 // pred_check_branch
                %214 = sbr.rel (0) target = $region47
              $region46: #{decoder_forward.6} parent=31 // pred_region
                loop: start=0, step=1, limit=1
                $region48: #{decoder_forward.6} parent=46 // loop_pre_header
                  _
                $region49: #{decoder_forward.6} parent=46 // loop_header
                  %s216 = sphi 0, %s220
                  %p217 = scmp.ge.s32.totalorder %s216, 1
                  %s221 = sphi %s165, %s165
                  %s222 = sphi %s162, %s162
                $region50: #{decoder_forward.6} parent=46 // loop_header_branch
                  %219 = sbr.rel (%p217) target = $region54
                $region51: #{decoder_forward.6} parent=46 // loop_body
                  %v223 = vld [vmem:[%s221] sm:$0xff]
                  %224 = vst [vmem:[%s222] sm:$0xff] %v223
                  %v225 = vld [vmem:[%s221 + $0x40] sm:$0xff]
                  %226 = vst [vmem:[%s222 + $0x8] sm:$0xff] %v225
                  %v227 = vld [vmem:[%s221 + $0x80] sm:$0xff]
                  %228 = vst [vmem:[%s222 + $0x10] sm:$0xff] %v227
                  %v229 = vld [vmem:[%s221 + $0xc0] sm:$0xff]
                  %230 = vst [vmem:[%s222 + $0x18] sm:$0xff] %v229
                  %v231 = vld [vmem:[%s221 + $0x100] sm:$0xff]
                  %232 = vst [vmem:[%s222 + $0x20] sm:$0xff] %v231
                  %v233 = vld [vmem:[%s221 + $0x140] sm:$0xff]
                  %234 = vst [vmem:[%s222 + $0x28] sm:$0xff] %v233
                  %v235 = vld [vmem:[%s221 + $0x180] sm:$0xff]
                  %236 = vst [vmem:[%s222 + $0x30] sm:$0xff] %v235
                  %v237 = vld [vmem:[%s221 + $0x1c0] sm:$0xff]
                  %238 = vst [vmem:[%s222 + $0x38] sm:$0xff] %v237
                  %v239 = vld [vmem:[%s221 + $0x200] sm:$0xff]
                  %240 = vst [vmem:[%s222 + $0x40] sm:$0xff] %v239
                  %v241 = vld [vmem:[%s221 + $0x240] sm:$0xff]
                  %242 = vst [vmem:[%s222 + $0x48] sm:$0xff] %v241
                  %v243 = vld [vmem:[%s221 + $0x280] sm:$0xff]
                  %244 = vst [vmem:[%s222 + $0x50] sm:$0xff] %v243
                  %v245 = vld [vmem:[%s221 + $0x2c0] sm:$0xff]
                  %246 = vst [vmem:[%s222 + $0x58] sm:$0xff] %v245
                  %v247 = vld [vmem:[%s221 + $0x300] sm:$0xff]
                  %248 = vst [vmem:[%s222 + $0x60] sm:$0xff] %v247
                  %v249 = vld [vmem:[%s221 + $0x340] sm:$0xff]
                  %250 = vst [vmem:[%s222 + $0x68] sm:$0xff] %v249
                  %v251 = vld [vmem:[%s221 + $0x380] sm:$0xff]
                  %252 = vst [vmem:[%s222 + $0x70] sm:$0xff] %v251
                  %v253 = vld [vmem:[%s221 + $0x3c0] sm:$0xff]
                  %254 = vst [vmem:[%s222 + $0x78] sm:$0xff] %v253
                $region52: #{decoder_forward.6} parent=46 // loop_footer
                  %s220 = sadd.s32 1, %s216
                $region53: #{decoder_forward.6} parent=46 // loop_footer_branch
                  %215 = sbr.rel target = $region49
                $region54: #{decoder_forward.6} parent=46 // loop_exit
                  _
              $region47: #{decoder_forward.6} parent=31 // pred_fallthru
                _
              // Predicated region
              $region55: #{decoder_forward.6} parent=31 // pred_check
                _
              $region56: #{decoder_forward.6} parent=31 // pred_check_branch
                %256 = sbr.rel target = $region58
              $region57: #{decoder_forward.6} parent=31 // pred_region
                _
              $region58: #{decoder_forward.6} parent=31 // pred_fallthru
                _
            $region32: #{decoder_forward.6} parent=27 // pred_fallthru
              _
            // Predicated region
            $region33: #{decoder_forward.6} parent=27 // pred_check
              _
            $region34: #{decoder_forward.6} parent=27 // pred_check_branch
              %171 = sbr.rel target = $region36
            $region35: #{decoder_forward.6} parent=27 // pred_region
              loop: start=0, step=1, limit=1
              $region37: #{decoder_forward.6} parent=35 // loop_pre_header
                _
              $region38: #{decoder_forward.6} parent=35 // loop_header
                %s174 = sphi 0, %s178
                %p175 = scmp.ge.s32.totalorder %s174, 1
                %s179 = sphi %s165, %s165
                %s180 = sphi %s162, %s162
              $region39: #{decoder_forward.6} parent=35 // loop_header_branch
                %177 = sbr.rel (%p175) target = $region43
              $region40: #{decoder_forward.6} parent=35 // loop_body
                %v181 = vld [vmem:[%s179] sm:$0xff]
                %182 = vst [vmem:[%s180] sm:$0xff] %v181
                %v183 = vld [vmem:[%s179 + $0x40] sm:$0xff]
                %184 = vst [vmem:[%s180 + $0x8] sm:$0xff] %v183
                %v185 = vld [vmem:[%s179 + $0x80] sm:$0xff]
                %186 = vst [vmem:[%s180 + $0x10] sm:$0xff] %v185
                %v187 = vld [vmem:[%s179 + $0xc0] sm:$0xff]
                %188 = vst [vmem:[%s180 + $0x18] sm:$0xff] %v187
                %v189 = vld [vmem:[%s179 + $0x100] sm:$0xff]
                %190 = vst [vmem:[%s180 + $0x20] sm:$0xff] %v189
                %v191 = vld [vmem:[%s179 + $0x140] sm:$0xff]
                %192 = vst [vmem:[%s180 + $0x28] sm:$0xff] %v191
                %v193 = vld [vmem:[%s179 + $0x180] sm:$0xff]
                %194 = vst [vmem:[%s180 + $0x30] sm:$0xff] %v193
                %v195 = vld [vmem:[%s179 + $0x1c0] sm:$0xff]
                %196 = vst [vmem:[%s180 + $0x38] sm:$0xff] %v195
                %v197 = vld [vmem:[%s179 + $0x200] sm:$0xff]
                %198 = vst [vmem:[%s180 + $0x40] sm:$0xff] %v197
                %v199 = vld [vmem:[%s179 + $0x240] sm:$0xff]
                %200 = vst [vmem:[%s180 + $0x48] sm:$0xff] %v199
                %v201 = vld [vmem:[%s179 + $0x280] sm:$0xff]
                %202 = vst [vmem:[%s180 + $0x50] sm:$0xff] %v201
                %v203 = vld [vmem:[%s179 + $0x2c0] sm:$0xff]
                %204 = vst [vmem:[%s180 + $0x58] sm:$0xff] %v203
                %v205 = vld [vmem:[%s179 + $0x300] sm:$0xff]
                %206 = vst [vmem:[%s180 + $0x60] sm:$0xff] %v205
                %v207 = vld [vmem:[%s179 + $0x340] sm:$0xff]
                %208 = vst [vmem:[%s180 + $0x68] sm:$0xff] %v207
                %v209 = vld [vmem:[%s179 + $0x380] sm:$0xff]
                %210 = vst [vmem:[%s180 + $0x70] sm:$0xff] %v209
                %v211 = vld [vmem:[%s179 + $0x3c0] sm:$0xff]
                %212 = vst [vmem:[%s180 + $0x78] sm:$0xff] %v211
              $region41: #{decoder_forward.6} parent=35 // loop_footer
                %s178 = sadd.s32 1, %s174
              $region42: #{decoder_forward.6} parent=35 // loop_footer_branch
                %173 = sbr.rel target = $region38
              $region43: #{decoder_forward.6} parent=35 // loop_exit
                _
            $region36: #{decoder_forward.6} parent=27 // pred_fallthru
              _
          $region28: #{decoder_forward.6} parent=23 // pred_fallthru
            _
          %257 = vnop
        $region24: #{decoder_forward.6} parent=19 // pred_fallthru
          _
        // Predicated region
        $region59: #{decoder_forward.6} parent=19 // pred_check
          %p258 = pneg %p96
        $region60: #{decoder_forward.6} parent=19 // pred_check_branch
          %260 = sbr.rel (%p258) target = $region62
        $region61: #{decoder_forward.6} parent=19 // pred_region
          %s261 = sand.u32 %s86, 1
          %s262 = scalar_lea.sflag [#allocation4], %s261
          %s263 = sand.u32 %s86, 1
          %s264 = smul.addr %s263, 2
          %s265 = scalar_lea.vmem [#allocation3], %s264
          %s266 = smul.u32 2, %s20
          %s268 = ssub.s32 32, 32
          %269 = vsyncadd %s262, %s268
          %s270 = smul.addr %s266, 16
          %s271 = scalar_lea.hbm %s2, %s270
          %s273 = sshll.u32 %s265, 4
          %s274 = int_to_ptr.vmem [resolvable:$true] %s273
          %276 = dma.hbm_to_vmem [thread:$0]  %s271, 32, %s274, %s262
        $region62: #{decoder_forward.6} parent=19 // pred_fallthru
          _
      $region20: #{decoder_forward.6} parent=5 // pred_fallthru
        _
      %p277 = scmp.le.s32.totalorder 1, %s12
      %p278 = scmp.lt.s32.totalorder %s12, 9
      %p279 = pnand %p277, %p278
      %p280 = pneg %p279
      // Predicated region
      $region63: #{decoder_forward.6} parent=5 // pred_check
        _
      $region64: #{decoder_forward.6} parent=5 // pred_check_branch
        %282 = sbr.rel (%p279) target = $region66
      $region65: #{decoder_forward.6} parent=5 // pred_region
        %s283 = ssub.s32 %s12, 1
        %s284 = sand.u32 %s63, 1
        %s285 = sand.u32 %s63, 1
        %s286 = smul.addr %s285, 128
        %s287 = scalar_lea.vmem [#allocation2], %s286
        // Predicated region
        $region67: #{decoder_forward.6} parent=65 // pred_check
          %p288 = pneg %p76
        $region68: #{decoder_forward.6} parent=65 // pred_check_branch
          %290 = sbr.rel (%p288) target = $region70
        $region69: #{decoder_forward.6} parent=65 // pred_region
          _
        $region70: #{decoder_forward.6} parent=65 // pred_fallthru
          _
        %s291 = sand.u32 %s89, 1
        %s292 = scalar_lea.sflag [#allocation4], %s291
        %s293 = sand.u32 %s89, 1
        %s294 = smul.addr %s293, 2
        %s295 = scalar_lea.vmem [#allocation3], %s294
        // Predicated region
        $region71: #{decoder_forward.6} parent=65 // pred_check
          %p296 = pneg %p102
        $region72: #{decoder_forward.6} parent=65 // pred_check_branch
          %298 = sbr.rel (%p296) target = $region74
        $region73: #{decoder_forward.6} parent=65 // pred_region
          %299 = dma.done %s292, 32
        $region74: #{decoder_forward.6} parent=65 // pred_fallthru
          _
        %p300 = scmp.lt.s32.totalorder %s21, 0
        %s301 = scalar_select %p300, %s21, 0
        %s302 = smul.addr %s301, 4
        %s303 = scalar_lea.vmem %s0, %s302
        %p304 = pneg %p50
        %p305 = pneg %p47
        %s306 = sand.u32 %s63, 1
        %s307 = sand.u32 %s63, 1
        %s308 = smul.addr %s307, 128
        %s309 = scalar_lea.vmem [#allocation2], %s308
        %p310 = pneg %p76
        %p311 = pneg %p73
        %s312 = sand.u32 %s89, 1
        %s313 = scalar_lea.sflag [#allocation4], %s312
        %s314 = sand.u32 %s89, 1
        %s315 = smul.addr %s314, 2
        %s316 = scalar_lea.vmem [#allocation3], %s315
        %p317 = pneg %p102
        %p318 = pneg %p99
        %p319 = pneg %p130
        %p320 = pneg %p127
        %s321 = smul.u32 2, %s22
        %p322 = scmp.lt.s32.totalorder %s21, 0
        %s323 = scalar_select %p322, %s21, 0
        %p324 = scmp.lt.s32.totalorder %s321, 15
        %s325 = scalar_select %p324, %s321, 15
        %s326 = smul.addr %s323, 16
        %s327 = sadd.s32 %s325, %s326
        %s328 = smul.addr %s327, 4
        %s329 = scalar_lea.vmem %s3, %s328
        %p330 = scmp.lt.s32.totalorder %s21, 0
        %s331 = scalar_select %p330, %s21, 0
        %s332 = smul.addr %s331, 4
        %s333 = scalar_lea.vmem %s0, %s332
        %s334 = smul.u32 2, %s22
        %s335 = smul.u32 2, %s22
        %s336 = smul.u32 2, %s22
        %p337 = scmp.lt.s32.totalorder %s21, 0
        %s338 = scalar_select %p337, %s21, 0
        %p339 = scmp.lt.s32.totalorder %s336, 15
        %s340 = scalar_select %p339, %s336, 15
        %s341 = smul.addr %s338, 16
        %s342 = sadd.s32 %s340, %s341
        %s343 = smul.addr %s342, 4
        %s344 = scalar_lea.vmem %s3, %s343
        %s345 = smul.u32 2, %s22
        %v347 = vld [vmem:[%s333] sm:$0xf]
        %v348 = vld [vmem:[%s287] sm:$0xff]
        %v349 = vld [vmem:[%s287 + $0x8] sm:$0xff]
        %v350 = vld [vmem:[%s287 + $0x10] sm:$0xff]
        %v351 = vld [vmem:[%s287 + $0x18] sm:$0xff]
        %v352 = vld [vmem:[%s287 + $0x20] sm:$0xff]
        %v353 = vld [vmem:[%s287 + $0x28] sm:$0xff]
        %v354 = vld [vmem:[%s287 + $0x30] sm:$0xff]
        %v355 = vld [vmem:[%s287 + $0x38] sm:$0xff]
        %v356 = vld [vmem:[%s287 + $0x40] sm:$0xff]
        %v357 = vld [vmem:[%s287 + $0x48] sm:$0xff]
        %v358 = vld [vmem:[%s287 + $0x50] sm:$0xff]
        %v359 = vld [vmem:[%s287 + $0x58] sm:$0xff]
        %v360 = vld [vmem:[%s287 + $0x60] sm:$0xff]
        %v361 = vld [vmem:[%s287 + $0x68] sm:$0xff]
        %v362 = vld [vmem:[%s287 + $0x70] sm:$0xff]
        %v363 = vld [vmem:[%s287 + $0x78] sm:$0xff]
        %v364 = vld [vmem:[%s295] sm:$0x3]
        %v366 = vlaneseq
        %v367 = vshrl.u32 %v366, 7
        %v368 = vsub.s32 0, %v367
        %v369 = vrot.slane %v364, %v368
        %v370 = vlaneseq
        %v371 = vshrl.u32 %v370, 7
        %v372 = vsub.s32 1, %v371
        %v373 = vrot.slane %v364, %v372
        %v392 = vunpack.c.l.b16 %v348
        %v393 = vunpack.c.h.b16 %v348
        %v394 = vunpack.c.l.b16 %v349
        %v395 = vunpack.c.h.b16 %v349
        %v396 = vunpack.c.l.b16 %v350
        %v397 = vunpack.c.h.b16 %v350
        %v398 = vunpack.c.l.b16 %v351
        %v399 = vunpack.c.h.b16 %v351
        %v400 = vunpack.c.l.b16 %v352
        %v401 = vunpack.c.h.b16 %v352
        %v402 = vunpack.c.l.b16 %v353
        %v403 = vunpack.c.h.b16 %v353
        %v404 = vunpack.c.l.b16 %v354
        %v405 = vunpack.c.h.b16 %v354
        %v406 = vunpack.c.l.b16 %v355
        %v407 = vunpack.c.h.b16 %v355
        %v408 = vunpack.c.l.b16 %v356
        %v409 = vunpack.c.h.b16 %v356
        %v410 = vunpack.c.l.b16 %v357
        %v411 = vunpack.c.h.b16 %v357
        %v412 = vunpack.c.l.b16 %v358
        %v413 = vunpack.c.h.b16 %v358
        %v414 = vunpack.c.l.b16 %v359
        %v415 = vunpack.c.h.b16 %v359
        %v416 = vunpack.c.l.b16 %v360
        %v417 = vunpack.c.h.b16 %v360
        %v418 = vunpack.c.l.b16 %v361
        %v419 = vunpack.c.h.b16 %v361
        %v420 = vunpack.c.l.b16 %v362
        %v421 = vunpack.c.h.b16 %v362
        %v422 = vunpack.c.l.b16 %v363
        %v423 = vunpack.c.h.b16 %v363
        %v424 = vpack.c.b16 %v394, %v392
        %v425 = vpack.c.b16 %v395, %v393
        %v426 = vpack.c.b16 %v398, %v396
        %v427 = vpack.c.b16 %v399, %v397
        %v428 = vpack.c.b16 %v402, %v400
        %v429 = vpack.c.b16 %v403, %v401
        %v430 = vpack.c.b16 %v406, %v404
        %v431 = vpack.c.b16 %v407, %v405
        %v432 = vpack.c.b16 %v410, %v408
        %v433 = vpack.c.b16 %v411, %v409
        %v434 = vpack.c.b16 %v414, %v412
        %v435 = vpack.c.b16 %v415, %v413
        %v436 = vpack.c.b16 %v418, %v416
        %v437 = vpack.c.b16 %v419, %v417
        %v438 = vpack.c.b16 %v422, %v420
        %v439 = vpack.c.b16 %v423, %v421
        %456 = vmatprep.subr.bf16.mxu0 %v425
        %457 = vmatpush1.bf16.msra.mxu0 %v424
        %458 = vmatprep.subr.bf16.mxu0 %v427
        %459 = vmatpush1.bf16.msra.mxu0 %v426
        %460 = vmatprep.subr.bf16.mxu0 %v429
        %461 = vmatpush1.bf16.msra.mxu0 %v428
        %462 = vmatprep.subr.bf16.mxu0 %v431
        %463 = vmatpush1.bf16.msra.mxu0 %v430
        %464 = vmatprep.subr.bf16.mxu0 %v433
        %465 = vmatpush1.bf16.msra.mxu0 %v432
        %466 = vmatprep.subr.bf16.mxu0 %v435
        %467 = vmatpush1.bf16.msra.mxu0 %v434
        %468 = vmatprep.subr.bf16.mxu0 %v437
        %469 = vmatpush1.bf16.msra.mxu0 %v436
        %470 = vmatprep.subr.bf16.mxu0 %v439
        %471 = vmatpush1.bf16.msra.mxu0 %v438
        %472 = vmatprep.subr.bf16.mxu0 0
        %473 = vmatpush1.bf16.msra.mxu0 0
        %474 = vmatprep.subr.bf16.mxu0 0
        %475 = vmatpush1.bf16.msra.mxu0 0
        %476 = vmatprep.subr.bf16.mxu0 0
        %477 = vmatpush1.bf16.msra.mxu0 0
        %478 = vmatprep.subr.bf16.mxu0 0
        %479 = vmatpush1.bf16.msra.mxu0 0
        %480 = vmatprep.subr.bf16.mxu0 0
        %481 = vmatpush1.bf16.msra.mxu0 0
        %482 = vmatprep.subr.bf16.mxu0 0
        %483 = vmatpush1.bf16.msra.mxu0 0
        %484 = vmatprep.subr.bf16.mxu0 0
        %485 = vmatpush1.bf16.msra.mxu0 0
        %486 = vmatprep.subr.bf16.mxu0 0
        %487 = vmatpush1.bf16.msra.mxu0 0
        %488 = vmatprep.mubr.bf16.mxu0 0
        %489 = vmatmul.mubr.bf16.gmra.mrb[0].mxu0 %v347
        %v490 = vpop.f32.mrb[0].mxu0
        %v491 = vadd.f32 %v369, %v490
        %v492 = vpop.f32.mrb[0].mxu0
        %v493 = vadd.f32 %v373, %v492
        %v494 = vpop.f32.mrb[0].mxu0
        %v495 = vpop.f32.mrb[0].mxu0
        %496 = vdwg.mxu0
        %v497 = vmax.f32 %v491, 0.0
        %v498 = vmax.f32 %v493, 0.0
        %v499 = vpack.c.bf16 %v497, %v497
        %v500 = vpack.c.bf16 %v498, %v498
        %v503 = vunpack.c.l.b16 %v499
        %v504 = vunpack.c.l.b16 %v500
        %v505 = vpack.c.b16 %v504, %v503
        %507 = vst [vmem:[%s344] sm:$0xff] %v505
        %s508 = smul.u32 2, %s22
        %p509 = scmp.lt.s32.totalorder %s21, 0
        %s510 = scalar_select %p509, %s21, 0
        %p511 = scmp.lt.s32.totalorder %s508, 15
        %s512 = scalar_select %p511, %s508, 15
        %s513 = smul.addr %s510, 16
        %s514 = sadd.s32 %s512, %s513
        %s515 = smul.addr %s514, 4
        %s516 = scalar_lea.vmem %s3, %s515
        // Predicated region
        $region75: #{decoder_forward.6} parent=65 // pred_check
          %p517 = pneg %p127
        $region76: #{decoder_forward.6} parent=65 // pred_check_branch
          %519 = sbr.rel (%p517) target = $region78
        $region77: #{decoder_forward.6} parent=65 // pred_region
          %s520 = smul.u32 2, %s22
        $region78: #{decoder_forward.6} parent=65 // pred_fallthru
          _
      $region66: #{decoder_forward.6} parent=5 // pred_fallthru
        _
      %p521 = scmp.le.s32.totalorder 2, %s12
      // Predicated region
      $region79: #{decoder_forward.6} parent=5 // pred_check
        %p522 = pneg %p521
      $region80: #{decoder_forward.6} parent=5 // pred_check_branch
        %524 = sbr.rel (%p522) target = $region82
      $region81: #{decoder_forward.6} parent=5 // pred_region
        %s525 = ssub.s32 %s12, 2
        // Predicated region
        $region83: #{decoder_forward.6} parent=81 // pred_check
          %p526 = pneg %p133
        $region84: #{decoder_forward.6} parent=81 // pred_check_branch
          %528 = sbr.rel (%p526) target = $region86
        $region85: #{decoder_forward.6} parent=81 // pred_region
          %s529 = smul.u32 2, %s24
          %p530 = scmp.lt.s32.totalorder %s23, 0
          %s531 = scalar_select %p530, %s23, 0
          %p532 = scmp.lt.s32.totalorder %s529, 15
          %s533 = scalar_select %p532, %s529, 15
          %s534 = smul.addr %s531, 16
          %s535 = sadd.s32 %s533, %s534
          %s536 = smul.addr %s535, 4
          %s537 = scalar_lea.vmem %s3, %s536
        $region86: #{decoder_forward.6} parent=81 // pred_fallthru
          _
      $region82: #{decoder_forward.6} parent=5 // pred_fallthru
        _
    $region6: #{decoder_forward.6} parent=1 // loop_footer
      %s16 = sadd.s32 1, %s12
    $region7: #{decoder_forward.6} parent=1 // loop_footer_branch
      %11 = sbr.rel target = $region3
    $region8: #{decoder_forward.6} parent=1 // loop_exit
      _
    %538 = vsyncpa [#allocation4], 1
    %s539 = scalar_lea.sflag [#allocation4], 1
    %540 = vsyncpa %s539, 1

// kernel: decoder_forward.7
$region0: #{decoder_forward.7}
  #allocation0 [shape = 'u32[]', space=smem, size = 0x4, offset = 0x4, fixed_abs, tag = 'smem constant byte address 0x4 - core index']
  #allocation1 [shape = 'u32[144,128]{1,0:T(1,128)}', space=vmem, size = 0x12000, scoped, tag = 'internal scratch']
  %s0 = inlined_call_operand.vmem [shape: bf16[8,512], index: 0, kind: input, shape index: {}]
  %s1 = inlined_call_operand.vmem [shape: bf16[512,2048], index: 1, kind: input, shape index: {}]
  %s2 = inlined_call_operand.vmem [shape: f32[1,2048], index: 2, kind: input, shape index: {}]
  %s3 = inlined_call_operand.vmem [shape: bf16[8,2048], index: 3, kind: output, shape index: {}]
  %s4 = sld [smem:[#allocation0]]
  $region83: #{decoder_forward.7} parent=0
    _
  %s6 = ssub.s32 1, %s4
  %s7 = scalar_select 0, %s6, %s4
  $region1: #{decoder_forward.7} parent=0
    #allocation2 [shape = 'u8[524288]{0}', space=vmem, size = 0x80000, scoped, tag = 'input window, operand 1']
    loop: start=0, step=1, limit=10
    $region2: #{decoder_forward.7} parent=1 // loop_pre_header
      _
    $region3: #{decoder_forward.7} parent=1 // loop_header
      %s9 = sphi 0, %s13
      %p10 = scmp.ge.s32.totalorder %s9, 10
      %s16 = sphi 0, %s28
      %s17 = sphi 0, %s24
      %s18 = sphi 0, %s16
      %s19 = sphi 0, %s17
      %s20 = sphi 0, %s18
      %s21 = sphi 0, %s19
      %s31 = sphi 0, %s33
      %s34 = sphi 0, %s31
      %s35 = sphi 0, %s34
      %s51 = sphi 0, %s35
      %s57 = sphi 0, %s59
      %s60 = sphi 0, %s57
      %s61 = sphi 0, %s60
      %s77 = sphi 0, %s61
      %s83 = sphi 0, %s85
      %s86 = sphi 0, %s83
      %s87 = sphi 0, %s86
      %s103 = sphi 0, %s87
      %s111 = sphi 0, %s113
      %s114 = sphi 0, %s111
      %s115 = sphi 0, %s114
      %s131 = sphi 0, %s115
    $region4: #{decoder_forward.7} parent=1 // loop_header_branch
      %12 = sbr.rel (%p10) target = $region8
    $region5: #{decoder_forward.7} parent=1 // loop_body
      %s14 = ssub.s32 %s9, 1
      %s15 = ssub.s32 %s9, 2
      %s22 = sadd.s32 1, %s17
      %p23 = scmp.ge.s32.totalorder %s22, 8
      %s24 = scalar_select %p23, 0, %s22
      %s25 = sadd.s32 1, %s16
      %s26 = scalar_select %p23, %s25, %s16
      %p27 = scmp.ge.s32.totalorder %s26, 1
      %s28 = scalar_select %p27, 0, %s26
      %s29 = ssub.s32 %s16, %s28
      %p30 = scmp.eq.s32.totalorder %s29, 0
      %s32 = sadd.s32 %s31, 1
      %s33 = scalar_select %p30, %s31, %s32
      %p36 = pneg %p30
      %p37 = scmp.eq.s32.totalorder %s9, 7
      %p38 = por %p36, %p37
      %p39 = scmp.ne.s32.totalorder %s31, %s34
      %p40 = scmp.eq.s32.totalorder %s9, 0
      %p41 = por %p39, %p40
      %p42 = scmp.ne.s32.totalorder %s31, %s34
      %p43 = scmp.eq.s32.totalorder %s14, 7
      %p44 = por %p42, %p43
      %p45 = scmp.ne.s32.totalorder %s34, %s35
      %p46 = scmp.eq.s32.totalorder %s14, 0
      %p47 = por %p45, %p46
      %p48 = scmp.ne.s32.totalorder %s34, %s35
      %p49 = scmp.eq.s32.totalorder %s15, 7
      %p50 = por %p48, %p49
      %p52 = scmp.ne.s32.totalorder %s35, %s51
      %p53 = scmp.eq.s32.totalorder %s15, 0
      %p54 = por %p52, %p53
      %s55 = ssub.s32 %s17, %s24
      %p56 = scmp.eq.s32.totalorder %s55, 0
      %s58 = sadd.s32 %s57, 1
      %s59 = scalar_select %p56, %s57, %s58
      %p62 = pneg %p56
      %p63 = scmp.eq.s32.totalorder %s9, 7
      %p64 = por %p62, %p63
      %p65 = scmp.ne.s32.totalorder %s57, %s60
      %p66 = scmp.eq.s32.totalorder %s9, 0
      %p67 = por %p65, %p66
      %p68 = scmp.ne.s32.totalorder %s57, %s60
      %p69 = scmp.eq.s32.totalorder %s14, 7
      %p70 = por %p68, %p69
      %p71 = scmp.ne.s32.totalorder %s60, %s61
      %p72 = scmp.eq.s32.totalorder %s14, 0
      %p73 = por %p71, %p72
      %p74 = scmp.ne.s32.totalorder %s60, %s61
      %p75 = scmp.eq.s32.totalorder %s15, 7
      %p76 = por %p74, %p75
      %p78 = scmp.ne.s32.totalorder %s61, %s77
      %p79 = scmp.eq.s32.totalorder %s15, 0
      %p80 = por %p78, %p79
      %s81 = ssub.s32 %s17, %s24
      %p82 = scmp.eq.s32.totalorder %s81, 0
      %s84 = sadd.s32 %s83, 1
      %s85 = scalar_select %p82, %s83, %s84
      %p88 = pneg %p82
      %p89 = scmp.eq.s32.totalorder %s9, 7
      %p90 = por %p88, %p89
      %p91 = scmp.ne.s32.totalorder %s83, %s86
      %p92 = scmp.eq.s32.totalorder %s9, 0
      %p93 = por %p91, %p92
      %p94 = scmp.ne.s32.totalorder %s83, %s86
      %p95 = scmp.eq.s32.totalorder %s14, 7
      %p96 = por %p94, %p95
      %p97 = scmp.ne.s32.totalorder %s86, %s87
      %p98 = scmp.eq.s32.totalorder %s14, 0
      %p99 = por %p97, %p98
      %p100 = scmp.ne.s32.totalorder %s86, %s87
      %p101 = scmp.eq.s32.totalorder %s15, 7
      %p102 = por %p100, %p101
      %p104 = scmp.ne.s32.totalorder %s87, %s103
      %p105 = scmp.eq.s32.totalorder %s15, 0
      %p106 = por %p104, %p105
      %s107 = ssub.s32 %s16, %s28
      %s108 = ssub.s32 %s17, %s24
      %s109 = sor.u32 %s107, %s108
      %p110 = scmp.eq.s32.totalorder %s109, 0
      %s112 = sadd.s32 %s111, 1
      %s113 = scalar_select %p110, %s111, %s112
      %p116 = pneg %p110
      %p117 = scmp.eq.s32.totalorder %s9, 7
      %p118 = por %p116, %p117
      %p119 = scmp.ne.s32.totalorder %s111, %s114
      %p120 = scmp.eq.s32.totalorder %s9, 0
      %p121 = por %p119, %p120
      %p122 = scmp.ne.s32.totalorder %s111, %s114
      %p123 = scmp.eq.s32.totalorder %s14, 7
      %p124 = por %p122, %p123
      %p125 = scmp.ne.s32.totalorder %s114, %s115
      %p126 = scmp.eq.s32.totalorder %s14, 0
      %p127 = por %p125, %p126
      %p128 = scmp.ne.s32.totalorder %s114, %s115
      %p129 = scmp.eq.s32.totalorder %s15, 7
      %p130 = por %p128, %p129
      %p132 = scmp.ne.s32.totalorder %s115, %s131
      %p133 = scmp.eq.s32.totalorder %s15, 0
      %p134 = por %p132, %p133
      %p135 = scmp.le.s32.totalorder 1, %s9
      %p136 = scmp.lt.s32.totalorder %s9, 9
      %p137 = pnand %p135, %p136
      %p138 = pneg %p137
      // Predicated region
      $region9: #{decoder_forward.7} parent=5 // pred_check
        _
      $region10: #{decoder_forward.7} parent=5 // pred_check_branch
        %140 = sbr.rel (%p137) target = $region12
      $region11: #{decoder_forward.7} parent=5 // pred_region
        %s141 = ssub.s32 %s9, 1
        // Predicated region
        $region13: #{decoder_forward.7} parent=11 // pred_check
          %p142 = pneg %p47
        $region14: #{decoder_forward.7} parent=11 // pred_check_branch
          %144 = sbr.rel (%p142) target = $region16
        $region15: #{decoder_forward.7} parent=11 // pred_region
          %p145 = scmp.lt.s32.totalorder %s18, 0
          %s146 = scalar_select %p145, %s18, 0
          %s147 = smul.addr %s146, 4
          %s148 = smul.addr %s147, 4
          %s149 = scalar_lea.vmem %s0, %s148
        $region16: #{decoder_forward.7} parent=11 // pred_fallthru
          _
      $region12: #{decoder_forward.7} parent=5 // pred_fallthru
        _
      %p150 = scmp.lt.s32.totalorder %s9, 8
      // Predicated region
      $region17: #{decoder_forward.7} parent=5 // pred_check
        %p151 = pneg %p150
      $region18: #{decoder_forward.7} parent=5 // pred_check_branch
        %153 = sbr.rel (%p151) target = $region20
      $region19: #{decoder_forward.7} parent=5 // pred_region
        // Predicated region
        $region21: #{decoder_forward.7} parent=19 // pred_check
          %p154 = pneg %p67
        $region22: #{decoder_forward.7} parent=19 // pred_check_branch
          %156 = sbr.rel (%p154) target = $region24
        $region23: #{decoder_forward.7} parent=19 // pred_region
          %s157 = sand.u32 %s57, 1
          %s158 = sand.u32 %s57, 1
          %s159 = smul.addr %s158, 512
          %s160 = scalar_lea.vmem [#allocation2], %s159
          %s161 = smul.u32 2, %s17
          %s162 = smul.addr %s161, 4
          %s163 = scalar_lea.vmem %s1, %s162
          // Predicated region
          $region25: #{decoder_forward.7} parent=23 // pred_check
            _
          $region26: #{decoder_forward.7} parent=23 // pred_check_branch
            %165 = sbr.rel (0) target = $region28
          $region27: #{decoder_forward.7} parent=23 // pred_region
            // Predicated region
            $region29: #{decoder_forward.7} parent=27 // pred_check
              _
            $region30: #{decoder_forward.7} parent=27 // pred_check_branch
              %167 = sbr.rel (0) target = $region32
            $region31: #{decoder_forward.7} parent=27 // pred_region
              // Predicated region
              $region44: #{decoder_forward.7} parent=31 // pred_check
                _
              $region45: #{decoder_forward.7} parent=31 // pred_check_branch
                %308 = sbr.rel (0) target = $region47
              $region46: #{decoder_forward.7} parent=31 // pred_region
                loop: start=0, step=1, limit=1
                $region48: #{decoder_forward.7} parent=46 // loop_pre_header
                  _
                $region49: #{decoder_forward.7} parent=46 // loop_header
                  %s310 = sphi 0, %s314
                  %p311 = scmp.ge.s32.totalorder %s310, 1
                  %s315 = sphi %s163, %s163
                  %s316 = sphi %s160, %s160
                $region50: #{decoder_forward.7} parent=46 // loop_header_branch
                  %313 = sbr.rel (%p311) target = $region54
                $region51: #{decoder_forward.7} parent=46 // loop_body
                  %v317 = vld [vmem:[%s315] sm:$0xff]
                  %318 = vst [vmem:[%s316] sm:$0xff] %v317
                  %v319 = vld [vmem:[%s315 + $0x40] sm:$0xff]
                  %320 = vst [vmem:[%s316 + $0x8] sm:$0xff] %v319
                  %v321 = vld [vmem:[%s315 + $0x80] sm:$0xff]
                  %322 = vst [vmem:[%s316 + $0x10] sm:$0xff] %v321
                  %v323 = vld [vmem:[%s315 + $0xc0] sm:$0xff]
                  %324 = vst [vmem:[%s316 + $0x18] sm:$0xff] %v323
                  %v325 = vld [vmem:[%s315 + $0x100] sm:$0xff]
                  %326 = vst [vmem:[%s316 + $0x20] sm:$0xff] %v325
                  %v327 = vld [vmem:[%s315 + $0x140] sm:$0xff]
                  %328 = vst [vmem:[%s316 + $0x28] sm:$0xff] %v327
                  %v329 = vld [vmem:[%s315 + $0x180] sm:$0xff]
                  %330 = vst [vmem:[%s316 + $0x30] sm:$0xff] %v329
                  %v331 = vld [vmem:[%s315 + $0x1c0] sm:$0xff]
                  %332 = vst [vmem:[%s316 + $0x38] sm:$0xff] %v331
                  %v333 = vld [vmem:[%s315 + $0x200] sm:$0xff]
                  %334 = vst [vmem:[%s316 + $0x40] sm:$0xff] %v333
                  %v335 = vld [vmem:[%s315 + $0x240] sm:$0xff]
                  %336 = vst [vmem:[%s316 + $0x48] sm:$0xff] %v335
                  %v337 = vld [vmem:[%s315 + $0x280] sm:$0xff]
                  %338 = vst [vmem:[%s316 + $0x50] sm:$0xff] %v337
                  %v339 = vld [vmem:[%s315 + $0x2c0] sm:$0xff]
                  %340 = vst [vmem:[%s316 + $0x58] sm:$0xff] %v339
                  %v341 = vld [vmem:[%s315 + $0x300] sm:$0xff]
                  %342 = vst [vmem:[%s316 + $0x60] sm:$0xff] %v341
                  %v343 = vld [vmem:[%s315 + $0x340] sm:$0xff]
                  %344 = vst [vmem:[%s316 + $0x68] sm:$0xff] %v343
                  %v345 = vld [vmem:[%s315 + $0x380] sm:$0xff]
                  %346 = vst [vmem:[%s316 + $0x70] sm:$0xff] %v345
                  %v347 = vld [vmem:[%s315 + $0x3c0] sm:$0xff]
                  %348 = vst [vmem:[%s316 + $0x78] sm:$0xff] %v347
                  %v349 = vld [vmem:[%s315 + $0x400] sm:$0xff]
                  %350 = vst [vmem:[%s316 + $0x80] sm:$0xff] %v349
                  %v351 = vld [vmem:[%s315 + $0x440] sm:$0xff]
                  %352 = vst [vmem:[%s316 + $0x88] sm:$0xff] %v351
                  %v353 = vld [vmem:[%s315 + $0x480] sm:$0xff]
                  %354 = vst [vmem:[%s316 + $0x90] sm:$0xff] %v353
                  %v355 = vld [vmem:[%s315 + $0x4c0] sm:$0xff]
                  %356 = vst [vmem:[%s316 + $0x98] sm:$0xff] %v355
                  %v357 = vld [vmem:[%s315 + $0x500] sm:$0xff]
                  %358 = vst [vmem:[%s316 + $0xa0] sm:$0xff] %v357
                  %v359 = vld [vmem:[%s315 + $0x540] sm:$0xff]
                  %360 = vst [vmem:[%s316 + $0xa8] sm:$0xff] %v359
                  %v361 = vld [vmem:[%s315 + $0x580] sm:$0xff]
                  %362 = vst [vmem:[%s316 + $0xb0] sm:$0xff] %v361
                  %v363 = vld [vmem:[%s315 + $0x5c0] sm:$0xff]
                  %364 = vst [vmem:[%s316 + $0xb8] sm:$0xff] %v363
                  %v365 = vld [vmem:[%s315 + $0x600] sm:$0xff]
                  %366 = vst [vmem:[%s316 + $0xc0] sm:$0xff] %v365
                  %v367 = vld [vmem:[%s315 + $0x640] sm:$0xff]
                  %368 = vst [vmem:[%s316 + $0xc8] sm:$0xff] %v367
                  %v369 = vld [vmem:[%s315 + $0x680] sm:$0xff]
                  %370 = vst [vmem:[%s316 + $0xd0] sm:$0xff] %v369
                  %v371 = vld [vmem:[%s315 + $0x6c0] sm:$0xff]
                  %372 = vst [vmem:[%s316 + $0xd8] sm:$0xff] %v371
                  %v373 = vld [vmem:[%s315 + $0x700] sm:$0xff]
                  %374 = vst [vmem:[%s316 + $0xe0] sm:$0xff] %v373
                  %v375 = vld [vmem:[%s315 + $0x740] sm:$0xff]
                  %376 = vst [vmem:[%s316 + $0xe8] sm:$0xff] %v375
                  %v377 = vld [vmem:[%s315 + $0x780] sm:$0xff]
                  %378 = vst [vmem:[%s316 + $0xf0] sm:$0xff] %v377
                  %v379 = vld [vmem:[%s315 + $0x7c0] sm:$0xff]
                  %380 = vst [vmem:[%s316 + $0xf8] sm:$0xff] %v379
                  %v381 = vld [vmem:[%s315 + $0x800] sm:$0xff]
                  %382 = vst [vmem:[%s316 + $0x100] sm:$0xff] %v381
                  %v383 = vld [vmem:[%s315 + $0x840] sm:$0xff]
                  %384 = vst [vmem:[%s316 + $0x108] sm:$0xff] %v383
                  %v385 = vld [vmem:[%s315 + $0x880] sm:$0xff]
                  %386 = vst [vmem:[%s316 + $0x110] sm:$0xff] %v385
                  %v387 = vld [vmem:[%s315 + $0x8c0] sm:$0xff]
                  %388 = vst [vmem:[%s316 + $0x118] sm:$0xff] %v387
                  %v389 = vld [vmem:[%s315 + $0x900] sm:$0xff]
                  %390 = vst [vmem:[%s316 + $0x120] sm:$0xff] %v389
                  %v391 = vld [vmem:[%s315 + $0x940] sm:$0xff]
                  %392 = vst [vmem:[%s316 + $0x128] sm:$0xff] %v391
                  %v393 = vld [vmem:[%s315 + $0x980] sm:$0xff]
                  %394 = vst [vmem:[%s316 + $0x130] sm:$0xff] %v393
                  %v395 = vld [vmem:[%s315 + $0x9c0] sm:$0xff]
                  %396 = vst [vmem:[%s316 + $0x138] sm:$0xff] %v395
                  %v397 = vld [vmem:[%s315 + $0xa00] sm:$0xff]
                  %398 = vst [vmem:[%s316 + $0x140] sm:$0xff] %v397
                  %v399 = vld [vmem:[%s315 + $0xa40] sm:$0xff]
                  %400 = vst [vmem:[%s316 + $0x148] sm:$0xff] %v399
                  %v401 = vld [vmem:[%s315 + $0xa80] sm:$0xff]
                  %402 = vst [vmem:[%s316 + $0x150] sm:$0xff] %v401
                  %v403 = vld [vmem:[%s315 + $0xac0] sm:$0xff]
                  %404 = vst [vmem:[%s316 + $0x158] sm:$0xff] %v403
                  %v405 = vld [vmem:[%s315 + $0xb00] sm:$0xff]
                  %406 = vst [vmem:[%s316 + $0x160] sm:$0xff] %v405
                  %v407 = vld [vmem:[%s315 + $0xb40] sm:$0xff]
                  %408 = vst [vmem:[%s316 + $0x168] sm:$0xff] %v407
                  %v409 = vld [vmem:[%s315 + $0xb80] sm:$0xff]
                  %410 = vst [vmem:[%s316 + $0x170] sm:$0xff] %v409
                  %v411 = vld [vmem:[%s315 + $0xbc0] sm:$0xff]
                  %412 = vst [vmem:[%s316 + $0x178] sm:$0xff] %v411
                  %v413 = vld [vmem:[%s315 + $0xc00] sm:$0xff]
                  %414 = vst [vmem:[%s316 + $0x180] sm:$0xff] %v413
                  %v415 = vld [vmem:[%s315 + $0xc40] sm:$0xff]
                  %416 = vst [vmem:[%s316 + $0x188] sm:$0xff] %v415
                  %v417 = vld [vmem:[%s315 + $0xc80] sm:$0xff]
                  %418 = vst [vmem:[%s316 + $0x190] sm:$0xff] %v417
                  %v419 = vld [vmem:[%s315 + $0xcc0] sm:$0xff]
                  %420 = vst [vmem:[%s316 + $0x198] sm:$0xff] %v419
                  %v421 = vld [vmem:[%s315 + $0xd00] sm:$0xff]
                  %422 = vst [vmem:[%s316 + $0x1a0] sm:$0xff] %v421
                  %v423 = vld [vmem:[%s315 + $0xd40] sm:$0xff]
                  %424 = vst [vmem:[%s316 + $0x1a8] sm:$0xff] %v423
                  %v425 = vld [vmem:[%s315 + $0xd80] sm:$0xff]
                  %426 = vst [vmem:[%s316 + $0x1b0] sm:$0xff] %v425
                  %v427 = vld [vmem:[%s315 + $0xdc0] sm:$0xff]
                  %428 = vst [vmem:[%s316 + $0x1b8] sm:$0xff] %v427
                  %v429 = vld [vmem:[%s315 + $0xe00] sm:$0xff]
                  %430 = vst [vmem:[%s316 + $0x1c0] sm:$0xff] %v429
                  %v431 = vld [vmem:[%s315 + $0xe40] sm:$0xff]
                  %432 = vst [vmem:[%s316 + $0x1c8] sm:$0xff] %v431
                  %v433 = vld [vmem:[%s315 + $0xe80] sm:$0xff]
                  %434 = vst [vmem:[%s316 + $0x1d0] sm:$0xff] %v433
                  %v435 = vld [vmem:[%s315 + $0xec0] sm:$0xff]
                  %436 = vst [vmem:[%s316 + $0x1d8] sm:$0xff] %v435
                  %v437 = vld [vmem:[%s315 + $0xf00] sm:$0xff]
                  %438 = vst [vmem:[%s316 + $0x1e0] sm:$0xff] %v437
                  %v439 = vld [vmem:[%s315 + $0xf40] sm:$0xff]
                  %440 = vst [vmem:[%s316 + $0x1e8] sm:$0xff] %v439
                  %v441 = vld [vmem:[%s315 + $0xf80] sm:$0xff]
                  %442 = vst [vmem:[%s316 + $0x1f0] sm:$0xff] %v441
                  %v443 = vld [vmem:[%s315 + $0xfc0] sm:$0xff]
                  %444 = vst [vmem:[%s316 + $0x1f8] sm:$0xff] %v443
                $region52: #{decoder_forward.7} parent=46 // loop_footer
                  %s314 = sadd.s32 1, %s310
                $region53: #{decoder_forward.7} parent=46 // loop_footer_branch
                  %309 = sbr.rel target = $region49
                $region54: #{decoder_forward.7} parent=46 // loop_exit
                  _
              $region47: #{decoder_forward.7} parent=31 // pred_fallthru
                _
              // Predicated region
              $region55: #{decoder_forward.7} parent=31 // pred_check
                _
              $region56: #{decoder_forward.7} parent=31 // pred_check_branch
                %446 = sbr.rel target = $region58
              $region57: #{decoder_forward.7} parent=31 // pred_region
                _
              $region58: #{decoder_forward.7} parent=31 // pred_fallthru
                _
            $region32: #{decoder_forward.7} parent=27 // pred_fallthru
              _
            // Predicated region
            $region33: #{decoder_forward.7} parent=27 // pred_check
              _
            $region34: #{decoder_forward.7} parent=27 // pred_check_branch
              %169 = sbr.rel target = $region36
            $region35: #{decoder_forward.7} parent=27 // pred_region
              loop: start=0, step=1, limit=1
              $region37: #{decoder_forward.7} parent=35 // loop_pre_header
                _
              $region38: #{decoder_forward.7} parent=35 // loop_header
                %s172 = sphi 0, %s176
                %p173 = scmp.ge.s32.totalorder %s172, 1
                %s177 = sphi %s163, %s163
                %s178 = sphi %s160, %s160
              $region39: #{decoder_forward.7} parent=35 // loop_header_branch
                %175 = sbr.rel (%p173) target = $region43
              $region40: #{decoder_forward.7} parent=35 // loop_body
                %v179 = vld [vmem:[%s177] sm:$0xff]
                %180 = vst [vmem:[%s178] sm:$0xff] %v179
                %v181 = vld [vmem:[%s177 + $0x40] sm:$0xff]
                %182 = vst [vmem:[%s178 + $0x8] sm:$0xff] %v181
                %v183 = vld [vmem:[%s177 + $0x80] sm:$0xff]
                %184 = vst [vmem:[%s178 + $0x10] sm:$0xff] %v183
                %v185 = vld [vmem:[%s177 + $0xc0] sm:$0xff]
                %186 = vst [vmem:[%s178 + $0x18] sm:$0xff] %v185
                %v187 = vld [vmem:[%s177 + $0x100] sm:$0xff]
                %188 = vst [vmem:[%s178 + $0x20] sm:$0xff] %v187
                %v189 = vld [vmem:[%s177 + $0x140] sm:$0xff]
                %190 = vst [vmem:[%s178 + $0x28] sm:$0xff] %v189
                %v191 = vld [vmem:[%s177 + $0x180] sm:$0xff]
                %192 = vst [vmem:[%s178 + $0x30] sm:$0xff] %v191
                %v193 = vld [vmem:[%s177 + $0x1c0] sm:$0xff]
                %194 = vst [vmem:[%s178 + $0x38] sm:$0xff] %v193
                %v195 = vld [vmem:[%s177 + $0x200] sm:$0xff]
                %196 = vst [vmem:[%s178 + $0x40] sm:$0xff] %v195
                %v197 = vld [vmem:[%s177 + $0x240] sm:$0xff]
                %198 = vst [vmem:[%s178 + $0x48] sm:$0xff] %v197
                %v199 = vld [vmem:[%s177 + $0x280] sm:$0xff]
                %200 = vst [vmem:[%s178 + $0x50] sm:$0xff] %v199
                %v201 = vld [vmem:[%s177 + $0x2c0] sm:$0xff]
                %202 = vst [vmem:[%s178 + $0x58] sm:$0xff] %v201
                %v203 = vld [vmem:[%s177 + $0x300] sm:$0xff]
                %204 = vst [vmem:[%s178 + $0x60] sm:$0xff] %v203
                %v205 = vld [vmem:[%s177 + $0x340] sm:$0xff]
                %206 = vst [vmem:[%s178 + $0x68] sm:$0xff] %v205
                %v207 = vld [vmem:[%s177 + $0x380] sm:$0xff]
                %208 = vst [vmem:[%s178 + $0x70] sm:$0xff] %v207
                %v209 = vld [vmem:[%s177 + $0x3c0] sm:$0xff]
                %210 = vst [vmem:[%s178 + $0x78] sm:$0xff] %v209
                %v211 = vld [vmem:[%s177 + $0x400] sm:$0xff]
                %212 = vst [vmem:[%s178 + $0x80] sm:$0xff] %v211
                %v213 = vld [vmem:[%s177 + $0x440] sm:$0xff]
                %214 = vst [vmem:[%s178 + $0x88] sm:$0xff] %v213
                %v215 = vld [vmem:[%s177 + $0x480] sm:$0xff]
                %216 = vst [vmem:[%s178 + $0x90] sm:$0xff] %v215
                %v217 = vld [vmem:[%s177 + $0x4c0] sm:$0xff]
                %218 = vst [vmem:[%s178 + $0x98] sm:$0xff] %v217
                %v219 = vld [vmem:[%s177 + $0x500] sm:$0xff]
                %220 = vst [vmem:[%s178 + $0xa0] sm:$0xff] %v219
                %v221 = vld [vmem:[%s177 + $0x540] sm:$0xff]
                %222 = vst [vmem:[%s178 + $0xa8] sm:$0xff] %v221
                %v223 = vld [vmem:[%s177 + $0x580] sm:$0xff]
                %224 = vst [vmem:[%s178 + $0xb0] sm:$0xff] %v223
                %v225 = vld [vmem:[%s177 + $0x5c0] sm:$0xff]
                %226 = vst [vmem:[%s178 + $0xb8] sm:$0xff] %v225
                %v227 = vld [vmem:[%s177 + $0x600] sm:$0xff]
                %228 = vst [vmem:[%s178 + $0xc0] sm:$0xff] %v227
                %v229 = vld [vmem:[%s177 + $0x640] sm:$0xff]
                %230 = vst [vmem:[%s178 + $0xc8] sm:$0xff] %v229
                %v231 = vld [vmem:[%s177 + $0x680] sm:$0xff]
                %232 = vst [vmem:[%s178 + $0xd0] sm:$0xff] %v231
                %v233 = vld [vmem:[%s177 + $0x6c0] sm:$0xff]
                %234 = vst [vmem:[%s178 + $0xd8] sm:$0xff] %v233
                %v235 = vld [vmem:[%s177 + $0x700] sm:$0xff]
                %236 = vst [vmem:[%s178 + $0xe0] sm:$0xff] %v235
                %v237 = vld [vmem:[%s177 + $0x740] sm:$0xff]
                %238 = vst [vmem:[%s178 + $0xe8] sm:$0xff] %v237
                %v239 = vld [vmem:[%s177 + $0x780] sm:$0xff]
                %240 = vst [vmem:[%s178 + $0xf0] sm:$0xff] %v239
                %v241 = vld [vmem:[%s177 + $0x7c0] sm:$0xff]
                %242 = vst [vmem:[%s178 + $0xf8] sm:$0xff] %v241
                %v243 = vld [vmem:[%s177 + $0x800] sm:$0xff]
                %244 = vst [vmem:[%s178 + $0x100] sm:$0xff] %v243
                %v245 = vld [vmem:[%s177 + $0x840] sm:$0xff]
                %246 = vst [vmem:[%s178 + $0x108] sm:$0xff] %v245
                %v247 = vld [vmem:[%s177 + $0x880] sm:$0xff]
                %248 = vst [vmem:[%s178 + $0x110] sm:$0xff] %v247
                %v249 = vld [vmem:[%s177 + $0x8c0] sm:$0xff]
                %250 = vst [vmem:[%s178 + $0x118] sm:$0xff] %v249
                %v251 = vld [vmem:[%s177 + $0x900] sm:$0xff]
                %252 = vst [vmem:[%s178 + $0x120] sm:$0xff] %v251
                %v253 = vld [vmem:[%s177 + $0x940] sm:$0xff]
                %254 = vst [vmem:[%s178 + $0x128] sm:$0xff] %v253
                %v255 = vld [vmem:[%s177 + $0x980] sm:$0xff]
                %256 = vst [vmem:[%s178 + $0x130] sm:$0xff] %v255
                %v257 = vld [vmem:[%s177 + $0x9c0] sm:$0xff]
                %258 = vst [vmem:[%s178 + $0x138] sm:$0xff] %v257
                %v259 = vld [vmem:[%s177 + $0xa00] sm:$0xff]
                %260 = vst [vmem:[%s178 + $0x140] sm:$0xff] %v259
                %v261 = vld [vmem:[%s177 + $0xa40] sm:$0xff]
                %262 = vst [vmem:[%s178 + $0x148] sm:$0xff] %v261
                %v263 = vld [vmem:[%s177 + $0xa80] sm:$0xff]
                %264 = vst [vmem:[%s178 + $0x150] sm:$0xff] %v263
                %v265 = vld [vmem:[%s177 + $0xac0] sm:$0xff]
                %266 = vst [vmem:[%s178 + $0x158] sm:$0xff] %v265
                %v267 = vld [vmem:[%s177 + $0xb00] sm:$0xff]
                %268 = vst [vmem:[%s178 + $0x160] sm:$0xff] %v267
                %v269 = vld [vmem:[%s177 + $0xb40] sm:$0xff]
                %270 = vst [vmem:[%s178 + $0x168] sm:$0xff] %v269
                %v271 = vld [vmem:[%s177 + $0xb80] sm:$0xff]
                %272 = vst [vmem:[%s178 + $0x170] sm:$0xff] %v271
                %v273 = vld [vmem:[%s177 + $0xbc0] sm:$0xff]
                %274 = vst [vmem:[%s178 + $0x178] sm:$0xff] %v273
                %v275 = vld [vmem:[%s177 + $0xc00] sm:$0xff]
                %276 = vst [vmem:[%s178 + $0x180] sm:$0xff] %v275
                %v277 = vld [vmem:[%s177 + $0xc40] sm:$0xff]
                %278 = vst [vmem:[%s178 + $0x188] sm:$0xff] %v277
                %v279 = vld [vmem:[%s177 + $0xc80] sm:$0xff]
                %280 = vst [vmem:[%s178 + $0x190] sm:$0xff] %v279
                %v281 = vld [vmem:[%s177 + $0xcc0] sm:$0xff]
                %282 = vst [vmem:[%s178 + $0x198] sm:$0xff] %v281
                %v283 = vld [vmem:[%s177 + $0xd00] sm:$0xff]
                %284 = vst [vmem:[%s178 + $0x1a0] sm:$0xff] %v283
                %v285 = vld [vmem:[%s177 + $0xd40] sm:$0xff]
                %286 = vst [vmem:[%s178 + $0x1a8] sm:$0xff] %v285
                %v287 = vld [vmem:[%s177 + $0xd80] sm:$0xff]
                %288 = vst [vmem:[%s178 + $0x1b0] sm:$0xff] %v287
                %v289 = vld [vmem:[%s177 + $0xdc0] sm:$0xff]
                %290 = vst [vmem:[%s178 + $0x1b8] sm:$0xff] %v289
                %v291 = vld [vmem:[%s177 + $0xe00] sm:$0xff]
                %292 = vst [vmem:[%s178 + $0x1c0] sm:$0xff] %v291
                %v293 = vld [vmem:[%s177 + $0xe40] sm:$0xff]
                %294 = vst [vmem:[%s178 + $0x1c8] sm:$0xff] %v293
                %v295 = vld [vmem:[%s177 + $0xe80] sm:$0xff]
                %296 = vst [vmem:[%s178 + $0x1d0] sm:$0xff] %v295
                %v297 = vld [vmem:[%s177 + $0xec0] sm:$0xff]
                %298 = vst [vmem:[%s178 + $0x1d8] sm:$0xff] %v297
                %v299 = vld [vmem:[%s177 + $0xf00] sm:$0xff]
                %300 = vst [vmem:[%s178 + $0x1e0] sm:$0xff] %v299
                %v301 = vld [vmem:[%s177 + $0xf40] sm:$0xff]
                %302 = vst [vmem:[%s178 + $0x1e8] sm:$0xff] %v301
                %v303 = vld [vmem:[%s177 + $0xf80] sm:$0xff]
                %304 = vst [vmem:[%s178 + $0x1f0] sm:$0xff] %v303
                %v305 = vld [vmem:[%s177 + $0xfc0] sm:$0xff]
                %306 = vst [vmem:[%s178 + $0x1f8] sm:$0xff] %v305
              $region41: #{decoder_forward.7} parent=35 // loop_footer
                %s176 = sadd.s32 1, %s172
              $region42: #{decoder_forward.7} parent=35 // loop_footer_branch
                %171 = sbr.rel target = $region38
              $region43: #{decoder_forward.7} parent=35 // loop_exit
                _
            $region36: #{decoder_forward.7} parent=27 // pred_fallthru
              _
          $region28: #{decoder_forward.7} parent=23 // pred_fallthru
            _
          %447 = vnop
        $region24: #{decoder_forward.7} parent=19 // pred_fallthru
          _
        // Predicated region
        $region59: #{decoder_forward.7} parent=19 // pred_check
          %p448 = pneg %p93
        $region60: #{decoder_forward.7} parent=19 // pred_check_branch
          %450 = sbr.rel (%p448) target = $region62
        $region61: #{decoder_forward.7} parent=19 // pred_region
          %s451 = smul.u32 2, %s17
          %p452 = scmp.lt.s32.totalorder %s451, 15
          %s453 = scalar_select %p452, %s451, 15
          %s454 = scalar_lea.vmem %s2, %s453
          %s455 = smul.u32 2, %s17
        $region62: #{decoder_forward.7} parent=19 // pred_fallthru
          _
      $region20: #{decoder_forward.7} parent=5 // pred_fallthru
        _
      %p456 = scmp.le.s32.totalorder 1, %s9
      %p457 = scmp.lt.s32.totalorder %s9, 9
      %p458 = pnand %p456, %p457
      %p459 = pneg %p458
      // Predicated region
      $region63: #{decoder_forward.7} parent=5 // pred_check
        _
      $region64: #{decoder_forward.7} parent=5 // pred_check_branch
        %461 = sbr.rel (%p458) target = $region66
      $region65: #{decoder_forward.7} parent=5 // pred_region
        %s462 = ssub.s32 %s9, 1
        %s463 = sand.u32 %s60, 1
        %s464 = sand.u32 %s60, 1
        %s465 = smul.addr %s464, 512
        %s466 = scalar_lea.vmem [#allocation2], %s465
        // Predicated region
        $region67: #{decoder_forward.7} parent=65 // pred_check
          %p467 = pneg %p73
        $region68: #{decoder_forward.7} parent=65 // pred_check_branch
          %469 = sbr.rel (%p467) target = $region70
        $region69: #{decoder_forward.7} parent=65 // pred_region
          _
        $region70: #{decoder_forward.7} parent=65 // pred_fallthru
          _
        %p470 = scmp.lt.s32.totalorder %s18, 0
        %s471 = scalar_select %p470, %s18, 0
        %s472 = smul.addr %s471, 4
        %s473 = smul.addr %s472, 4
        %s474 = scalar_lea.vmem %s0, %s473
        %p475 = pneg %p47
        %p476 = pneg %p44
        %s477 = sand.u32 %s60, 1
        %s478 = sand.u32 %s60, 1
        %s479 = smul.addr %s478, 512
        %s480 = scalar_lea.vmem [#allocation2], %s479
        %p481 = pneg %p73
        %p482 = pneg %p70
        %s483 = smul.u32 2, %s19
        %p484 = scmp.lt.s32.totalorder %s483, 15
        %s485 = scalar_select %p484, %s483, 15
        %s486 = scalar_lea.vmem %s2, %s485
        %p487 = pneg %p99
        %p488 = pneg %p96
        %p489 = pneg %p127
        %p490 = pneg %p124
        %s491 = smul.u32 2, %s19
        %p492 = scmp.lt.s32.totalorder %s18, 0
        %s493 = scalar_select %p492, %s18, 0
        %p494 = scmp.lt.s32.totalorder %s491, 15
        %s495 = scalar_select %p494, %s491, 15
        %s496 = smul.addr %s493, 16
        %s497 = sadd.s32 %s495, %s496
        %s498 = smul.addr %s497, 4
        %s499 = scalar_lea.vmem %s3, %s498
        %p500 = scmp.lt.s32.totalorder %s18, 0
        %s501 = scalar_select %p500, %s18, 0
        %s502 = smul.addr %s501, 4
        %s503 = smul.addr %s502, 4
        %s504 = scalar_lea.vmem %s0, %s503
        %s505 = smul.u32 2, %s19
        %s506 = smul.u32 2, %s19
        %p507 = scmp.lt.s32.totalorder %s506, 15
        %s508 = scalar_select %p507, %s506, 15
        %s509 = scalar_lea.vmem %s2, %s508
        %s510 = smul.u32 2, %s19
        %s511 = smul.u32 2, %s19
        %p512 = scmp.lt.s32.totalorder %s18, 0
        %s513 = scalar_select %p512, %s18, 0
        %p514 = scmp.lt.s32.totalorder %s511, 15
        %s515 = scalar_select %p514, %s511, 15
        %s516 = smul.addr %s513, 16
        %s517 = sadd.s32 %s515, %s516
        %s518 = smul.addr %s517, 4
        %s519 = scalar_lea.vmem %s3, %s518
        %s520 = smul.u32 2, %s19
        %v521 = vld [vmem:[%s504] sm:$0xff]
        %v522 = vld [vmem:[%s504 + $0x8] sm:$0xff]
        %v523 = vld [vmem:[%s466] sm:$0xff]
        %v524 = vld [vmem:[%s466 + $0x8] sm:$0xff]
        %v525 = vld [vmem:[%s466 + $0x10] sm:$0xff]
        %v526 = vld [vmem:[%s466 + $0x18] sm:$0xff]
        %v527 = vld [vmem:[%s466 + $0x20] sm:$0xff]
        %v528 = vld [vmem:[%s466 + $0x28] sm:$0xff]
        %v529 = vld [vmem:[%s466 + $0x30] sm:$0xff]
        %v530 = vld [vmem:[%s466 + $0x38] sm:$0xff]
        %v531 = vld [vmem:[%s466 + $0x40] sm:$0xff]
        %v532 = vld [vmem:[%s466 + $0x48] sm:$0xff]
        %v533 = vld [vmem:[%s466 + $0x50] sm:$0xff]
        %v534 = vld [vmem:[%s466 + $0x58] sm:$0xff]
        %v535 = vld [vmem:[%s466 + $0x60] sm:$0xff]
        %v536 = vld [vmem:[%s466 + $0x68] sm:$0xff]
        %v537 = vld [vmem:[%s466 + $0x70] sm:$0xff]
        %v538 = vld [vmem:[%s466 + $0x78] sm:$0xff]
        %v539 = vld [vmem:[%s466 + $0x80] sm:$0xff]
        %v540 = vld [vmem:[%s466 + $0x88] sm:$0xff]
        %v541 = vld [vmem:[%s466 + $0x90] sm:$0xff]
        %v542 = vld [vmem:[%s466 + $0x98] sm:$0xff]
        %v543 = vld [vmem:[%s466 + $0xa0] sm:$0xff]
        %v544 = vld [vmem:[%s466 + $0xa8] sm:$0xff]
        %v545 = vld [vmem:[%s466 + $0xb0] sm:$0xff]
        %v546 = vld [vmem:[%s466 + $0xb8] sm:$0xff]
        %v547 = vld [vmem:[%s466 + $0xc0] sm:$0xff]
        %v548 = vld [vmem:[%s466 + $0xc8] sm:$0xff]
        %v549 = vld [vmem:[%s466 + $0xd0] sm:$0xff]
        %v550 = vld [vmem:[%s466 + $0xd8] sm:$0xff]
        %v551 = vld [vmem:[%s466 + $0xe0] sm:$0xff]
        %v552 = vld [vmem:[%s466 + $0xe8] sm:$0xff]
        %v553 = vld [vmem:[%s466 + $0xf0] sm:$0xff]
        %v554 = vld [vmem:[%s466 + $0xf8] sm:$0xff]
        %v555 = vld [vmem:[%s466 + $0x100] sm:$0xff]
        %v556 = vld [vmem:[%s466 + $0x108] sm:$0xff]
        %v557 = vld [vmem:[%s466 + $0x110] sm:$0xff]
        %v558 = vld [vmem:[%s466 + $0x118] sm:$0xff]
        %v559 = vld [vmem:[%s466 + $0x120] sm:$0xff]
        %v560 = vld [vmem:[%s466 + $0x128] sm:$0xff]
        %v561 = vld [vmem:[%s466 + $0x130] sm:$0xff]
        %v562 = vld [vmem:[%s466 + $0x138] sm:$0xff]
        %v563 = vld [vmem:[%s466 + $0x140] sm:$0xff]
        %v564 = vld [vmem:[%s466 + $0x148] sm:$0xff]
        %v565 = vld [vmem:[%s466 + $0x150] sm:$0xff]
        %v566 = vld [vmem:[%s466 + $0x158] sm:$0xff]
        %v567 = vld [vmem:[%s466 + $0x160] sm:$0xff]
        %v568 = vld [vmem:[%s466 + $0x168] sm:$0xff]
        %v569 = vld [vmem:[%s466 + $0x170] sm:$0xff]
        %v570 = vld [vmem:[%s466 + $0x178] sm:$0xff]
        %v571 = vld [vmem:[%s466 + $0x180] sm:$0xff]
        %v572 = vld [vmem:[%s466 + $0x188] sm:$0xff]
        %v573 = vld [vmem:[%s466 + $0x190] sm:$0xff]
        %v574 = vld [vmem:[%s466 + $0x198] sm:$0xff]
        %v575 = vld [vmem:[%s466 + $0x1a0] sm:$0xff]
        %v576 = vld [vmem:[%s466 + $0x1a8] sm:$0xff]
        %v577 = vld [vmem:[%s466 + $0x1b0] sm:$0xff]
        %v578 = vld [vmem:[%s466 + $0x1b8] sm:$0xff]
        %v579 = vld [vmem:[%s466 + $0x1c0] sm:$0xff]
        %v580 = vld [vmem:[%s466 + $0x1c8] sm:$0xff]
        %v581 = vld [vmem:[%s466 + $0x1d0] sm:$0xff]
        %v582 = vld [vmem:[%s466 + $0x1d8] sm:$0xff]
        %v583 = vld [vmem:[%s466 + $0x1e0] sm:$0xff]
        %v584 = vld [vmem:[%s466 + $0x1e8] sm:$0xff]
        %v585 = vld [vmem:[%s466 + $0x1f0] sm:$0xff]
        %v586 = vld [vmem:[%s466 + $0x1f8] sm:$0xff]
        %v587 = vld [vmem:[%s509] sm:$0x3]
        %v589 = vlaneseq
        %v590 = vshrl.u32 %v589, 7
        %v591 = vsub.s32 0, %v590
        %v592 = vrot.slane %v587, %v591
        %v593 = vlaneseq
        %v594 = vshrl.u32 %v593, 7
        %v595 = vsub.s32 1, %v594
        %v596 = vrot.slane %v587, %v595
        %v601 = vunpack.c.l.b16 %v521
        %v602 = vunpack.c.h.b16 %v521
        %v603 = vunpack.c.l.b16 %v522
        %v604 = vunpack.c.h.b16 %v522
        %v605 = vpack.c.b16 %v601, %v601
        %v606 = vpack.c.b16 %v602, %v602
        %v607 = vpack.c.b16 %v603, %v603
        %v608 = vpack.c.b16 %v604, %v604
        %v677 = vunpack.c.l.b16 %v523
        %v678 = vunpack.c.h.b16 %v523
        %v679 = vunpack.c.l.b16 %v524
        %v680 = vunpack.c.h.b16 %v524
        %v681 = vunpack.c.l.b16 %v525
        %v682 = vunpack.c.h.b16 %v525
        %v683 = vunpack.c.l.b16 %v526
        %v684 = vunpack.c.h.b16 %v526
        %v685 = vunpack.c.l.b16 %v527
        %v686 = vunpack.c.h.b16 %v527
        %v687 = vunpack.c.l.b16 %v528
        %v688 = vunpack.c.h.b16 %v528
        %v689 = vunpack.c.l.b16 %v529
        %v690 = vunpack.c.h.b16 %v529
        %v691 = vunpack.c.l.b16 %v530
        %v692 = vunpack.c.h.b16 %v530
        %v693 = vunpack.c.l.b16 %v531
        %v694 = vunpack.c.h.b16 %v531
        %v695 = vunpack.c.l.b16 %v532
        %v696 = vunpack.c.h.b16 %v532
        %v697 = vunpack.c.l.b16 %v533
        %v698 = vunpack.c.h.b16 %v533
        %v699 = vunpack.c.l.b16 %v534
        %v700 = vunpack.c.h.b16 %v534
        %v701 = vunpack.c.l.b16 %v535
        %v702 = vunpack.c.h.b16 %v535
        %v703 = vunpack.c.l.b16 %v536
        %v704 = vunpack.c.h.b16 %v536
        %v705 = vunpack.c.l.b16 %v537
        %v706 = vunpack.c.h.b16 %v537
        %v707 = vunpack.c.l.b16 %v538
        %v708 = vunpack.c.h.b16 %v538
        %v709 = vunpack.c.l.b16 %v539
        %v710 = vunpack.c.h.b16 %v539
        %v711 = vunpack.c.l.b16 %v540
        %v712 = vunpack.c.h.b16 %v540
        %v713 = vunpack.c.l.b16 %v541
        %v714 = vunpack.c.h.b16 %v541
        %v715 = vunpack.c.l.b16 %v542
        %v716 = vunpack.c.h.b16 %v542
        %v717 = vunpack.c.l.b16 %v543
        %v718 = vunpack.c.h.b16 %v543
        %v719 = vunpack.c.l.b16 %v544
        %v720 = vunpack.c.h.b16 %v544
        %v721 = vunpack.c.l.b16 %v545
        %v722 = vunpack.c.h.b16 %v545
        %v723 = vunpack.c.l.b16 %v546
        %v724 = vunpack.c.h.b16 %v546
        %v725 = vunpack.c.l.b16 %v547
        %v726 = vunpack.c.h.b16 %v547
        %v727 = vunpack.c.l.b16 %v548
        %v728 = vunpack.c.h.b16 %v548
        %v729 = vunpack.c.l.b16 %v549
        %v730 = vunpack.c.h.b16 %v549
        %v731 = vunpack.c.l.b16 %v550
        %v732 = vunpack.c.h.b16 %v550
        %v733 = vunpack.c.l.b16 %v551
        %v734 = vunpack.c.h.b16 %v551
        %v735 = vunpack.c.l.b16 %v552
        %v736 = vunpack.c.h.b16 %v552
        %v737 = vunpack.c.l.b16 %v553
        %v738 = vunpack.c.h.b16 %v553
        %v739 = vunpack.c.l.b16 %v554
        %v740 = vunpack.c.h.b16 %v554
        %v741 = vunpack.c.l.b16 %v555
        %v742 = vunpack.c.h.b16 %v555
        %v743 = vunpack.c.l.b16 %v556
        %v744 = vunpack.c.h.b16 %v556
        %v745 = vunpack.c.l.b16 %v557
        %v746 = vunpack.c.h.b16 %v557
        %v747 = vunpack.c.l.b16 %v558
        %v748 = vunpack.c.h.b16 %v558
        %v749 = vunpack.c.l.b16 %v559
        %v750 = vunpack.c.h.b16 %v559
        %v751 = vunpack.c.l.b16 %v560
        %v752 = vunpack.c.h.b16 %v560
        %v753 = vunpack.c.l.b16 %v561
        %v754 = vunpack.c.h.b16 %v561
        %v755 = vunpack.c.l.b16 %v562
        %v756 = vunpack.c.h.b16 %v562
        %v757 = vunpack.c.l.b16 %v563
        %v758 = vunpack.c.h.b16 %v563
        %v759 = vunpack.c.l.b16 %v564
        %v760 = vunpack.c.h.b16 %v564
        %v761 = vunpack.c.l.b16 %v565
        %v762 = vunpack.c.h.b16 %v565
        %v763 = vunpack.c.l.b16 %v566
        %v764 = vunpack.c.h.b16 %v566
        %v765 = vunpack.c.l.b16 %v567
        %v766 = vunpack.c.h.b16 %v567
        %v767 = vunpack.c.l.b16 %v568
        %v768 = vunpack.c.h.b16 %v568
        %v769 = vunpack.c.l.b16 %v569
        %v770 = vunpack.c.h.b16 %v569
        %v771 = vunpack.c.l.b16 %v570
        %v772 = vunpack.c.h.b16 %v570
        %v773 = vunpack.c.l.b16 %v571
        %v774 = vunpack.c.h.b16 %v571
        %v775 = vunpack.c.l.b16 %v572
        %v776 = vunpack.c.h.b16 %v572
        %v777 = vunpack.c.l.b16 %v573
        %v778 = vunpack.c.h.b16 %v573
        %v779 = vunpack.c.l.b16 %v574
        %v780 = vunpack.c.h.b16 %v574
        %v781 = vunpack.c.l.b16 %v575
        %v782 = vunpack.c.h.b16 %v575
        %v783 = vunpack.c.l.b16 %v576
        %v784 = vunpack.c.h.b16 %v576
        %v785 = vunpack.c.l.b16 %v577
        %v786 = vunpack.c.h.b16 %v577
        %v787 = vunpack.c.l.b16 %v578
        %v788 = vunpack.c.h.b16 %v578
        %v789 = vunpack.c.l.b16 %v579
        %v790 = vunpack.c.h.b16 %v579
        %v791 = vunpack.c.l.b16 %v580
        %v792 = vunpack.c.h.b16 %v580
        %v793 = vunpack.c.l.b16 %v581
        %v794 = vunpack.c.h.b16 %v581
        %v795 = vunpack.c.l.b16 %v582
        %v796 = vunpack.c.h.b16 %v582
        %v797 = vunpack.c.l.b16 %v583
        %v798 = vunpack.c.h.b16 %v583
        %v799 = vunpack.c.l.b16 %v584
        %v800 = vunpack.c.h.b16 %v584
        %v801 = vunpack.c.l.b16 %v585
        %v802 = vunpack.c.h.b16 %v585
        %v803 = vunpack.c.l.b16 %v586
        %v804 = vunpack.c.h.b16 %v586
        %v805 = vpack.c.b16 %v679, %v677
        %v806 = vpack.c.b16 %v680, %v678
        %v807 = vpack.c.b16 %v683, %v681
        %v808 = vpack.c.b16 %v684, %v682
        %v809 = vpack.c.b16 %v687, %v685
        %v810 = vpack.c.b16 %v688, %v686
        %v811 = vpack.c.b16 %v691, %v689
        %v812 = vpack.c.b16 %v692, %v690
        %v813 = vpack.c.b16 %v695, %v693
        %v814 = vpack.c.b16 %v696, %v694
        %v815 = vpack.c.b16 %v699, %v697
        %v816 = vpack.c.b16 %v700, %v698
        %v817 = vpack.c.b16 %v703, %v701
        %v818 = vpack.c.b16 %v704, %v702
        %v819 = vpack.c.b16 %v707, %v705
        %v820 = vpack.c.b16 %v708, %v706
        %v821 = vpack.c.b16 %v711, %v709
        %v822 = vpack.c.b16 %v712, %v710
        %v823 = vpack.c.b16 %v715, %v713
        %v824 = vpack.c.b16 %v716, %v714
        %v825 = vpack.c.b16 %v719, %v717
        %v826 = vpack.c.b16 %v720, %v718
        %v827 = vpack.c.b16 %v723, %v721
        %v828 = vpack.c.b16 %v724, %v722
        %v829 = vpack.c.b16 %v727, %v725
        %v830 = vpack.c.b16 %v728, %v726
        %v831 = vpack.c.b16 %v731, %v729
        %v832 = vpack.c.b16 %v732, %v730
        %v833 = vpack.c.b16 %v735, %v733
        %v834 = vpack.c.b16 %v736, %v734
        %v835 = vpack.c.b16 %v739, %v737
        %v836 = vpack.c.b16 %v740, %v738
        %v837 = vpack.c.b16 %v743, %v741
        %v838 = vpack.c.b16 %v744, %v742
        %v839 = vpack.c.b16 %v747, %v745
        %v840 = vpack.c.b16 %v748, %v746
        %v841 = vpack.c.b16 %v751, %v749
        %v842 = vpack.c.b16 %v752, %v750
        %v843 = vpack.c.b16 %v755, %v753
        %v844 = vpack.c.b16 %v756, %v754
        %v845 = vpack.c.b16 %v759, %v757
        %v846 = vpack.c.b16 %v760, %v758
        %v847 = vpack.c.b16 %v763, %v761
        %v848 = vpack.c.b16 %v764, %v762
        %v849 = vpack.c.b16 %v767, %v765
        %v850 = vpack.c.b16 %v768, %v766
        %v851 = vpack.c.b16 %v771, %v769
        %v852 = vpack.c.b16 %v772, %v770
        %v853 = vpack.c.b16 %v775, %v773
        %v854 = vpack.c.b16 %v776, %v774
        %v855 = vpack.c.b16 %v779, %v777
        %v856 = vpack.c.b16 %v780, %v778
        %v857 = vpack.c.b16 %v783, %v781
        %v858 = vpack.c.b16 %v784, %v782
        %v859 = vpack.c.b16 %v787, %v785
        %v860 = vpack.c.b16 %v788, %v786
        %v861 = vpack.c.b16 %v791, %v789
        %v862 = vpack.c.b16 %v792, %v790
        %v863 = vpack.c.b16 %v795, %v793
        %v864 = vpack.c.b16 %v796, %v794
        %v865 = vpack.c.b16 %v799, %v797
        %v866 = vpack.c.b16 %v800, %v798
        %v867 = vpack.c.b16 %v803, %v801
        %v868 = vpack.c.b16 %v804, %v802
        %933 = vmatprep.subr.bf16.mxu0 %v806
        %934 = vmatpush1.bf16.msra.mxu0 %v805
        %935 = vmatprep.subr.bf16.mxu0 %v808
        %936 = vmatpush1.bf16.msra.mxu0 %v807
        %937 = vmatprep.subr.bf16.mxu0 %v810
        %938 = vmatpush1.bf16.msra.mxu0 %v809
        %939 = vmatprep.subr.bf16.mxu0 %v812
        %940 = vmatpush1.bf16.msra.mxu0 %v811
        %941 = vmatprep.subr.bf16.mxu0 %v814
        %942 = vmatpush1.bf16.msra.mxu0 %v813
        %943 = vmatprep.subr.bf16.mxu0 %v816
        %944 = vmatpush1.bf16.msra.mxu0 %v815
        %945 = vmatprep.subr.bf16.mxu0 %v818
        %946 = vmatpush1.bf16.msra.mxu0 %v817
        %947 = vmatprep.subr.bf16.mxu0 %v820
        %948 = vmatpush1.bf16.msra.mxu0 %v819
        %949 = vmatprep.subr.bf16.mxu0 %v822
        %950 = vmatpush1.bf16.msra.mxu0 %v821
        %951 = vmatprep.subr.bf16.mxu0 %v824
        %952 = vmatpush1.bf16.msra.mxu0 %v823
        %953 = vmatprep.subr.bf16.mxu0 %v826
        %954 = vmatpush1.bf16.msra.mxu0 %v825
        %955 = vmatprep.subr.bf16.mxu0 %v828
        %956 = vmatpush1.bf16.msra.mxu0 %v827
        %957 = vmatprep.subr.bf16.mxu0 %v830
        %958 = vmatpush1.bf16.msra.mxu0 %v829
        %959 = vmatprep.subr.bf16.mxu0 %v832
        %960 = vmatpush1.bf16.msra.mxu0 %v831
        %961 = vmatprep.subr.bf16.mxu0 %v834
        %962 = vmatpush1.bf16.msra.mxu0 %v833
        %963 = vmatprep.subr.bf16.mxu0 %v836
        %964 = vmatpush1.bf16.msra.mxu0 %v835
        %965 = vmatprep.mubr.bf16.mxu0 %v606
        %966 = vmatmul.mubr.bf16.gmra.mrb[0].mxu0 %v605
        %v967 = vpop.f32.mrb[0].mxu0
        %v968 = vadd.f32 %v592, %v967
        %v969 = vpop.f32.mrb[0].mxu0
        %v970 = vadd.f32 %v596, %v969
        %v971 = vpop.f32.mrb[0].mxu0
        %v972 = vpop.f32.mrb[0].mxu0
        %973 = vdwg.mxu0
        %974 = vmatprep.subr.bf16.mxu0 %v838
        %975 = vmatpush1.bf16.msra.mxu0 %v837
        %976 = vmatprep.subr.bf16.mxu0 %v840
        %977 = vmatpush1.bf16.msra.mxu0 %v839
        %978 = vmatprep.subr.bf16.mxu0 %v842
        %979 = vmatpush1.bf16.msra.mxu0 %v841
        %980 = vmatprep.subr.bf16.mxu0 %v844
        %981 = vmatpush1.bf16.msra.mxu0 %v843
        %982 = vmatprep.subr.bf16.mxu0 %v846
        %983 = vmatpush1.bf16.msra.mxu0 %v845
        %984 = vmatprep.subr.bf16.mxu0 %v848
        %985 = vmatpush1.bf16.msra.mxu0 %v847
        %986 = vmatprep.subr.bf16.mxu0 %v850
        %987 = vmatpush1.bf16.msra.mxu0 %v849
        %988 = vmatprep.subr.bf16.mxu0 %v852
        %989 = vmatpush1.bf16.msra.mxu0 %v851
        %990 = vmatprep.subr.bf16.mxu0 %v854
        %991 = vmatpush1.bf16.msra.mxu0 %v853
        %992 = vmatprep.subr.bf16.mxu0 %v856
        %993 = vmatpush1.bf16.msra.mxu0 %v855
        %994 = vmatprep.subr.bf16.mxu0 %v858
        %995 = vmatpush1.bf16.msra.mxu0 %v857
        %996 = vmatprep.subr.bf16.mxu0 %v860
        %997 = vmatpush1.bf16.msra.mxu0 %v859
        %998 = vmatprep.subr.bf16.mxu0 %v862
        %999 = vmatpush1.bf16.msra.mxu0 %v861
        %1000 = vmatprep.subr.bf16.mxu0 %v864
        %1001 = vmatpush1.bf16.msra.mxu0 %v863
        %1002 = vmatprep.subr.bf16.mxu0 %v866
        %1003 = vmatpush1.bf16.msra.mxu0 %v865
        %1004 = vmatprep.subr.bf16.mxu0 %v868
        %1005 = vmatpush1.bf16.msra.mxu0 %v867
        %1006 = vmatprep.mubr.bf16.mxu0 %v608
        %1007 = vmatmul.mubr.bf16.gmra.mrb[0].mxu0 %v607
        %v1008 = vpop.f32.mrb[0].mxu0
        %v1009 = vadd.f32 %v968, %v1008
        %v1010 = vpop.f32.mrb[0].mxu0
        %v1011 = vadd.f32 %v970, %v1010
        %v1012 = vpop.f32.mrb[0].mxu0
        %v1013 = vpop.f32.mrb[0].mxu0
        %1014 = vdwg.mxu0
        %v1015 = vmul.f32 %v1009, 0.2
        %v1016 = vmul.f32 %v1011, 0.2
        %v1017 = vmax.f32 %v1009, %v1015
        %v1018 = vmax.f32 %v1011, %v1016
        %v1019 = vpack.c.bf16 %v1017, %v1017
        %v1020 = vpack.c.bf16 %v1018, %v1018
        %v1023 = vunpack.c.l.b16 %v1019
        %v1024 = vunpack.c.l.b16 %v1020
        %v1025 = vpack.c.b16 %v1024, %v1023
        %1027 = vst [vmem:[%s519] sm:$0xff] %v1025
        %s1028 = smul.u32 2, %s19
        %p1029 = scmp.lt.s32.totalorder %s18, 0
        %s1030 = scalar_select %p1029, %s18, 0
        %p1031 = scmp.lt.s32.totalorder %s1028, 15
        %s1032 = scalar_select %p1031, %s1028, 15
        %s1033 = smul.addr %s1030, 16
        %s1034 = sadd.s32 %s1032, %s1033
        %s1035 = smul.addr %s1034, 4
        %s1036 = scalar_lea.vmem %s3, %s1035
        // Predicated region
        $region71: #{decoder_forward.7} parent=65 // pred_check
          %p1037 = pneg %p124
        $region72: #{decoder_forward.7} parent=65 // pred_check_branch
          %1039 = sbr.rel (%p1037) target = $region74
        $region73: #{decoder_forward.7} parent=65 // pred_region
          %s1040 = smul.u32 2, %s19
        $region74: #{decoder_forward.7} parent=65 // pred_fallthru
          _
      $region66: #{decoder_forward.7} parent=5 // pred_fallthru
        _
      %p1041 = scmp.le.s32.totalorder 2, %s9
      // Predicated region
      $region75: #{decoder_forward.7} parent=5 // pred_check
        %p1042 = pneg %p1041
      $region76: #{decoder_forward.7} parent=5 // pred_check_branch
        %1044 = sbr.rel (%p1042) target = $region78
      $region77: #{decoder_forward.7} parent=5 // pred_region
        %s1045 = ssub.s32 %s9, 2
        // Predicated region
        $region79: #{decoder_forward.7} parent=77 // pred_check
          %p1046 = pneg %p130
        $region80: #{decoder_forward.7} parent=77 // pred_check_branch
          %1048 = sbr.rel (%p1046) target = $region82
        $region81: #{decoder_forward.7} parent=77 // pred_region
          %s1049 = smul.u32 2, %s21
          %p1050 = scmp.lt.s32.totalorder %s20, 0
          %s1051 = scalar_select %p1050, %s20, 0
          %p1052 = scmp.lt.s32.totalorder %s1049, 15
          %s1053 = scalar_select %p1052, %s1049, 15
          %s1054 = smul.addr %s1051, 16
          %s1055 = sadd.s32 %s1053, %s1054
          %s1056 = smul.addr %s1055, 4
          %s1057 = scalar_lea.vmem %s3, %s1056
        $region82: #{decoder_forward.7} parent=77 // pred_fallthru
          _
      $region78: #{decoder_forward.7} parent=5 // pred_fallthru
        _
    $region6: #{decoder_forward.7} parent=1 // loop_footer
      %s13 = sadd.s32 1, %s9
    $region7: #{decoder_forward.7} parent=1 // loop_footer_branch
      %8 = sbr.rel target = $region3
    $region8: #{decoder_forward.7} parent=1 // loop_exit
      _

// kernel: decoder_forward.8
$region0: #{decoder_forward.8}
  #allocation0 [shape = 'u32[]', space=smem, size = 0x4, offset = 0x4, fixed_abs, tag = 'smem constant byte address 0x4 - core index']
  #allocation1 [shape = 'u32[144,128]{1,0:T(1,128)}', space=vmem, size = 0x12000, scoped, tag = 'internal scratch']
  %s0 = inlined_call_operand.vmem [shape: bf16[32,512], index: 0, kind: input, shape index: {}]
  %s1 = inlined_call_operand.vmem [shape: bf16[512,1024], index: 1, kind: input, shape index: {}]
  %s2 = inlined_call_operand.vmem [shape: f32[1,1024], index: 2, kind: input, shape index: {}]
  %s3 = inlined_call_operand.vmem [shape: bf16[32,1024], index: 3, kind: output, shape index: {}]
  %s4 = sld [smem:[#allocation0]]
  $region117: #{decoder_forward.8} parent=0
    _
  %s6 = ssub.s32 1, %s4
  %s7 = scalar_select 0, %s6, %s4
  $region1: #{decoder_forward.8} parent=0
    #allocation2 [shape = 'u8[524288]{0}', space=vmem, size = 0x80000, scoped, tag = 'input window, operand 1']
    #allocation3 [shape = 'u8[32768]{0}', space=vmem, size = 0x8000, scoped, tag = 'output window, operand 0']
    loop: start=0, step=1, limit=6
    $region2: #{decoder_forward.8} parent=1 // loop_pre_header
      _
    $region3: #{decoder_forward.8} parent=1 // loop_header
      %s9 = sphi 0, %s13
      %p10 = scmp.ge.s32.totalorder %s9, 6
      %s16 = sphi 0, %s28
      %s17 = sphi 0, %s24
      %s18 = sphi 0, %s16
      %s19 = sphi 0, %s17
      %s20 = sphi 0, %s18
      %s21 = sphi 0, %s19
      %s31 = sphi 0, %s33
      %s34 = sphi 0, %s31
      %s35 = sphi 0, %s34
      %s51 = sphi 0, %s35
      %s57 = sphi 0, %s59
      %s60 = sphi 0, %s57
      %s61 = sphi 0, %s60
      %s77 = sphi 0, %s61
      %s83 = sphi 0, %s85
      %s86 = sphi 0, %s83
      %s87 = sphi 0, %s86
      %s103 = sphi 0, %s87
      %s111 = sphi 0, %s113
      %s114 = sphi 0, %s111
      %s115 = sphi 0, %s114
      %s131 = sphi 0, %s115
    $region4: #{decoder_forward.8} parent=1 // loop_header_branch
      %12 = sbr.rel (%p10) target = $region8
    $region5: #{decoder_forward.8} parent=1 // loop_body
      %s14 = ssub.s32 %s9, 1
      %s15 = ssub.s32 %s9, 2
      %s22 = sadd.s32 1, %s17
      %p23 = scmp.ge.s32.totalorder %s22, 4
      %s24 = scalar_select %p23, 0, %s22
      %s25 = sadd.s32 1, %s16
      %s26 = scalar_select %p23, %s25, %s16
      %p27 = scmp.ge.s32.totalorder %s26, 1
      %s28 = scalar_select %p27, 0, %s26
      %s29 = ssub.s32 %s16, %s28
      %p30 = scmp.eq.s32.totalorder %s29, 0
      %s32 = sadd.s32 %s31, 1
      %s33 = scalar_select %p30, %s31, %s32
      %p36 = pneg %p30
      %p37 = scmp.eq.s32.totalorder %s9, 3
      %p38 = por %p36, %p37
      %p39 = scmp.ne.s32.totalorder %s31, %s34
      %p40 = scmp.eq.s32.totalorder %s9, 0
      %p41 = por %p39, %p40
      %p42 = scmp.ne.s32.totalorder %s31, %s34
      %p43 = scmp.eq.s32.totalorder %s14, 3
      %p44 = por %p42, %p43
      %p45 = scmp.ne.s32.totalorder %s34, %s35
      %p46 = scmp.eq.s32.totalorder %s14, 0
      %p47 = por %p45, %p46
      %p48 = scmp.ne.s32.totalorder %s34, %s35
      %p49 = scmp.eq.s32.totalorder %s15, 3
      %p50 = por %p48, %p49
      %p52 = scmp.ne.s32.totalorder %s35, %s51
      %p53 = scmp.eq.s32.totalorder %s15, 0
      %p54 = por %p52, %p53
      %s55 = ssub.s32 %s17, %s24
      %p56 = scmp.eq.s32.totalorder %s55, 0
      %s58 = sadd.s32 %s57, 1
      %s59 = scalar_select %p56, %s57, %s58
      %p62 = pneg %p56
      %p63 = scmp.eq.s32.totalorder %s9, 3
      %p64 = por %p62, %p63
      %p65 = scmp.ne.s32.totalorder %s57, %s60
      %p66 = scmp.eq.s32.totalorder %s9, 0
      %p67 = por %p65, %p66
      %p68 = scmp.ne.s32.totalorder %s57, %s60
      %p69 = scmp.eq.s32.totalorder %s14, 3
      %p70 = por %p68, %p69
      %p71 = scmp.ne.s32.totalorder %s60, %s61
      %p72 = scmp.eq.s32.totalorder %s14, 0
      %p73 = por %p71, %p72
      %p74 = scmp.ne.s32.totalorder %s60, %s61
      %p75 = scmp.eq.s32.totalorder %s15, 3
      %p76 = por %p74, %p75
      %p78 = scmp.ne.s32.totalorder %s61, %s77
      %p79 = scmp.eq.s32.totalorder %s15, 0
      %p80 = por %p78, %p79
      %s81 = ssub.s32 %s17, %s24
      %p82 = scmp.eq.s32.totalorder %s81, 0
      %s84 = sadd.s32 %s83, 1
      %s85 = scalar_select %p82, %s83, %s84
      %p88 = pneg %p82
      %p89 = scmp.eq.s32.totalorder %s9, 3
      %p90 = por %p88, %p89
      %p91 = scmp.ne.s32.totalorder %s83, %s86
      %p92 = scmp.eq.s32.totalorder %s9, 0
      %p93 = por %p91, %p92
      %p94 = scmp.ne.s32.totalorder %s83, %s86
      %p95 = scmp.eq.s32.totalorder %s14, 3
      %p96 = por %p94, %p95
      %p97 = scmp.ne.s32.totalorder %s86, %s87
      %p98 = scmp.eq.s32.totalorder %s14, 0
      %p99 = por %p97, %p98
      %p100 = scmp.ne.s32.totalorder %s86, %s87
      %p101 = scmp.eq.s32.totalorder %s15, 3
      %p102 = por %p100, %p101
      %p104 = scmp.ne.s32.totalorder %s87, %s103
      %p105 = scmp.eq.s32.totalorder %s15, 0
      %p106 = por %p104, %p105
      %s107 = ssub.s32 %s16, %s28
      %s108 = ssub.s32 %s17, %s24
      %s109 = sor.u32 %s107, %s108
      %p110 = scmp.eq.s32.totalorder %s109, 0
      %s112 = sadd.s32 %s111, 1
      %s113 = scalar_select %p110, %s111, %s112
      %p116 = pneg %p110
      %p117 = scmp.eq.s32.totalorder %s9, 3
      %p118 = por %p116, %p117
      %p119 = scmp.ne.s32.totalorder %s111, %s114
      %p120 = scmp.eq.s32.totalorder %s9, 0
      %p121 = por %p119, %p120
      %p122 = scmp.ne.s32.totalorder %s111, %s114
      %p123 = scmp.eq.s32.totalorder %s14, 3
      %p124 = por %p122, %p123
      %p125 = scmp.ne.s32.totalorder %s114, %s115
      %p126 = scmp.eq.s32.totalorder %s14, 0
      %p127 = por %p125, %p126
      %p128 = scmp.ne.s32.totalorder %s114, %s115
      %p129 = scmp.eq.s32.totalorder %s15, 3
      %p130 = por %p128, %p129
      %p132 = scmp.ne.s32.totalorder %s115, %s131
      %p133 = scmp.eq.s32.totalorder %s15, 0
      %p134 = por %p132, %p133
      %p135 = scmp.le.s32.totalorder 1, %s9
      %p136 = scmp.lt.s32.totalorder %s9, 5
      %p137 = pnand %p135, %p136
      %p138 = pneg %p137
      // Predicated region
      $region9: #{decoder_forward.8} parent=5 // pred_check
        _
      $region10: #{decoder_forward.8} parent=5 // pred_check_branch
        %140 = sbr.rel (%p137) target = $region12
      $region11: #{decoder_forward.8} parent=5 // pred_region
        %s141 = ssub.s32 %s9, 1
        // Predicated region
        $region13: #{decoder_forward.8} parent=11 // pred_check
          %p142 = pneg %p47
        $region14: #{decoder_forward.8} parent=11 // pred_check_branch
          %144 = sbr.rel (%p142) target = $region16
        $region15: #{decoder_forward.8} parent=11 // pred_region
          %s145 = smul.u32 4, %s18
          %p146 = scmp.lt.s32.totalorder %s145, 3
          %s147 = scalar_select %p146, %s145, 3
          %s148 = smul.addr %s147, 4
          %s149 = smul.addr %s148, 4
          %s150 = scalar_lea.vmem %s0, %s149
          %s151 = smul.u32 4, %s18
        $region16: #{decoder_forward.8} parent=11 // pred_fallthru
          _
      $region12: #{decoder_forward.8} parent=5 // pred_fallthru
        _
      %p152 = scmp.lt.s32.totalorder %s9, 4
      // Predicated region
      $region17: #{decoder_forward.8} parent=5 // pred_check
        %p153 = pneg %p152
      $region18: #{decoder_forward.8} parent=5 // pred_check_branch
        %155 = sbr.rel (%p153) target = $region20
      $region19: #{decoder_forward.8} parent=5 // pred_region
        // Predicated region
        $region21: #{decoder_forward.8} parent=19 // pred_check
          %p156 = pneg %p67
        $region22: #{decoder_forward.8} parent=19 // pred_check_branch
          %158 = sbr.rel (%p156) target = $region24
        $region23: #{decoder_forward.8} parent=19 // pred_region
          %s159 = sand.u32 %s57, 1
          %s160 = sand.u32 %s57, 1
          %s161 = smul.addr %s160, 512
          %s162 = scalar_lea.vmem [#allocation2], %s161
          %s163 = smul.u32 2, %s17
          %s164 = smul.addr %s163, 4
          %s165 = scalar_lea.vmem %s1, %s164
          // Predicated region
          $region25: #{decoder_forward.8} parent=23 // pred_check
            _
          $region26: #{decoder_forward.8} parent=23 // pred_check_branch
            %167 = sbr.rel (0) target = $region28
          $region27: #{decoder_forward.8} parent=23 // pred_region
            // Predicated region
            $region29: #{decoder_forward.8} parent=27 // pred_check
              _
            $region30: #{decoder_forward.8} parent=27 // pred_check_branch
              %169 = sbr.rel (0) target = $region32
            $region31: #{decoder_forward.8} parent=27 // pred_region
              // Predicated region
              $region44: #{decoder_forward.8} parent=31 // pred_check
                _
              $region45: #{decoder_forward.8} parent=31 // pred_check_branch
                %310 = sbr.rel (0) target = $region47
              $region46: #{decoder_forward.8} parent=31 // pred_region
                loop: start=0, step=1, limit=1
                $region48: #{decoder_forward.8} parent=46 // loop_pre_header
                  _
                $region49: #{decoder_forward.8} parent=46 // loop_header
                  %s312 = sphi 0, %s316
                  %p313 = scmp.ge.s32.totalorder %s312, 1
                  %s317 = sphi %s165, %s165
                  %s318 = sphi %s162, %s162
                $region50: #{decoder_forward.8} parent=46 // loop_header_branch
                  %315 = sbr.rel (%p313) target = $region54
                $region51: #{decoder_forward.8} parent=46 // loop_body
                  %v319 = vld [vmem:[%s317] sm:$0xff]
                  %320 = vst [vmem:[%s318] sm:$0xff] %v319
                  %v321 = vld [vmem:[%s317 + $0x20] sm:$0xff]
                  %322 = vst [vmem:[%s318 + $0x8] sm:$0xff] %v321
                  %v323 = vld [vmem:[%s317 + $0x40] sm:$0xff]
                  %324 = vst [vmem:[%s318 + $0x10] sm:$0xff] %v323
                  %v325 = vld [vmem:[%s317 + $0x60] sm:$0xff]
                  %326 = vst [vmem:[%s318 + $0x18] sm:$0xff] %v325
                  %v327 = vld [vmem:[%s317 + $0x80] sm:$0xff]
                  %328 = vst [vmem:[%s318 + $0x20] sm:$0xff] %v327
                  %v329 = vld [vmem:[%s317 + $0xa0] sm:$0xff]
                  %330 = vst [vmem:[%s318 + $0x28] sm:$0xff] %v329
                  %v331 = vld [vmem:[%s317 + $0xc0] sm:$0xff]
                  %332 = vst [vmem:[%s318 + $0x30] sm:$0xff] %v331
                  %v333 = vld [vmem:[%s317 + $0xe0] sm:$0xff]
                  %334 = vst [vmem:[%s318 + $0x38] sm:$0xff] %v333
                  %v335 = vld [vmem:[%s317 + $0x100] sm:$0xff]
                  %336 = vst [vmem:[%s318 + $0x40] sm:$0xff] %v335
                  %v337 = vld [vmem:[%s317 + $0x120] sm:$0xff]
                  %338 = vst [vmem:[%s318 + $0x48] sm:$0xff] %v337
                  %v339 = vld [vmem:[%s317 + $0x140] sm:$0xff]
                  %340 = vst [vmem:[%s318 + $0x50] sm:$0xff] %v339
                  %v341 = vld [vmem:[%s317 + $0x160] sm:$0xff]
                  %342 = vst [vmem:[%s318 + $0x58] sm:$0xff] %v341
                  %v343 = vld [vmem:[%s317 + $0x180] sm:$0xff]
                  %344 = vst [vmem:[%s318 + $0x60] sm:$0xff] %v343
                  %v345 = vld [vmem:[%s317 + $0x1a0] sm:$0xff]
                  %346 = vst [vmem:[%s318 + $0x68] sm:$0xff] %v345
                  %v347 = vld [vmem:[%s317 + $0x1c0] sm:$0xff]
                  %348 = vst [vmem:[%s318 + $0x70] sm:$0xff] %v347
                  %v349 = vld [vmem:[%s317 + $0x1e0] sm:$0xff]
                  %350 = vst [vmem:[%s318 + $0x78] sm:$0xff] %v349
                  %v351 = vld [vmem:[%s317 + $0x200] sm:$0xff]
                  %352 = vst [vmem:[%s318 + $0x80] sm:$0xff] %v351
                  %v353 = vld [vmem:[%s317 + $0x220] sm:$0xff]
                  %354 = vst [vmem:[%s318 + $0x88] sm:$0xff] %v353
                  %v355 = vld [vmem:[%s317 + $0x240] sm:$0xff]
                  %356 = vst [vmem:[%s318 + $0x90] sm:$0xff] %v355
                  %v357 = vld [vmem:[%s317 + $0x260] sm:$0xff]
                  %358 = vst [vmem:[%s318 + $0x98] sm:$0xff] %v357
                  %v359 = vld [vmem:[%s317 + $0x280] sm:$0xff]
                  %360 = vst [vmem:[%s318 + $0xa0] sm:$0xff] %v359
                  %v361 = vld [vmem:[%s317 + $0x2a0] sm:$0xff]
                  %362 = vst [vmem:[%s318 + $0xa8] sm:$0xff] %v361
                  %v363 = vld [vmem:[%s317 + $0x2c0] sm:$0xff]
                  %364 = vst [vmem:[%s318 + $0xb0] sm:$0xff] %v363
                  %v365 = vld [vmem:[%s317 + $0x2e0] sm:$0xff]
                  %366 = vst [vmem:[%s318 + $0xb8] sm:$0xff] %v365
                  %v367 = vld [vmem:[%s317 + $0x300] sm:$0xff]
                  %368 = vst [vmem:[%s318 + $0xc0] sm:$0xff] %v367
                  %v369 = vld [vmem:[%s317 + $0x320] sm:$0xff]
                  %370 = vst [vmem:[%s318 + $0xc8] sm:$0xff] %v369
                  %v371 = vld [vmem:[%s317 + $0x340] sm:$0xff]
                  %372 = vst [vmem:[%s318 + $0xd0] sm:$0xff] %v371
                  %v373 = vld [vmem:[%s317 + $0x360] sm:$0xff]
                  %374 = vst [vmem:[%s318 + $0xd8] sm:$0xff] %v373
                  %v375 = vld [vmem:[%s317 + $0x380] sm:$0xff]
                  %376 = vst [vmem:[%s318 + $0xe0] sm:$0xff] %v375
                  %v377 = vld [vmem:[%s317 + $0x3a0] sm:$0xff]
                  %378 = vst [vmem:[%s318 + $0xe8] sm:$0xff] %v377
                  %v379 = vld [vmem:[%s317 + $0x3c0] sm:$0xff]
                  %380 = vst [vmem:[%s318 + $0xf0] sm:$0xff] %v379
                  %v381 = vld [vmem:[%s317 + $0x3e0] sm:$0xff]
                  %382 = vst [vmem:[%s318 + $0xf8] sm:$0xff] %v381
                  %v383 = vld [vmem:[%s317 + $0x400] sm:$0xff]
                  %384 = vst [vmem:[%s318 + $0x100] sm:$0xff] %v383
                  %v385 = vld [vmem:[%s317 + $0x420] sm:$0xff]
                  %386 = vst [vmem:[%s318 + $0x108] sm:$0xff] %v385
                  %v387 = vld [vmem:[%s317 + $0x440] sm:$0xff]
                  %388 = vst [vmem:[%s318 + $0x110] sm:$0xff] %v387
                  %v389 = vld [vmem:[%s317 + $0x460] sm:$0xff]
                  %390 = vst [vmem:[%s318 + $0x118] sm:$0xff] %v389
                  %v391 = vld [vmem:[%s317 + $0x480] sm:$0xff]
                  %392 = vst [vmem:[%s318 + $0x120] sm:$0xff] %v391
                  %v393 = vld [vmem:[%s317 + $0x4a0] sm:$0xff]
                  %394 = vst [vmem:[%s318 + $0x128] sm:$0xff] %v393
                  %v395 = vld [vmem:[%s317 + $0x4c0] sm:$0xff]
                  %396 = vst [vmem:[%s318 + $0x130] sm:$0xff] %v395
                  %v397 = vld [vmem:[%s317 + $0x4e0] sm:$0xff]
                  %398 = vst [vmem:[%s318 + $0x138] sm:$0xff] %v397
                  %v399 = vld [vmem:[%s317 + $0x500] sm:$0xff]
                  %400 = vst [vmem:[%s318 + $0x140] sm:$0xff] %v399
                  %v401 = vld [vmem:[%s317 + $0x520] sm:$0xff]
                  %402 = vst [vmem:[%s318 + $0x148] sm:$0xff] %v401
                  %v403 = vld [vmem:[%s317 + $0x540] sm:$0xff]
                  %404 = vst [vmem:[%s318 + $0x150] sm:$0xff] %v403
                  %v405 = vld [vmem:[%s317 + $0x560] sm:$0xff]
                  %406 = vst [vmem:[%s318 + $0x158] sm:$0xff] %v405
                  %v407 = vld [vmem:[%s317 + $0x580] sm:$0xff]
                  %408 = vst [vmem:[%s318 + $0x160] sm:$0xff] %v407
                  %v409 = vld [vmem:[%s317 + $0x5a0] sm:$0xff]
                  %410 = vst [vmem:[%s318 + $0x168] sm:$0xff] %v409
                  %v411 = vld [vmem:[%s317 + $0x5c0] sm:$0xff]
                  %412 = vst [vmem:[%s318 + $0x170] sm:$0xff] %v411
                  %v413 = vld [vmem:[%s317 + $0x5e0] sm:$0xff]
                  %414 = vst [vmem:[%s318 + $0x178] sm:$0xff] %v413
                  %v415 = vld [vmem:[%s317 + $0x600] sm:$0xff]
                  %416 = vst [vmem:[%s318 + $0x180] sm:$0xff] %v415
                  %v417 = vld [vmem:[%s317 + $0x620] sm:$0xff]
                  %418 = vst [vmem:[%s318 + $0x188] sm:$0xff] %v417
                  %v419 = vld [vmem:[%s317 + $0x640] sm:$0xff]
                  %420 = vst [vmem:[%s318 + $0x190] sm:$0xff] %v419
                  %v421 = vld [vmem:[%s317 + $0x660] sm:$0xff]
                  %422 = vst [vmem:[%s318 + $0x198] sm:$0xff] %v421
                  %v423 = vld [vmem:[%s317 + $0x680] sm:$0xff]
                  %424 = vst [vmem:[%s318 + $0x1a0] sm:$0xff] %v423
                  %v425 = vld [vmem:[%s317 + $0x6a0] sm:$0xff]
                  %426 = vst [vmem:[%s318 + $0x1a8] sm:$0xff] %v425
                  %v427 = vld [vmem:[%s317 + $0x6c0] sm:$0xff]
                  %428 = vst [vmem:[%s318 + $0x1b0] sm:$0xff] %v427
                  %v429 = vld [vmem:[%s317 + $0x6e0] sm:$0xff]
                  %430 = vst [vmem:[%s318 + $0x1b8] sm:$0xff] %v429
                  %v431 = vld [vmem:[%s317 + $0x700] sm:$0xff]
                  %432 = vst [vmem:[%s318 + $0x1c0] sm:$0xff] %v431
                  %v433 = vld [vmem:[%s317 + $0x720] sm:$0xff]
                  %434 = vst [vmem:[%s318 + $0x1c8] sm:$0xff] %v433
                  %v435 = vld [vmem:[%s317 + $0x740] sm:$0xff]
                  %436 = vst [vmem:[%s318 + $0x1d0] sm:$0xff] %v435
                  %v437 = vld [vmem:[%s317 + $0x760] sm:$0xff]
                  %438 = vst [vmem:[%s318 + $0x1d8] sm:$0xff] %v437
                  %v439 = vld [vmem:[%s317 + $0x780] sm:$0xff]
                  %440 = vst [vmem:[%s318 + $0x1e0] sm:$0xff] %v439
                  %v441 = vld [vmem:[%s317 + $0x7a0] sm:$0xff]
                  %442 = vst [vmem:[%s318 + $0x1e8] sm:$0xff] %v441
                  %v443 = vld [vmem:[%s317 + $0x7c0] sm:$0xff]
                  %444 = vst [vmem:[%s318 + $0x1f0] sm:$0xff] %v443
                  %v445 = vld [vmem:[%s317 + $0x7e0] sm:$0xff]
                  %446 = vst [vmem:[%s318 + $0x1f8] sm:$0xff] %v445
                $region52: #{decoder_forward.8} parent=46 // loop_footer
                  %s316 = sadd.s32 1, %s312
                $region53: #{decoder_forward.8} parent=46 // loop_footer_branch
                  %311 = sbr.rel target = $region49
                $region54: #{decoder_forward.8} parent=46 // loop_exit
                  _
              $region47: #{decoder_forward.8} parent=31 // pred_fallthru
                _
              // Predicated region
              $region55: #{decoder_forward.8} parent=31 // pred_check
                _
              $region56: #{decoder_forward.8} parent=31 // pred_check_branch
                %448 = sbr.rel target = $region58
              $region57: #{decoder_forward.8} parent=31 // pred_region
                _
              $region58: #{decoder_forward.8} parent=31 // pred_fallthru
                _
            $region32: #{decoder_forward.8} parent=27 // pred_fallthru
              _
            // Predicated region
            $region33: #{decoder_forward.8} parent=27 // pred_check
              _
            $region34: #{decoder_forward.8} parent=27 // pred_check_branch
              %171 = sbr.rel target = $region36
            $region35: #{decoder_forward.8} parent=27 // pred_region
              loop: start=0, step=1, limit=1
              $region37: #{decoder_forward.8} parent=35 // loop_pre_header
                _
              $region38: #{decoder_forward.8} parent=35 // loop_header
                %s174 = sphi 0, %s178
                %p175 = scmp.ge.s32.totalorder %s174, 1
                %s179 = sphi %s165, %s165
                %s180 = sphi %s162, %s162
              $region39: #{decoder_forward.8} parent=35 // loop_header_branch
                %177 = sbr.rel (%p175) target = $region43
              $region40: #{decoder_forward.8} parent=35 // loop_body
                %v181 = vld [vmem:[%s179] sm:$0xff]
                %182 = vst [vmem:[%s180] sm:$0xff] %v181
                %v183 = vld [vmem:[%s179 + $0x20] sm:$0xff]
                %184 = vst [vmem:[%s180 + $0x8] sm:$0xff] %v183
                %v185 = vld [vmem:[%s179 + $0x40] sm:$0xff]
                %186 = vst [vmem:[%s180 + $0x10] sm:$0xff] %v185
                %v187 = vld [vmem:[%s179 + $0x60] sm:$0xff]
                %188 = vst [vmem:[%s180 + $0x18] sm:$0xff] %v187
                %v189 = vld [vmem:[%s179 + $0x80] sm:$0xff]
                %190 = vst [vmem:[%s180 + $0x20] sm:$0xff] %v189
                %v191 = vld [vmem:[%s179 + $0xa0] sm:$0xff]
                %192 = vst [vmem:[%s180 + $0x28] sm:$0xff] %v191
                %v193 = vld [vmem:[%s179 + $0xc0] sm:$0xff]
                %194 = vst [vmem:[%s180 + $0x30] sm:$0xff] %v193
                %v195 = vld [vmem:[%s179 + $0xe0] sm:$0xff]
                %196 = vst [vmem:[%s180 + $0x38] sm:$0xff] %v195
                %v197 = vld [vmem:[%s179 + $0x100] sm:$0xff]
                %198 = vst [vmem:[%s180 + $0x40] sm:$0xff] %v197
                %v199 = vld [vmem:[%s179 + $0x120] sm:$0xff]
                %200 = vst [vmem:[%s180 + $0x48] sm:$0xff] %v199
                %v201 = vld [vmem:[%s179 + $0x140] sm:$0xff]
                %202 = vst [vmem:[%s180 + $0x50] sm:$0xff] %v201
                %v203 = vld [vmem:[%s179 + $0x160] sm:$0xff]
                %204 = vst [vmem:[%s180 + $0x58] sm:$0xff] %v203
                %v205 = vld [vmem:[%s179 + $0x180] sm:$0xff]
                %206 = vst [vmem:[%s180 + $0x60] sm:$0xff] %v205
                %v207 = vld [vmem:[%s179 + $0x1a0] sm:$0xff]
                %208 = vst [vmem:[%s180 + $0x68] sm:$0xff] %v207
                %v209 = vld [vmem:[%s179 + $0x1c0] sm:$0xff]
                %210 = vst [vmem:[%s180 + $0x70] sm:$0xff] %v209
                %v211 = vld [vmem:[%s179 + $0x1e0] sm:$0xff]
                %212 = vst [vmem:[%s180 + $0x78] sm:$0xff] %v211
                %v213 = vld [vmem:[%s179 + $0x200] sm:$0xff]
                %214 = vst [vmem:[%s180 + $0x80] sm:$0xff] %v213
                %v215 = vld [vmem:[%s179 + $0x220] sm:$0xff]
                %216 = vst [vmem:[%s180 + $0x88] sm:$0xff] %v215
                %v217 = vld [vmem:[%s179 + $0x240] sm:$0xff]
                %218 = vst [vmem:[%s180 + $0x90] sm:$0xff] %v217
                %v219 = vld [vmem:[%s179 + $0x260] sm:$0xff]
                %220 = vst [vmem:[%s180 + $0x98] sm:$0xff] %v219
                %v221 = vld [vmem:[%s179 + $0x280] sm:$0xff]
                %222 = vst [vmem:[%s180 + $0xa0] sm:$0xff] %v221
                %v223 = vld [vmem:[%s179 + $0x2a0] sm:$0xff]
                %224 = vst [vmem:[%s180 + $0xa8] sm:$0xff] %v223
                %v225 = vld [vmem:[%s179 + $0x2c0] sm:$0xff]
                %226 = vst [vmem:[%s180 + $0xb0] sm:$0xff] %v225
                %v227 = vld [vmem:[%s179 + $0x2e0] sm:$0xff]
                %228 = vst [vmem:[%s180 + $0xb8] sm:$0xff] %v227
                %v229 = vld [vmem:[%s179 + $0x300] sm:$0xff]
                %230 = vst [vmem:[%s180 + $0xc0] sm:$0xff] %v229
                %v231 = vld [vmem:[%s179 + $0x320] sm:$0xff]
                %232 = vst [vmem:[%s180 + $0xc8] sm:$0xff] %v231
                %v233 = vld [vmem:[%s179 + $0x340] sm:$0xff]
                %234 = vst [vmem:[%s180 + $0xd0] sm:$0xff] %v233
                %v235 = vld [vmem:[%s179 + $0x360] sm:$0xff]
                %236 = vst [vmem:[%s180 + $0xd8] sm:$0xff] %v235
                %v237 = vld [vmem:[%s179 + $0x380] sm:$0xff]
                %238 = vst [vmem:[%s180 + $0xe0] sm:$0xff] %v237
                %v239 = vld [vmem:[%s179 + $0x3a0] sm:$0xff]
                %240 = vst [vmem:[%s180 + $0xe8] sm:$0xff] %v239
                %v241 = vld [vmem:[%s179 + $0x3c0] sm:$0xff]
                %242 = vst [vmem:[%s180 + $0xf0] sm:$0xff] %v241
                %v243 = vld [vmem:[%s179 + $0x3e0] sm:$0xff]
                %244 = vst [vmem:[%s180 + $0xf8] sm:$0xff] %v243
                %v245 = vld [vmem:[%s179 + $0x400] sm:$0xff]
                %246 = vst [vmem:[%s180 + $0x100] sm:$0xff] %v245
                %v247 = vld [vmem:[%s179 + $0x420] sm:$0xff]
                %248 = vst [vmem:[%s180 + $0x108] sm:$0xff] %v247
                %v249 = vld [vmem:[%s179 + $0x440] sm:$0xff]
                %250 = vst [vmem:[%s180 + $0x110] sm:$0xff] %v249
                %v251 = vld [vmem:[%s179 + $0x460] sm:$0xff]
                %252 = vst [vmem:[%s180 + $0x118] sm:$0xff] %v251
                %v253 = vld [vmem:[%s179 + $0x480] sm:$0xff]
                %254 = vst [vmem:[%s180 + $0x120] sm:$0xff] %v253
                %v255 = vld [vmem:[%s179 + $0x4a0] sm:$0xff]
                %256 = vst [vmem:[%s180 + $0x128] sm:$0xff] %v255
                %v257 = vld [vmem:[%s179 + $0x4c0] sm:$0xff]
                %258 = vst [vmem:[%s180 + $0x130] sm:$0xff] %v257
                %v259 = vld [vmem:[%s179 + $0x4e0] sm:$0xff]
                %260 = vst [vmem:[%s180 + $0x138] sm:$0xff] %v259
                %v261 = vld [vmem:[%s179 + $0x500] sm:$0xff]
                %262 = vst [vmem:[%s180 + $0x140] sm:$0xff] %v261
                %v263 = vld [vmem:[%s179 + $0x520] sm:$0xff]
                %264 = vst [vmem:[%s180 + $0x148] sm:$0xff] %v263
                %v265 = vld [vmem:[%s179 + $0x540] sm:$0xff]
                %266 = vst [vmem:[%s180 + $0x150] sm:$0xff] %v265
                %v267 = vld [vmem:[%s179 + $0x560] sm:$0xff]
                %268 = vst [vmem:[%s180 + $0x158] sm:$0xff] %v267
                %v269 = vld [vmem:[%s179 + $0x580] sm:$0xff]
                %270 = vst [vmem:[%s180 + $0x160] sm:$0xff] %v269
                %v271 = vld [vmem:[%s179 + $0x5a0] sm:$0xff]
                %272 = vst [vmem:[%s180 + $0x168] sm:$0xff] %v271
                %v273 = vld [vmem:[%s179 + $0x5c0] sm:$0xff]
                %274 = vst [vmem:[%s180 + $0x170] sm:$0xff] %v273
                %v275 = vld [vmem:[%s179 + $0x5e0] sm:$0xff]
                %276 = vst [vmem:[%s180 + $0x178] sm:$0xff] %v275
                %v277 = vld [vmem:[%s179 + $0x600] sm:$0xff]
                %278 = vst [vmem:[%s180 + $0x180] sm:$0xff] %v277
                %v279 = vld [vmem:[%s179 + $0x620] sm:$0xff]
                %280 = vst [vmem:[%s180 + $0x188] sm:$0xff] %v279
                %v281 = vld [vmem:[%s179 + $0x640] sm:$0xff]
                %282 = vst [vmem:[%s180 + $0x190] sm:$0xff] %v281
                %v283 = vld [vmem:[%s179 + $0x660] sm:$0xff]
                %284 = vst [vmem:[%s180 + $0x198] sm:$0xff] %v283
                %v285 = vld [vmem:[%s179 + $0x680] sm:$0xff]
                %286 = vst [vmem:[%s180 + $0x1a0] sm:$0xff] %v285
                %v287 = vld [vmem:[%s179 + $0x6a0] sm:$0xff]
                %288 = vst [vmem:[%s180 + $0x1a8] sm:$0xff] %v287
                %v289 = vld [vmem:[%s179 + $0x6c0] sm:$0xff]
                %290 = vst [vmem:[%s180 + $0x1b0] sm:$0xff] %v289
                %v291 = vld [vmem:[%s179 + $0x6e0] sm:$0xff]
                %292 = vst [vmem:[%s180 + $0x1b8] sm:$0xff] %v291
                %v293 = vld [vmem:[%s179 + $0x700] sm:$0xff]
                %294 = vst [vmem:[%s180 + $0x1c0] sm:$0xff] %v293
                %v295 = vld [vmem:[%s179 + $0x720] sm:$0xff]
                %296 = vst [vmem:[%s180 + $0x1c8] sm:$0xff] %v295
                %v297 = vld [vmem:[%s179 + $0x740] sm:$0xff]
                %298 = vst [vmem:[%s180 + $0x1d0] sm:$0xff] %v297
                %v299 = vld [vmem:[%s179 + $0x760] sm:$0xff]
                %300 = vst [vmem:[%s180 + $0x1d8] sm:$0xff] %v299
                %v301 = vld [vmem:[%s179 + $0x780] sm:$0xff]
                %302 = vst [vmem:[%s180 + $0x1e0] sm:$0xff] %v301
                %v303 = vld [vmem:[%s179 + $0x7a0] sm:$0xff]
                %304 = vst [vmem:[%s180 + $0x1e8] sm:$0xff] %v303
                %v305 = vld [vmem:[%s179 + $0x7c0] sm:$0xff]
                %306 = vst [vmem:[%s180 + $0x1f0] sm:$0xff] %v305
                %v307 = vld [vmem:[%s179 + $0x7e0] sm:$0xff]
                %308 = vst [vmem:[%s180 + $0x1f8] sm:$0xff] %v307
              $region41: #{decoder_forward.8} parent=35 // loop_footer
                %s178 = sadd.s32 1, %s174
              $region42: #{decoder_forward.8} parent=35 // loop_footer_branch
                %173 = sbr.rel target = $region38
              $region43: #{decoder_forward.8} parent=35 // loop_exit
                _
            $region36: #{decoder_forward.8} parent=27 // pred_fallthru
              _
          $region28: #{decoder_forward.8} parent=23 // pred_fallthru
            _
          %449 = vnop
        $region24: #{decoder_forward.8} parent=19 // pred_fallthru
          _
        // Predicated region
        $region59: #{decoder_forward.8} parent=19 // pred_check
          %p450 = pneg %p93
        $region60: #{decoder_forward.8} parent=19 // pred_check_branch
          %452 = sbr.rel (%p450) target = $region62
        $region61: #{decoder_forward.8} parent=19 // pred_region
          %s453 = smul.u32 2, %s17
          %p454 = scmp.lt.s32.totalorder %s453, 7
          %s455 = scalar_select %p454, %s453, 7
          %s456 = scalar_lea.vmem %s2, %s455
          %s457 = smul.u32 2, %s17
        $region62: #{decoder_forward.8} parent=19 // pred_fallthru
          _
      $region20: #{decoder_forward.8} parent=5 // pred_fallthru
        _
      %p458 = scmp.le.s32.totalorder 1, %s9
      %p459 = scmp.lt.s32.totalorder %s9, 5
      %p460 = pnand %p458, %p459
      %p461 = pneg %p460
      // Predicated region
      $region63: #{decoder_forward.8} parent=5 // pred_check
        _
      $region64: #{decoder_forward.8} parent=5 // pred_check_branch
        %463 = sbr.rel (%p460) target = $region66
      $region65: #{decoder_forward.8} parent=5 // pred_region
        %s464 = ssub.s32 %s9, 1
        %s465 = sand.u32 %s60, 1
        %s466 = sand.u32 %s60, 1
        %s467 = smul.addr %s466, 512
        %s468 = scalar_lea.vmem [#allocation2], %s467
        // Predicated region
        $region67: #{decoder_forward.8} parent=65 // pred_check
          %p469 = pneg %p73
        $region68: #{decoder_forward.8} parent=65 // pred_check_branch
          %471 = sbr.rel (%p469) target = $region70
        $region69: #{decoder_forward.8} parent=65 // pred_region
          _
        $region70: #{decoder_forward.8} parent=65 // pred_fallthru
          _
        %s472 = smul.u32 4, %s18
        %p473 = scmp.lt.s32.totalorder %s472, 3
        %s474 = scalar_select %p473, %s472, 3
        %s475 = smul.addr %s474, 4
        %s476 = smul.addr %s475, 4
        %s477 = scalar_lea.vmem %s0, %s476
        %p478 = pneg %p47
        %p479 = pneg %p44
        %s480 = sand.u32 %s60, 1
        %s481 = sand.u32 %s60, 1
        %s482 = smul.addr %s481, 512
        %s483 = scalar_lea.vmem [#allocation2], %s482
        %p484 = pneg %p73
        %p485 = pneg %p70
        %s486 = smul.u32 2, %s19
        %p487 = scmp.lt.s32.totalorder %s486, 7
        %s488 = scalar_select %p487, %s486, 7
        %s489 = scalar_lea.vmem %s2, %s488
        %p490 = pneg %p99
        %p491 = pneg %p96
        %p492 = pneg %p127
        %p493 = pneg %p124
        %s494 = sand.u32 %s114, 1
        %s495 = sand.u32 %s114, 1
        %s496 = smul.addr %s495, 32
        %s497 = scalar_lea.vmem [#allocation3], %s496
        %s498 = smul.u32 4, %s18
        %p499 = scmp.lt.s32.totalorder %s498, 3
        %s500 = scalar_select %p499, %s498, 3
        %s501 = smul.addr %s500, 4
        %s502 = smul.addr %s501, 4
        %s503 = scalar_lea.vmem %s0, %s502
        %s504 = smul.u32 4, %s18
        %s505 = smul.u32 2, %s19
        %s506 = smul.u32 2, %s19
        %p507 = scmp.lt.s32.totalorder %s506, 7
        %s508 = scalar_select %p507, %s506, 7
        %s509 = scalar_lea.vmem %s2, %s508
        %s510 = smul.u32 2, %s19
        %s511 = smul.u32 4, %s18
        %s512 = smul.u32 2, %s19
        %v513 = vld [vmem:[%s503] sm:$0xff]
        %v514 = vld [vmem:[%s503 + $0x8] sm:$0xff]
        %v515 = vld [vmem:[%s503 + $0x10] sm:$0xff]
        %v516 = vld [vmem:[%s503 + $0x18] sm:$0xff]
        %v517 = vld [vmem:[%s503 + $0x20] sm:$0xff]
        %v518 = vld [vmem:[%s503 + $0x28] sm:$0xff]
        %v519 = vld [vmem:[%s503 + $0x30] sm:$0xff]
        %v520 = vld [vmem:[%s503 + $0x38] sm:$0xff]
        %v521 = vld [vmem:[%s468] sm:$0xff]
        %v522 = vld [vmem:[%s468 + $0x8] sm:$0xff]
        %v523 = vld [vmem:[%s468 + $0x10] sm:$0xff]
        %v524 = vld [vmem:[%s468 + $0x18] sm:$0xff]
        %v525 = vld [vmem:[%s468 + $0x20] sm:$0xff]
        %v526 = vld [vmem:[%s468 + $0x28] sm:$0xff]
        %v527 = vld [vmem:[%s468 + $0x30] sm:$0xff]
        %v528 = vld [vmem:[%s468 + $0x38] sm:$0xff]
        %v529 = vld [vmem:[%s468 + $0x40] sm:$0xff]
        %v530 = vld [vmem:[%s468 + $0x48] sm:$0xff]
        %v531 = vld [vmem:[%s468 + $0x50] sm:$0xff]
        %v532 = vld [vmem:[%s468 + $0x58] sm:$0xff]
        %v533 = vld [vmem:[%s468 + $0x60] sm:$0xff]
        %v534 = vld [vmem:[%s468 + $0x68] sm:$0xff]
        %v535 = vld [vmem:[%s468 + $0x70] sm:$0xff]
        %v536 = vld [vmem:[%s468 + $0x78] sm:$0xff]
        %v537 = vld [vmem:[%s468 + $0x80] sm:$0xff]
        %v538 = vld [vmem:[%s468 + $0x88] sm:$0xff]
        %v539 = vld [vmem:[%s468 + $0x90] sm:$0xff]
        %v540 = vld [vmem:[%s468 + $0x98] sm:$0xff]
        %v541 = vld [vmem:[%s468 + $0xa0] sm:$0xff]
        %v542 = vld [vmem:[%s468 + $0xa8] sm:$0xff]
        %v543 = vld [vmem:[%s468 + $0xb0] sm:$0xff]
        %v544 = vld [vmem:[%s468 + $0xb8] sm:$0xff]
        %v545 = vld [vmem:[%s468 + $0xc0] sm:$0xff]
        %v546 = vld [vmem:[%s468 + $0xc8] sm:$0xff]
        %v547 = vld [vmem:[%s468 + $0xd0] sm:$0xff]
        %v548 = vld [vmem:[%s468 + $0xd8] sm:$0xff]
        %v549 = vld [vmem:[%s468 + $0xe0] sm:$0xff]
        %v550 = vld [vmem:[%s468 + $0xe8] sm:$0xff]
        %v551 = vld [vmem:[%s468 + $0xf0] sm:$0xff]
        %v552 = vld [vmem:[%s468 + $0xf8] sm:$0xff]
        %v553 = vld [vmem:[%s468 + $0x100] sm:$0xff]
        %v554 = vld [vmem:[%s468 + $0x108] sm:$0xff]
        %v555 = vld [vmem:[%s468 + $0x110] sm:$0xff]
        %v556 = vld [vmem:[%s468 + $0x118] sm:$0xff]
        %v557 = vld [vmem:[%s468 + $0x120] sm:$0xff]
        %v558 = vld [vmem:[%s468 + $0x128] sm:$0xff]
        %v559 = vld [vmem:[%s468 + $0x130] sm:$0xff]
        %v560 = vld [vmem:[%s468 + $0x138] sm:$0xff]
        %v561 = vld [vmem:[%s468 + $0x140] sm:$0xff]
        %v562 = vld [vmem:[%s468 + $0x148] sm:$0xff]
        %v563 = vld [vmem:[%s468 + $0x150] sm:$0xff]
        %v564 = vld [vmem:[%s468 + $0x158] sm:$0xff]
        %v565 = vld [vmem:[%s468 + $0x160] sm:$0xff]
        %v566 = vld [vmem:[%s468 + $0x168] sm:$0xff]
        %v567 = vld [vmem:[%s468 + $0x170] sm:$0xff]
        %v568 = vld [vmem:[%s468 + $0x178] sm:$0xff]
        %v569 = vld [vmem:[%s468 + $0x180] sm:$0xff]
        %v570 = vld [vmem:[%s468 + $0x188] sm:$0xff]
        %v571 = vld [vmem:[%s468 + $0x190] sm:$0xff]
        %v572 = vld [vmem:[%s468 + $0x198] sm:$0xff]
        %v573 = vld [vmem:[%s468 + $0x1a0] sm:$0xff]
        %v574 = vld [vmem:[%s468 + $0x1a8] sm:$0xff]
        %v575 = vld [vmem:[%s468 + $0x1b0] sm:$0xff]
        %v576 = vld [vmem:[%s468 + $0x1b8] sm:$0xff]
        %v577 = vld [vmem:[%s468 + $0x1c0] sm:$0xff]
        %v578 = vld [vmem:[%s468 + $0x1c8] sm:$0xff]
        %v579 = vld [vmem:[%s468 + $0x1d0] sm:$0xff]
        %v580 = vld [vmem:[%s468 + $0x1d8] sm:$0xff]
        %v581 = vld [vmem:[%s468 + $0x1e0] sm:$0xff]
        %v582 = vld [vmem:[%s468 + $0x1e8] sm:$0xff]
        %v583 = vld [vmem:[%s468 + $0x1f0] sm:$0xff]
        %v584 = vld [vmem:[%s468 + $0x1f8] sm:$0xff]
        %v585 = vld [vmem:[%s509] sm:$0x3]
        %v587 = vlaneseq
        %v588 = vshrl.u32 %v587, 7
        %v589 = vsub.s32 0, %v588
        %v590 = vrot.slane %v585, %v589
        %v591 = vlaneseq
        %v592 = vshrl.u32 %v591, 7
        %v593 = vsub.s32 1, %v592
        %v594 = vrot.slane %v585, %v593
        %v605 = vunpack.c.l.b16 %v513
        %v606 = vunpack.c.h.b16 %v513
        %v607 = vunpack.c.l.b16 %v514
        %v608 = vunpack.c.h.b16 %v514
        %v609 = vunpack.c.l.b16 %v515
        %v610 = vunpack.c.h.b16 %v515
        %v611 = vunpack.c.l.b16 %v516
        %v612 = vunpack.c.h.b16 %v516
        %v613 = vunpack.c.l.b16 %v517
        %v614 = vunpack.c.h.b16 %v517
        %v615 = vunpack.c.l.b16 %v518
        %v616 = vunpack.c.h.b16 %v518
        %v617 = vunpack.c.l.b16 %v519
        %v618 = vunpack.c.h.b16 %v519
        %v619 = vunpack.c.l.b16 %v520
        %v620 = vunpack.c.h.b16 %v520
        %v621 = vpack.c.b16 %v609, %v605
        %v622 = vpack.c.b16 %v610, %v606
        %v623 = vpack.c.b16 %v611, %v607
        %v624 = vpack.c.b16 %v612, %v608
        %v625 = vpack.c.b16 %v617, %v613
        %v626 = vpack.c.b16 %v618, %v614
        %v627 = vpack.c.b16 %v619, %v615
        %v628 = vpack.c.b16 %v620, %v616
        %v701 = vunpack.c.l.b16 %v521
        %v702 = vunpack.c.h.b16 %v521
        %v703 = vunpack.c.l.b16 %v522
        %v704 = vunpack.c.h.b16 %v522
        %v705 = vunpack.c.l.b16 %v523
        %v706 = vunpack.c.h.b16 %v523
        %v707 = vunpack.c.l.b16 %v524
        %v708 = vunpack.c.h.b16 %v524
        %v709 = vunpack.c.l.b16 %v525
        %v710 = vunpack.c.h.b16 %v525
        %v711 = vunpack.c.l.b16 %v526
        %v712 = vunpack.c.h.b16 %v526
        %v713 = vunpack.c.l.b16 %v527
        %v714 = vunpack.c.h.b16 %v527
        %v715 = vunpack.c.l.b16 %v528
        %v716 = vunpack.c.h.b16 %v528
        %v717 = vunpack.c.l.b16 %v529
        %v718 = vunpack.c.h.b16 %v529
        %v719 = vunpack.c.l.b16 %v530
        %v720 = vunpack.c.h.b16 %v530
        %v721 = vunpack.c.l.b16 %v531
        %v722 = vunpack.c.h.b16 %v531
        %v723 = vunpack.c.l.b16 %v532
        %v724 = vunpack.c.h.b16 %v532
        %v725 = vunpack.c.l.b16 %v533
        %v726 = vunpack.c.h.b16 %v533
        %v727 = vunpack.c.l.b16 %v534
        %v728 = vunpack.c.h.b16 %v534
        %v729 = vunpack.c.l.b16 %v535
        %v730 = vunpack.c.h.b16 %v535
        %v731 = vunpack.c.l.b16 %v536
        %v732 = vunpack.c.h.b16 %v536
        %v733 = vunpack.c.l.b16 %v537
        %v734 = vunpack.c.h.b16 %v537
        %v735 = vunpack.c.l.b16 %v538
        %v736 = vunpack.c.h.b16 %v538
        %v737 = vunpack.c.l.b16 %v539
        %v738 = vunpack.c.h.b16 %v539
        %v739 = vunpack.c.l.b16 %v540
        %v740 = vunpack.c.h.b16 %v540
        %v741 = vunpack.c.l.b16 %v541
        %v742 = vunpack.c.h.b16 %v541
        %v743 = vunpack.c.l.b16 %v542
        %v744 = vunpack.c.h.b16 %v542
        %v745 = vunpack.c.l.b16 %v543
        %v746 = vunpack.c.h.b16 %v543
        %v747 = vunpack.c.l.b16 %v544
        %v748 = vunpack.c.h.b16 %v544
        %v749 = vunpack.c.l.b16 %v545
        %v750 = vunpack.c.h.b16 %v545
        %v751 = vunpack.c.l.b16 %v546
        %v752 = vunpack.c.h.b16 %v546
        %v753 = vunpack.c.l.b16 %v547
        %v754 = vunpack.c.h.b16 %v547
        %v755 = vunpack.c.l.b16 %v548
        %v756 = vunpack.c.h.b16 %v548
        %v757 = vunpack.c.l.b16 %v549
        %v758 = vunpack.c.h.b16 %v549
        %v759 = vunpack.c.l.b16 %v550
        %v760 = vunpack.c.h.b16 %v550
        %v761 = vunpack.c.l.b16 %v551
        %v762 = vunpack.c.h.b16 %v551
        %v763 = vunpack.c.l.b16 %v552
        %v764 = vunpack.c.h.b16 %v552
        %v765 = vunpack.c.l.b16 %v553
        %v766 = vunpack.c.h.b16 %v553
        %v767 = vunpack.c.l.b16 %v554
        %v768 = vunpack.c.h.b16 %v554
        %v769 = vunpack.c.l.b16 %v555
        %v770 = vunpack.c.h.b16 %v555
        %v771 = vunpack.c.l.b16 %v556
        %v772 = vunpack.c.h.b16 %v556
        %v773 = vunpack.c.l.b16 %v557
        %v774 = vunpack.c.h.b16 %v557
        %v775 = vunpack.c.l.b16 %v558
        %v776 = vunpack.c.h.b16 %v558
        %v777 = vunpack.c.l.b16 %v559
        %v778 = vunpack.c.h.b16 %v559
        %v779 = vunpack.c.l.b16 %v560
        %v780 = vunpack.c.h.b16 %v560
        %v781 = vunpack.c.l.b16 %v561
        %v782 = vunpack.c.h.b16 %v561
        %v783 = vunpack.c.l.b16 %v562
        %v784 = vunpack.c.h.b16 %v562
        %v785 = vunpack.c.l.b16 %v563
        %v786 = vunpack.c.h.b16 %v563
        %v787 = vunpack.c.l.b16 %v564
        %v788 = vunpack.c.h.b16 %v564
        %v789 = vunpack.c.l.b16 %v565
        %v790 = vunpack.c.h.b16 %v565
        %v791 = vunpack.c.l.b16 %v566
        %v792 = vunpack.c.h.b16 %v566
        %v793 = vunpack.c.l.b16 %v567
        %v794 = vunpack.c.h.b16 %v567
        %v795 = vunpack.c.l.b16 %v568
        %v796 = vunpack.c.h.b16 %v568
        %v797 = vunpack.c.l.b16 %v569
        %v798 = vunpack.c.h.b16 %v569
        %v799 = vunpack.c.l.b16 %v570
        %v800 = vunpack.c.h.b16 %v570
        %v801 = vunpack.c.l.b16 %v571
        %v802 = vunpack.c.h.b16 %v571
        %v803 = vunpack.c.l.b16 %v572
        %v804 = vunpack.c.h.b16 %v572
        %v805 = vunpack.c.l.b16 %v573
        %v806 = vunpack.c.h.b16 %v573
        %v807 = vunpack.c.l.b16 %v574
        %v808 = vunpack.c.h.b16 %v574
        %v809 = vunpack.c.l.b16 %v575
        %v810 = vunpack.c.h.b16 %v575
        %v811 = vunpack.c.l.b16 %v576
        %v812 = vunpack.c.h.b16 %v576
        %v813 = vunpack.c.l.b16 %v577
        %v814 = vunpack.c.h.b16 %v577
        %v815 = vunpack.c.l.b16 %v578
        %v816 = vunpack.c.h.b16 %v578
        %v817 = vunpack.c.l.b16 %v579
        %v818 = vunpack.c.h.b16 %v579
        %v819 = vunpack.c.l.b16 %v580
        %v820 = vunpack.c.h.b16 %v580
        %v821 = vunpack.c.l.b16 %v581
        %v822 = vunpack.c.h.b16 %v581
        %v823 = vunpack.c.l.b16 %v582
        %v824 = vunpack.c.h.b16 %v582
        %v825 = vunpack.c.l.b16 %v583
        %v826 = vunpack.c.h.b16 %v583
        %v827 = vunpack.c.l.b16 %v584
        %v828 = vunpack.c.h.b16 %v584
        %v829 = vpack.c.b16 %v703, %v701
        %v830 = vpack.c.b16 %v704, %v702
        %v831 = vpack.c.b16 %v707, %v705
        %v832 = vpack.c.b16 %v708, %v706
        %v833 = vpack.c.b16 %v711, %v709
        %v834 = vpack.c.b16 %v712, %v710
        %v835 = vpack.c.b16 %v715, %v713
        %v836 = vpack.c.b16 %v716, %v714
        %v837 = vpack.c.b16 %v719, %v717
        %v838 = vpack.c.b16 %v720, %v718
        %v839 = vpack.c.b16 %v723, %v721
        %v840 = vpack.c.b16 %v724, %v722
        %v841 = vpack.c.b16 %v727, %v725
        %v842 = vpack.c.b16 %v728, %v726
        %v843 = vpack.c.b16 %v731, %v729
        %v844 = vpack.c.b16 %v732, %v730
        %v845 = vpack.c.b16 %v735, %v733
        %v846 = vpack.c.b16 %v736, %v734
        %v847 = vpack.c.b16 %v739, %v737
        %v848 = vpack.c.b16 %v740, %v738
        %v849 = vpack.c.b16 %v743, %v741
        %v850 = vpack.c.b16 %v744, %v742
        %v851 = vpack.c.b16 %v747, %v745
        %v852 = vpack.c.b16 %v748, %v746
        %v853 = vpack.c.b16 %v751, %v749
        %v854 = vpack.c.b16 %v752, %v750
        %v855 = vpack.c.b16 %v755, %v753
        %v856 = vpack.c.b16 %v756, %v754
        %v857 = vpack.c.b16 %v759, %v757
        %v858 = vpack.c.b16 %v760, %v758
        %v859 = vpack.c.b16 %v763, %v761
        %v860 = vpack.c.b16 %v764, %v762
        %v861 = vpack.c.b16 %v767, %v765
        %v862 = vpack.c.b16 %v768, %v766
        %v863 = vpack.c.b16 %v771, %v769
        %v864 = vpack.c.b16 %v772, %v770
        %v865 = vpack.c.b16 %v775, %v773
        %v866 = vpack.c.b16 %v776, %v774
        %v867 = vpack.c.b16 %v779, %v777
        %v868 = vpack.c.b16 %v780, %v778
        %v869 = vpack.c.b16 %v783, %v781
        %v870 = vpack.c.b16 %v784, %v782
        %v871 = vpack.c.b16 %v787, %v785
        %v872 = vpack.c.b16 %v788, %v786
        %v873 = vpack.c.b16 %v791, %v789
        %v874 = vpack.c.b16 %v792, %v790
        %v875 = vpack.c.b16 %v795, %v793
        %v876 = vpack.c.b16 %v796, %v794
        %v877 = vpack.c.b16 %v799, %v797
        %v878 = vpack.c.b16 %v800, %v798
        %v879 = vpack.c.b16 %v803, %v801
        %v880 = vpack.c.b16 %v804, %v802
        %v881 = vpack.c.b16 %v807, %v805
        %v882 = vpack.c.b16 %v808, %v806
        %v883 = vpack.c.b16 %v811, %v809
        %v884 = vpack.c.b16 %v812, %v810
        %v885 = vpack.c.b16 %v815, %v813
        %v886 = vpack.c.b16 %v816, %v814
        %v887 = vpack.c.b16 %v819, %v817
        %v888 = vpack.c.b16 %v820, %v818
        %v889 = vpack.c.b16 %v823, %v821
        %v890 = vpack.c.b16 %v824, %v822
        %v891 = vpack.c.b16 %v827, %v825
        %v892 = vpack.c.b16 %v828, %v826
        %957 = vmatprep.subr.bf16.mxu0 %v830
        %958 = vmatpush1.bf16.msra.mxu0 %v829
        %959 = vmatprep.subr.bf16.mxu0 %v832
        %960 = vmatpush1.bf16.msra.mxu0 %v831
        %961 = vmatprep.subr.bf16.mxu0 %v834
        %962 = vmatpush1.bf16.msra.mxu0 %v833
        %963 = vmatprep.subr.bf16.mxu0 %v836
        %964 = vmatpush1.bf16.msra.mxu0 %v835
        %965 = vmatprep.subr.bf16.mxu0 %v838
        %966 = vmatpush1.bf16.msra.mxu0 %v837
        %967 = vmatprep.subr.bf16.mxu0 %v840
        %968 = vmatpush1.bf16.msra.mxu0 %v839
        %969 = vmatprep.subr.bf16.mxu0 %v842
        %970 = vmatpush1.bf16.msra.mxu0 %v841
        %971 = vmatprep.subr.bf16.mxu0 %v844
        %972 = vmatpush1.bf16.msra.mxu0 %v843
        %973 = vmatprep.subr.bf16.mxu0 %v846
        %974 = vmatpush1.bf16.msra.mxu0 %v845
        %975 = vmatprep.subr.bf16.mxu0 %v848
        %976 = vmatpush1.bf16.msra.mxu0 %v847
        %977 = vmatprep.subr.bf16.mxu0 %v850
        %978 = vmatpush1.bf16.msra.mxu0 %v849
        %979 = vmatprep.subr.bf16.mxu0 %v852
        %980 = vmatpush1.bf16.msra.mxu0 %v851
        %981 = vmatprep.subr.bf16.mxu0 %v854
        %982 = vmatpush1.bf16.msra.mxu0 %v853
        %983 = vmatprep.subr.bf16.mxu0 %v856
        %984 = vmatpush1.bf16.msra.mxu0 %v855
        %985 = vmatprep.subr.bf16.mxu0 %v858
        %986 = vmatpush1.bf16.msra.mxu0 %v857
        %987 = vmatprep.subr.bf16.mxu0 %v860
        %988 = vmatpush1.bf16.msra.mxu0 %v859
        %989 = vmatprep.mubr.bf16.mxu0 %v622
        %990 = vmatmul.mubr.bf16.gmra.mrb[0].mxu0 %v621
        %v991 = vpop.f32.mrb[0].mxu0
        %v992 = vadd.f32 %v590, %v991
        %v993 = vpop.f32.mrb[0].mxu0
        %v994 = vadd.f32 %v594, %v993
        %v995 = vpop.f32.mrb[0].mxu0
        %v996 = vadd.f32 %v590, %v995
        %v997 = vpop.f32.mrb[0].mxu0
        %v998 = vadd.f32 %v594, %v997
        %999 = vmatprep.mubr.bf16.mxu0 %v626
        %1000 = vmatmul.mubr.bf16.gmra.mrb[0].mxu0 %v625
        %v1001 = vpop.f32.mrb[0].mxu0
        %v1002 = vadd.f32 %v590, %v1001
        %v1003 = vpop.f32.mrb[0].mxu0
        %v1004 = vadd.f32 %v594, %v1003
        %v1005 = vpop.f32.mrb[0].mxu0
        %v1006 = vadd.f32 %v590, %v1005
        %v1007 = vpop.f32.mrb[0].mxu0
        %v1008 = vadd.f32 %v594, %v1007
        %1009 = vdwg.mxu0
        %1010 = vmatprep.subr.bf16.mxu0 %v862
        %1011 = vmatpush1.bf16.msra.mxu0 %v861
        %1012 = vmatprep.subr.bf16.mxu0 %v864
        %1013 = vmatpush1.bf16.msra.mxu0 %v863
        %1014 = vmatprep.subr.bf16.mxu0 %v866
        %1015 = vmatpush1.bf16.msra.mxu0 %v865
        %1016 = vmatprep.subr.bf16.mxu0 %v868
        %1017 = vmatpush1.bf16.msra.mxu0 %v867
        %1018 = vmatprep.subr.bf16.mxu0 %v870
        %1019 = vmatpush1.bf16.msra.mxu0 %v869
        %1020 = vmatprep.subr.bf16.mxu0 %v872
        %1021 = vmatpush1.bf16.msra.mxu0 %v871
        %1022 = vmatprep.subr.bf16.mxu0 %v874
        %1023 = vmatpush1.bf16.msra.mxu0 %v873
        %1024 = vmatprep.subr.bf16.mxu0 %v876
        %1025 = vmatpush1.bf16.msra.mxu0 %v875
        %1026 = vmatprep.subr.bf16.mxu0 %v878
        %1027 = vmatpush1.bf16.msra.mxu0 %v877
        %1028 = vmatprep.subr.bf16.mxu0 %v880
        %1029 = vmatpush1.bf16.msra.mxu0 %v879
        %1030 = vmatprep.subr.bf16.mxu0 %v882
        %1031 = vmatpush1.bf16.msra.mxu0 %v881
        %1032 = vmatprep.subr.bf16.mxu0 %v884
        %1033 = vmatpush1.bf16.msra.mxu0 %v883
        %1034 = vmatprep.subr.bf16.mxu0 %v886
        %1035 = vmatpush1.bf16.msra.mxu0 %v885
        %1036 = vmatprep.subr.bf16.mxu0 %v888
        %1037 = vmatpush1.bf16.msra.mxu0 %v887
        %1038 = vmatprep.subr.bf16.mxu0 %v890
        %1039 = vmatpush1.bf16.msra.mxu0 %v889
        %1040 = vmatprep.subr.bf16.mxu0 %v892
        %1041 = vmatpush1.bf16.msra.mxu0 %v891
        %1042 = vmatprep.mubr.bf16.mxu0 %v624
        %1043 = vmatmul.mubr.bf16.gmra.mrb[0].mxu0 %v623
        %v1044 = vpop.f32.mrb[0].mxu0
        %v1045 = vadd.f32 %v992, %v1044
        %v1046 = vpop.f32.mrb[0].mxu0
        %v1047 = vadd.f32 %v994, %v1046
        %v1048 = vpop.f32.mrb[0].mxu0
        %v1049 = vadd.f32 %v996, %v1048
        %v1050 = vpop.f32.mrb[0].mxu0
        %v1051 = vadd.f32 %v998, %v1050
        %1052 = vmatprep.mubr.bf16.mxu0 %v628
        %1053 = vmatmul.mubr.bf16.gmra.mrb[0].mxu0 %v627
        %v1054 = vpop.f32.mrb[0].mxu0
        %v1055 = vadd.f32 %v1002, %v1054
        %v1056 = vpop.f32.mrb[0].mxu0
        %v1057 = vadd.f32 %v1004, %v1056
        %v1058 = vpop.f32.mrb[0].mxu0
        %v1059 = vadd.f32 %v1006, %v1058
        %v1060 = vpop.f32.mrb[0].mxu0
        %v1061 = vadd.f32 %v1008, %v1060
        %1062 = vdwg.mxu0
        %v1063 = vmul.f32 %v1045, 0.2
        %v1064 = vmul.f32 %v1047, 0.2
        %v1065 = vmul.f32 %v1049, 0.2
        %v1066 = vmul.f32 %v1051, 0.2
        %v1067 = vmul.f32 %v1055, 0.2
        %v1068 = vmul.f32 %v1057, 0.2
        %v1069 = vmul.f32 %v1059, 0.2
        %v1070 = vmul.f32 %v1061, 0.2
        %v1071 = vmax.f32 %v1045, %v1063
        %v1072 = vmax.f32 %v1047, %v1064
        %v1073 = vmax.f32 %v1049, %v1065
        %v1074 = vmax.f32 %v1051, %v1066
        %v1075 = vmax.f32 %v1055, %v1067
        %v1076 = vmax.f32 %v1057, %v1068
        %v1077 = vmax.f32 %v1059, %v1069
        %v1078 = vmax.f32 %v1061, %v1070
        %v1079 = vpack.c.bf16 %v1073, %v1071
        %v1080 = vpack.c.bf16 %v1074, %v1072
        %v1081 = vpack.c.bf16 %v1077, %v1075
        %v1082 = vpack.c.bf16 %v1078, %v1076
        %v1087 = vunpack.c.l.b16 %v1079
        %v1088 = vunpack.c.l.b16 %v1080
        %v1089 = vunpack.c.h.b16 %v1079
        %v1090 = vunpack.c.h.b16 %v1080
        %v1091 = vunpack.c.l.b16 %v1081
        %v1092 = vunpack.c.l.b16 %v1082
        %v1093 = vunpack.c.h.b16 %v1081
        %v1094 = vunpack.c.h.b16 %v1082
        %v1095 = vpack.c.b16 %v1088, %v1087
        %v1096 = vpack.c.b16 %v1090, %v1089
        %v1097 = vpack.c.b16 %v1092, %v1091
        %v1098 = vpack.c.b16 %v1094, %v1093
        %1103 = vst [vmem:[%s497] sm:$0xff] %v1095
        %1104 = vst [vmem:[%s497 + $0x8] sm:$0xff] %v1096
        %1105 = vst [vmem:[%s497 + $0x10] sm:$0xff] %v1097
        %1106 = vst [vmem:[%s497 + $0x18] sm:$0xff] %v1098
        %s1107 = sand.u32 %s114, 1
        %s1108 = sand.u32 %s114, 1
        %s1109 = smul.addr %s1108, 32
        %s1110 = scalar_lea.vmem [#allocation3], %s1109
        // Predicated region
        $region71: #{decoder_forward.8} parent=65 // pred_check
          %p1111 = pneg %p124
        $region72: #{decoder_forward.8} parent=65 // pred_check_branch
          %1113 = sbr.rel (%p1111) target = $region74
        $region73: #{decoder_forward.8} parent=65 // pred_region
          %s1114 = smul.u32 4, %s18
          %s1115 = smul.u32 2, %s19
          %s1116 = smul.addr %s1114, 8
          %s1117 = sadd.s32 %s1115, %s1116
          %s1118 = smul.addr %s1117, 4
          %s1119 = scalar_lea.vmem %s3, %s1118
          // Predicated region
          $region75: #{decoder_forward.8} parent=73 // pred_check
            _
          $region76: #{decoder_forward.8} parent=73 // pred_check_branch
            %1121 = sbr.rel (0) target = $region78
          $region77: #{decoder_forward.8} parent=73 // pred_region
            // Predicated region
            $region79: #{decoder_forward.8} parent=77 // pred_check
              _
            $region80: #{decoder_forward.8} parent=77 // pred_check_branch
              %1123 = sbr.rel (0) target = $region82
            $region81: #{decoder_forward.8} parent=77 // pred_region
              // Predicated region
              $region94: #{decoder_forward.8} parent=81 // pred_check
                _
              $region95: #{decoder_forward.8} parent=81 // pred_check_branch
                %1144 = sbr.rel (0) target = $region97
              $region96: #{decoder_forward.8} parent=81 // pred_region
                loop: start=0, step=1, limit=1
                $region98: #{decoder_forward.8} parent=96 // loop_pre_header
                  _
                $region99: #{decoder_forward.8} parent=96 // loop_header
                  %s1146 = sphi 0, %s1150
                  %p1147 = scmp.ge.s32.totalorder %s1146, 1
                  %s1151 = sphi %s1110, %s1110
                  %s1152 = sphi %s1119, %s1119
                $region100: #{decoder_forward.8} parent=96 // loop_header_branch
                  %1149 = sbr.rel (%p1147) target = $region104
                $region101: #{decoder_forward.8} parent=96 // loop_body
                  %v1153 = vld [vmem:[%s1151] sm:$0xff]
                  %1154 = vst [vmem:[%s1152] sm:$0xff] %v1153
                  %v1155 = vld [vmem:[%s1151 + $0x8] sm:$0xff]
                  %1156 = vst [vmem:[%s1152 + $0x20] sm:$0xff] %v1155
                  %v1157 = vld [vmem:[%s1151 + $0x10] sm:$0xff]
                  %1158 = vst [vmem:[%s1152 + $0x40] sm:$0xff] %v1157
                  %v1159 = vld [vmem:[%s1151 + $0x18] sm:$0xff]
                  %1160 = vst [vmem:[%s1152 + $0x60] sm:$0xff] %v1159
                $region102: #{decoder_forward.8} parent=96 // loop_footer
                  %s1150 = sadd.s32 1, %s1146
                $region103: #{decoder_forward.8} parent=96 // loop_footer_branch
                  %1145 = sbr.rel target = $region99
                $region104: #{decoder_forward.8} parent=96 // loop_exit
                  _
              $region97: #{decoder_forward.8} parent=81 // pred_fallthru
                _
              // Predicated region
              $region105: #{decoder_forward.8} parent=81 // pred_check
                _
              $region106: #{decoder_forward.8} parent=81 // pred_check_branch
                %1162 = sbr.rel target = $region108
              $region107: #{decoder_forward.8} parent=81 // pred_region
                _
              $region108: #{decoder_forward.8} parent=81 // pred_fallthru
                _
            $region82: #{decoder_forward.8} parent=77 // pred_fallthru
              _
            // Predicated region
            $region83: #{decoder_forward.8} parent=77 // pred_check
              _
            $region84: #{decoder_forward.8} parent=77 // pred_check_branch
              %1125 = sbr.rel target = $region86
            $region85: #{decoder_forward.8} parent=77 // pred_region
              loop: start=0, step=1, limit=1
              $region87: #{decoder_forward.8} parent=85 // loop_pre_header
                _
              $region88: #{decoder_forward.8} parent=85 // loop_header
                %s1128 = sphi 0, %s1132
                %p1129 = scmp.ge.s32.totalorder %s1128, 1
                %s1133 = sphi %s1110, %s1110
                %s1134 = sphi %s1119, %s1119
              $region89: #{decoder_forward.8} parent=85 // loop_header_branch
                %1131 = sbr.rel (%p1129) target = $region93
              $region90: #{decoder_forward.8} parent=85 // loop_body
                %v1135 = vld [vmem:[%s1133] sm:$0xff]
                %1136 = vst [vmem:[%s1134] sm:$0xff] %v1135
                %v1137 = vld [vmem:[%s1133 + $0x8] sm:$0xff]
                %1138 = vst [vmem:[%s1134 + $0x20] sm:$0xff] %v1137
                %v1139 = vld [vmem:[%s1133 + $0x10] sm:$0xff]
                %1140 = vst [vmem:[%s1134 + $0x40] sm:$0xff] %v1139
                %v1141 = vld [vmem:[%s1133 + $0x18] sm:$0xff]
                %1142 = vst [vmem:[%s1134 + $0x60] sm:$0xff] %v1141
              $region91: #{decoder_forward.8} parent=85 // loop_footer
                %s1132 = sadd.s32 1, %s1128
              $region92: #{decoder_forward.8} parent=85 // loop_footer_branch
                %1127 = sbr.rel target = $region88
              $region93: #{decoder_forward.8} parent=85 // loop_exit
                _
            $region86: #{decoder_forward.8} parent=77 // pred_fallthru
              _
          $region78: #{decoder_forward.8} parent=73 // pred_fallthru
            _
          %1163 = vnop
        $region74: #{decoder_forward.8} parent=65 // pred_fallthru
          _
      $region66: #{decoder_forward.8} parent=5 // pred_fallthru
        _
      %p1164 = scmp.le.s32.totalorder 2, %s9
      // Predicated region
      $region109: #{decoder_forward.8} parent=5 // pred_check
        %p1165 = pneg %p1164
      $region110: #{decoder_forward.8} parent=5 // pred_check_branch
        %1167 = sbr.rel (%p1165) target = $region112
      $region111: #{decoder_forward.8} parent=5 // pred_region
        %s1168 = ssub.s32 %s9, 2
        // Predicated region
        $region113: #{decoder_forward.8} parent=111 // pred_check
          %p1169 = pneg %p130
        $region114: #{decoder_forward.8} parent=111 // pred_check_branch
          %1171 = sbr.rel (%p1169) target = $region116
        $region115: #{decoder_forward.8} parent=111 // pred_region
          %s1172 = sand.u32 %s115, 1
          %s1173 = sand.u32 %s115, 1
          %s1174 = smul.addr %s1173, 32
          %s1175 = scalar_lea.vmem [#allocation3], %s1174
        $region116: #{decoder_forward.8} parent=111 // pred_fallthru
          _
      $region112: #{decoder_forward.8} parent=5 // pred_fallthru
        _
    $region6: #{decoder_forward.8} parent=1 // loop_footer
      %s13 = sadd.s32 1, %s9
    $region7: #{decoder_forward.8} parent=1 // loop_footer_branch
      %8 = sbr.rel target = $region3
    $region8: #{decoder_forward.8} parent=1 // loop_exit
      _

// kernel: decoder_forward.9
$region0: #{decoder_forward.9}
  #allocation0 [shape = 'u32[]', space=smem, size = 0x4, offset = 0x4, fixed_abs, tag = 'smem constant byte address 0x4 - core index']
  #allocation1 [shape = 'u32[144,128]{1,0:T(1,128)}', space=vmem, size = 0x12000, scoped, tag = 'internal scratch']
  %s0 = inlined_call_operand.vmem [shape: bf16[128,256], index: 0, kind: input, shape index: {}]
  %s1 = inlined_call_operand.vmem [shape: bf16[256,512], index: 1, kind: input, shape index: {}]
  %s2 = inlined_call_operand.vmem [shape: f32[1,512], index: 2, kind: input, shape index: {}]
  %s3 = inlined_call_operand.vmem [shape: bf16[128,512], index: 3, kind: output, shape index: {}]
  %s4 = sld [smem:[#allocation0]]
  $region117: #{decoder_forward.9} parent=0
    _
  %s6 = ssub.s32 1, %s4
  %s7 = scalar_select 0, %s6, %s4
  $region1: #{decoder_forward.9} parent=0
    #allocation2 [shape = 'u8[262144]{0}', space=vmem, size = 0x40000, scoped, tag = 'input window, operand 1']
    #allocation3 [shape = 'u8[131072]{0}', space=vmem, size = 0x20000, scoped, tag = 'output window, operand 0']
    loop: start=0, step=1, limit=4
    $region2: #{decoder_forward.9} parent=1 // loop_pre_header
      _
    $region3: #{decoder_forward.9} parent=1 // loop_header
      %s9 = sphi 0, %s13
      %p10 = scmp.ge.s32.totalorder %s9, 4
      %s16 = sphi 0, %s28
      %s17 = sphi 0, %s24
      %s18 = sphi 0, %s16
      %s19 = sphi 0, %s17
      %s20 = sphi 0, %s18
      %s21 = sphi 0, %s19
      %s31 = sphi 0, %s33
      %s34 = sphi 0, %s31
      %s35 = sphi 0, %s34
      %s51 = sphi 0, %s35
      %s57 = sphi 0, %s59
      %s60 = sphi 0, %s57
      %s61 = sphi 0, %s60
      %s77 = sphi 0, %s61
      %s83 = sphi 0, %s85
      %s86 = sphi 0, %s83
      %s87 = sphi 0, %s86
      %s103 = sphi 0, %s87
      %s111 = sphi 0, %s113
      %s114 = sphi 0, %s111
      %s115 = sphi 0, %s114
      %s131 = sphi 0, %s115
    $region4: #{decoder_forward.9} parent=1 // loop_header_branch
      %12 = sbr.rel (%p10) target = $region8
    $region5: #{decoder_forward.9} parent=1 // loop_body
      %s14 = ssub.s32 %s9, 1
      %s15 = ssub.s32 %s9, 2
      %s22 = sadd.s32 1, %s17
      %p23 = scmp.ge.s32.totalorder %s22, 2
      %s24 = scalar_select %p23, 0, %s22
      %s25 = sadd.s32 1, %s16
      %s26 = scalar_select %p23, %s25, %s16
      %p27 = scmp.ge.s32.totalorder %s26, 1
      %s28 = scalar_select %p27, 0, %s26
      %s29 = ssub.s32 %s16, %s28
      %p30 = scmp.eq.s32.totalorder %s29, 0
      %s32 = sadd.s32 %s31, 1
      %s33 = scalar_select %p30, %s31, %s32
      %p36 = pneg %p30
      %p37 = scmp.eq.s32.totalorder %s9, 1
      %p38 = por %p36, %p37
      %p39 = scmp.ne.s32.totalorder %s31, %s34
      %p40 = scmp.eq.s32.totalorder %s9, 0
      %p41 = por %p39, %p40
      %p42 = scmp.ne.s32.totalorder %s31, %s34
      %p43 = scmp.eq.s32.totalorder %s14, 1
      %p44 = por %p42, %p43
      %p45 = scmp.ne.s32.totalorder %s34, %s35
      %p46 = scmp.eq.s32.totalorder %s14, 0
      %p47 = por %p45, %p46
      %p48 = scmp.ne.s32.totalorder %s34, %s35
      %p49 = scmp.eq.s32.totalorder %s15, 1
      %p50 = por %p48, %p49
      %p52 = scmp.ne.s32.totalorder %s35, %s51
      %p53 = scmp.eq.s32.totalorder %s15, 0
      %p54 = por %p52, %p53
      %s55 = ssub.s32 %s17, %s24
      %p56 = scmp.eq.s32.totalorder %s55, 0
      %s58 = sadd.s32 %s57, 1
      %s59 = scalar_select %p56, %s57, %s58
      %p62 = pneg %p56
      %p63 = scmp.eq.s32.totalorder %s9, 1
      %p64 = por %p62, %p63
      %p65 = scmp.ne.s32.totalorder %s57, %s60
      %p66 = scmp.eq.s32.totalorder %s9, 0
      %p67 = por %p65, %p66
      %p68 = scmp.ne.s32.totalorder %s57, %s60
      %p69 = scmp.eq.s32.totalorder %s14, 1
      %p70 = por %p68, %p69
      %p71 = scmp.ne.s32.totalorder %s60, %s61
      %p72 = scmp.eq.s32.totalorder %s14, 0
      %p73 = por %p71, %p72
      %p74 = scmp.ne.s32.totalorder %s60, %s61
      %p75 = scmp.eq.s32.totalorder %s15, 1
      %p76 = por %p74, %p75
      %p78 = scmp.ne.s32.totalorder %s61, %s77
      %p79 = scmp.eq.s32.totalorder %s15, 0
      %p80 = por %p78, %p79
      %s81 = ssub.s32 %s17, %s24
      %p82 = scmp.eq.s32.totalorder %s81, 0
      %s84 = sadd.s32 %s83, 1
      %s85 = scalar_select %p82, %s83, %s84
      %p88 = pneg %p82
      %p89 = scmp.eq.s32.totalorder %s9, 1
      %p90 = por %p88, %p89
      %p91 = scmp.ne.s32.totalorder %s83, %s86
      %p92 = scmp.eq.s32.totalorder %s9, 0
      %p93 = por %p91, %p92
      %p94 = scmp.ne.s32.totalorder %s83, %s86
      %p95 = scmp.eq.s32.totalorder %s14, 1
      %p96 = por %p94, %p95
      %p97 = scmp.ne.s32.totalorder %s86, %s87
      %p98 = scmp.eq.s32.totalorder %s14, 0
      %p99 = por %p97, %p98
      %p100 = scmp.ne.s32.totalorder %s86, %s87
      %p101 = scmp.eq.s32.totalorder %s15, 1
      %p102 = por %p100, %p101
      %p104 = scmp.ne.s32.totalorder %s87, %s103
      %p105 = scmp.eq.s32.totalorder %s15, 0
      %p106 = por %p104, %p105
      %s107 = ssub.s32 %s16, %s28
      %s108 = ssub.s32 %s17, %s24
      %s109 = sor.u32 %s107, %s108
      %p110 = scmp.eq.s32.totalorder %s109, 0
      %s112 = sadd.s32 %s111, 1
      %s113 = scalar_select %p110, %s111, %s112
      %p116 = pneg %p110
      %p117 = scmp.eq.s32.totalorder %s9, 1
      %p118 = por %p116, %p117
      %p119 = scmp.ne.s32.totalorder %s111, %s114
      %p120 = scmp.eq.s32.totalorder %s9, 0
      %p121 = por %p119, %p120
      %p122 = scmp.ne.s32.totalorder %s111, %s114
      %p123 = scmp.eq.s32.totalorder %s14, 1
      %p124 = por %p122, %p123
      %p125 = scmp.ne.s32.totalorder %s114, %s115
      %p126 = scmp.eq.s32.totalorder %s14, 0
      %p127 = por %p125, %p126
      %p128 = scmp.ne.s32.totalorder %s114, %s115
      %p129 = scmp.eq.s32.totalorder %s15, 1
      %p130 = por %p128, %p129
      %p132 = scmp.ne.s32.totalorder %s115, %s131
      %p133 = scmp.eq.s32.totalorder %s15, 0
      %p134 = por %p132, %p133
      %p135 = scmp.le.s32.totalorder 1, %s9
      %p136 = scmp.lt.s32.totalorder %s9, 3
      %p137 = pnand %p135, %p136
      %p138 = pneg %p137
      // Predicated region
      $region9: #{decoder_forward.9} parent=5 // pred_check
        _
      $region10: #{decoder_forward.9} parent=5 // pred_check_branch
        %140 = sbr.rel (%p137) target = $region12
      $region11: #{decoder_forward.9} parent=5 // pred_region
        %s141 = ssub.s32 %s9, 1
        // Predicated region
        $region13: #{decoder_forward.9} parent=11 // pred_check
          %p142 = pneg %p47
        $region14: #{decoder_forward.9} parent=11 // pred_check_branch
          %144 = sbr.rel (%p142) target = $region16
        $region15: #{decoder_forward.9} parent=11 // pred_region
          %s145 = smul.u32 16, %s18
          %p146 = scmp.lt.s32.totalorder %s145, 15
          %s147 = scalar_select %p146, %s145, 15
          %s148 = smul.addr %s147, 2
          %s149 = smul.addr %s148, 4
          %s150 = scalar_lea.vmem %s0, %s149
          %s151 = smul.u32 16, %s18
        $region16: #{decoder_forward.9} parent=11 // pred_fallthru
          _
      $region12: #{decoder_forward.9} parent=5 // pred_fallthru
        _
      %p152 = scmp.lt.s32.totalorder %s9, 2
      // Predicated region
      $region17: #{decoder_forward.9} parent=5 // pred_check
        %p153 = pneg %p152
      $region18: #{decoder_forward.9} parent=5 // pred_check_branch
        %155 = sbr.rel (%p153) target = $region20
      $region19: #{decoder_forward.9} parent=5 // pred_region
        // Predicated region
        $region21: #{decoder_forward.9} parent=19 // pred_check
          %p156 = pneg %p67
        $region22: #{decoder_forward.9} parent=19 // pred_check_branch
          %158 = sbr.rel (%p156) target = $region24
        $region23: #{decoder_forward.9} parent=19 // pred_region
          %s159 = sand.u32 %s57, 1
          %s160 = sand.u32 %s57, 1
          %s161 = smul.addr %s160, 256
          %s162 = scalar_lea.vmem [#allocation2], %s161
          %s163 = smul.u32 2, %s17
          %s164 = smul.addr %s163, 4
          %s165 = scalar_lea.vmem %s1, %s164
          // Predicated region
          $region25: #{decoder_forward.9} parent=23 // pred_check
            _
          $region26: #{decoder_forward.9} parent=23 // pred_check_branch
            %167 = sbr.rel (0) target = $region28
          $region27: #{decoder_forward.9} parent=23 // pred_region
            // Predicated region
            $region29: #{decoder_forward.9} parent=27 // pred_check
              _
            $region30: #{decoder_forward.9} parent=27 // pred_check_branch
              %169 = sbr.rel (0) target = $region32
            $region31: #{decoder_forward.9} parent=27 // pred_region
              // Predicated region
              $region44: #{decoder_forward.9} parent=31 // pred_check
                _
              $region45: #{decoder_forward.9} parent=31 // pred_check_branch
                %246 = sbr.rel (0) target = $region47
              $region46: #{decoder_forward.9} parent=31 // pred_region
                loop: start=0, step=1, limit=1
                $region48: #{decoder_forward.9} parent=46 // loop_pre_header
                  _
                $region49: #{decoder_forward.9} parent=46 // loop_header
                  %s248 = sphi 0, %s252
                  %p249 = scmp.ge.s32.totalorder %s248, 1
                  %s253 = sphi %s165, %s165
                  %s254 = sphi %s162, %s162
                $region50: #{decoder_forward.9} parent=46 // loop_header_branch
                  %251 = sbr.rel (%p249) target = $region54
                $region51: #{decoder_forward.9} parent=46 // loop_body
                  %v255 = vld [vmem:[%s253] sm:$0xff]
                  %256 = vst [vmem:[%s254] sm:$0xff] %v255
                  %v257 = vld [vmem:[%s253 + $0x10] sm:$0xff]
                  %258 = vst [vmem:[%s254 + $0x8] sm:$0xff] %v257
                  %v259 = vld [vmem:[%s253 + $0x20] sm:$0xff]
                  %260 = vst [vmem:[%s254 + $0x10] sm:$0xff] %v259
                  %v261 = vld [vmem:[%s253 + $0x30] sm:$0xff]
                  %262 = vst [vmem:[%s254 + $0x18] sm:$0xff] %v261
                  %v263 = vld [vmem:[%s253 + $0x40] sm:$0xff]
                  %264 = vst [vmem:[%s254 + $0x20] sm:$0xff] %v263
                  %v265 = vld [vmem:[%s253 + $0x50] sm:$0xff]
                  %266 = vst [vmem:[%s254 + $0x28] sm:$0xff] %v265
                  %v267 = vld [vmem:[%s253 + $0x60] sm:$0xff]
                  %268 = vst [vmem:[%s254 + $0x30] sm:$0xff] %v267
                  %v269 = vld [vmem:[%s253 + $0x70] sm:$0xff]
                  %270 = vst [vmem:[%s254 + $0x38] sm:$0xff] %v269
                  %v271 = vld [vmem:[%s253 + $0x80] sm:$0xff]
                  %272 = vst [vmem:[%s254 + $0x40] sm:$0xff] %v271
                  %v273 = vld [vmem:[%s253 + $0x90] sm:$0xff]
                  %274 = vst [vmem:[%s254 + $0x48] sm:$0xff] %v273
                  %v275 = vld [vmem:[%s253 + $0xa0] sm:$0xff]
                  %276 = vst [vmem:[%s254 + $0x50] sm:$0xff] %v275
                  %v277 = vld [vmem:[%s253 + $0xb0] sm:$0xff]
                  %278 = vst [vmem:[%s254 + $0x58] sm:$0xff] %v277
                  %v279 = vld [vmem:[%s253 + $0xc0] sm:$0xff]
                  %280 = vst [vmem:[%s254 + $0x60] sm:$0xff] %v279
                  %v281 = vld [vmem:[%s253 + $0xd0] sm:$0xff]
                  %282 = vst [vmem:[%s254 + $0x68] sm:$0xff] %v281
                  %v283 = vld [vmem:[%s253 + $0xe0] sm:$0xff]
                  %284 = vst [vmem:[%s254 + $0x70] sm:$0xff] %v283
                  %v285 = vld [vmem:[%s253 + $0xf0] sm:$0xff]
                  %286 = vst [vmem:[%s254 + $0x78] sm:$0xff] %v285
                  %v287 = vld [vmem:[%s253 + $0x100] sm:$0xff]
                  %288 = vst [vmem:[%s254 + $0x80] sm:$0xff] %v287
                  %v289 = vld [vmem:[%s253 + $0x110] sm:$0xff]
                  %290 = vst [vmem:[%s254 + $0x88] sm:$0xff] %v289
                  %v291 = vld [vmem:[%s253 + $0x120] sm:$0xff]
                  %292 = vst [vmem:[%s254 + $0x90] sm:$0xff] %v291
                  %v293 = vld [vmem:[%s253 + $0x130] sm:$0xff]
                  %294 = vst [vmem:[%s254 + $0x98] sm:$0xff] %v293
                  %v295 = vld [vmem:[%s253 + $0x140] sm:$0xff]
                  %296 = vst [vmem:[%s254 + $0xa0] sm:$0xff] %v295
                  %v297 = vld [vmem:[%s253 + $0x150] sm:$0xff]
                  %298 = vst [vmem:[%s254 + $0xa8] sm:$0xff] %v297
                  %v299 = vld [vmem:[%s253 + $0x160] sm:$0xff]
                  %300 = vst [vmem:[%s254 + $0xb0] sm:$0xff] %v299
                  %v301 = vld [vmem:[%s253 + $0x170] sm:$0xff]
                  %302 = vst [vmem:[%s254 + $0xb8] sm:$0xff] %v301
                  %v303 = vld [vmem:[%s253 + $0x180] sm:$0xff]
                  %304 = vst [vmem:[%s254 + $0xc0] sm:$0xff] %v303
                  %v305 = vld [vmem:[%s253 + $0x190] sm:$0xff]
                  %306 = vst [vmem:[%s254 + $0xc8] sm:$0xff] %v305
                  %v307 = vld [vmem:[%s253 + $0x1a0] sm:$0xff]
                  %308 = vst [vmem:[%s254 + $0xd0] sm:$0xff] %v307
                  %v309 = vld [vmem:[%s253 + $0x1b0] sm:$0xff]
                  %310 = vst [vmem:[%s254 + $0xd8] sm:$0xff] %v309
                  %v311 = vld [vmem:[%s253 + $0x1c0] sm:$0xff]
                  %312 = vst [vmem:[%s254 + $0xe0] sm:$0xff] %v311
                  %v313 = vld [vmem:[%s253 + $0x1d0] sm:$0xff]
                  %314 = vst [vmem:[%s254 + $0xe8] sm:$0xff] %v313
                  %v315 = vld [vmem:[%s253 + $0x1e0] sm:$0xff]
                  %316 = vst [vmem:[%s254 + $0xf0] sm:$0xff] %v315
                  %v317 = vld [vmem:[%s253 + $0x1f0] sm:$0xff]
                  %318 = vst [vmem:[%s254 + $0xf8] sm:$0xff] %v317
                $region52: #{decoder_forward.9} parent=46 // loop_footer
                  %s252 = sadd.s32 1, %s248
                $region53: #{decoder_forward.9} parent=46 // loop_footer_branch
                  %247 = sbr.rel target = $region49
                $region54: #{decoder_forward.9} parent=46 // loop_exit
                  _
              $region47: #{decoder_forward.9} parent=31 // pred_fallthru
                _
              // Predicated region
              $region55: #{decoder_forward.9} parent=31 // pred_check
                _
              $region56: #{decoder_forward.9} parent=31 // pred_check_branch
                %320 = sbr.rel target = $region58
              $region57: #{decoder_forward.9} parent=31 // pred_region
                _
              $region58: #{decoder_forward.9} parent=31 // pred_fallthru
                _
            $region32: #{decoder_forward.9} parent=27 // pred_fallthru
              _
            // Predicated region
            $region33: #{decoder_forward.9} parent=27 // pred_check
              _
            $region34: #{decoder_forward.9} parent=27 // pred_check_branch
              %171 = sbr.rel target = $region36
            $region35: #{decoder_forward.9} parent=27 // pred_region
              loop: start=0, step=1, limit=1
              $region37: #{decoder_forward.9} parent=35 // loop_pre_header
                _
              $region38: #{decoder_forward.9} parent=35 // loop_header
                %s174 = sphi 0, %s178
                %p175 = scmp.ge.s32.totalorder %s174, 1
                %s179 = sphi %s165, %s165
                %s180 = sphi %s162, %s162
              $region39: #{decoder_forward.9} parent=35 // loop_header_branch
                %177 = sbr.rel (%p175) target = $region43
              $region40: #{decoder_forward.9} parent=35 // loop_body
                %v181 = vld [vmem:[%s179] sm:$0xff]
                %182 = vst [vmem:[%s180] sm:$0xff] %v181
                %v183 = vld [vmem:[%s179 + $0x10] sm:$0xff]
                %184 = vst [vmem:[%s180 + $0x8] sm:$0xff] %v183
                %v185 = vld [vmem:[%s179 + $0x20] sm:$0xff]
                %186 = vst [vmem:[%s180 + $0x10] sm:$0xff] %v185
                %v187 = vld [vmem:[%s179 + $0x30] sm:$0xff]
                %188 = vst [vmem:[%s180 + $0x18] sm:$0xff] %v187
                %v189 = vld [vmem:[%s179 + $0x40] sm:$0xff]
                %190 = vst [vmem:[%s180 + $0x20] sm:$0xff] %v189
                %v191 = vld [vmem:[%s179 + $0x50] sm:$0xff]
                %192 = vst [vmem:[%s180 + $0x28] sm:$0xff] %v191
                %v193 = vld [vmem:[%s179 + $0x60] sm:$0xff]
                %194 = vst [vmem:[%s180 + $0x30] sm:$0xff] %v193
                %v195 = vld [vmem:[%s179 + $0x70] sm:$0xff]
                %196 = vst [vmem:[%s180 + $0x38] sm:$0xff] %v195
                %v197 = vld [vmem:[%s179 + $0x80] sm:$0xff]
                %198 = vst [vmem:[%s180 + $0x40] sm:$0xff] %v197
                %v199 = vld [vmem:[%s179 + $0x90] sm:$0xff]
                %200 = vst [vmem:[%s180 + $0x48] sm:$0xff] %v199
                %v201 = vld [vmem:[%s179 + $0xa0] sm:$0xff]
                %202 = vst [vmem:[%s180 + $0x50] sm:$0xff] %v201
                %v203 = vld [vmem:[%s179 + $0xb0] sm:$0xff]
                %204 = vst [vmem:[%s180 + $0x58] sm:$0xff] %v203
                %v205 = vld [vmem:[%s179 + $0xc0] sm:$0xff]
                %206 = vst [vmem:[%s180 + $0x60] sm:$0xff] %v205
                %v207 = vld [vmem:[%s179 + $0xd0] sm:$0xff]
                %208 = vst [vmem:[%s180 + $0x68] sm:$0xff] %v207
                %v209 = vld [vmem:[%s179 + $0xe0] sm:$0xff]
                %210 = vst [vmem:[%s180 + $0x70] sm:$0xff] %v209
                %v211 = vld [vmem:[%s179 + $0xf0] sm:$0xff]
                %212 = vst [vmem:[%s180 + $0x78] sm:$0xff] %v211
                %v213 = vld [vmem:[%s179 + $0x100] sm:$0xff]
                %214 = vst [vmem:[%s180 + $0x80] sm:$0xff] %v213
                %v215 = vld [vmem:[%s179 + $0x110] sm:$0xff]
                %216 = vst [vmem:[%s180 + $0x88] sm:$0xff] %v215
                %v217 = vld [vmem:[%s179 + $0x120] sm:$0xff]
                %218 = vst [vmem:[%s180 + $0x90] sm:$0xff] %v217
                %v219 = vld [vmem:[%s179 + $0x130] sm:$0xff]
                %220 = vst [vmem:[%s180 + $0x98] sm:$0xff] %v219
                %v221 = vld [vmem:[%s179 + $0x140] sm:$0xff]
                %222 = vst [vmem:[%s180 + $0xa0] sm:$0xff] %v221
                %v223 = vld [vmem:[%s179 + $0x150] sm:$0xff]
                %224 = vst [vmem:[%s180 + $0xa8] sm:$0xff] %v223
                %v225 = vld [vmem:[%s179 + $0x160] sm:$0xff]
                %226 = vst [vmem:[%s180 + $0xb0] sm:$0xff] %v225
                %v227 = vld [vmem:[%s179 + $0x170] sm:$0xff]
                %228 = vst [vmem:[%s180 + $0xb8] sm:$0xff] %v227
                %v229 = vld [vmem:[%s179 + $0x180] sm:$0xff]
                %230 = vst [vmem:[%s180 + $0xc0] sm:$0xff] %v229
                %v231 = vld [vmem:[%s179 + $0x190] sm:$0xff]
                %232 = vst [vmem:[%s180 + $0xc8] sm:$0xff] %v231
                %v233 = vld [vmem:[%s179 + $0x1a0] sm:$0xff]
                %234 = vst [vmem:[%s180 + $0xd0] sm:$0xff] %v233
                %v235 = vld [vmem:[%s179 + $0x1b0] sm:$0xff]
                %236 = vst [vmem:[%s180 + $0xd8] sm:$0xff] %v235
                %v237 = vld [vmem:[%s179 + $0x1c0] sm:$0xff]
                %238 = vst [vmem:[%s180 + $0xe0] sm:$0xff] %v237
                %v239 = vld [vmem:[%s179 + $0x1d0] sm:$0xff]
                %240 = vst [vmem:[%s180 + $0xe8] sm:$0xff] %v239
                %v241 = vld [vmem:[%s179 + $0x1e0] sm:$0xff]
                %242 = vst [vmem:[%s180 + $0xf0] sm:$0xff] %v241
                %v243 = vld [vmem:[%s179 + $0x1f0] sm:$0xff]
                %244 = vst [vmem:[%s180 + $0xf8] sm:$0xff] %v243
              $region41: #{decoder_forward.9} parent=35 // loop_footer
                %s178 = sadd.s32 1, %s174
              $region42: #{decoder_forward.9} parent=35 // loop_footer_branch
                %173 = sbr.rel target = $region38
              $region43: #{decoder_forward.9} parent=35 // loop_exit
                _
            $region36: #{decoder_forward.9} parent=27 // pred_fallthru
              _
          $region28: #{decoder_forward.9} parent=23 // pred_fallthru
            _
          %321 = vnop
        $region24: #{decoder_forward.9} parent=19 // pred_fallthru
          _
        // Predicated region
        $region59: #{decoder_forward.9} parent=19 // pred_check
          %p322 = pneg %p93
        $region60: #{decoder_forward.9} parent=19 // pred_check_branch
          %324 = sbr.rel (%p322) target = $region62
        $region61: #{decoder_forward.9} parent=19 // pred_region
          %s325 = smul.u32 2, %s17
          %p326 = scmp.lt.s32.totalorder %s325, 3
          %s327 = scalar_select %p326, %s325, 3
          %s328 = scalar_lea.vmem %s2, %s327
          %s329 = smul.u32 2, %s17
        $region62: #{decoder_forward.9} parent=19 // pred_fallthru
          _
      $region20: #{decoder_forward.9} parent=5 // pred_fallthru
        _
      %p330 = scmp.le.s32.totalorder 1, %s9
      %p331 = scmp.lt.s32.totalorder %s9, 3
      %p332 = pnand %p330, %p331
      %p333 = pneg %p332
      // Predicated region
      $region63: #{decoder_forward.9} parent=5 // pred_check
        _
      $region64: #{decoder_forward.9} parent=5 // pred_check_branch
        %335 = sbr.rel (%p332) target = $region66
      $region65: #{decoder_forward.9} parent=5 // pred_region
        %s336 = ssub.s32 %s9, 1
        %s337 = sand.u32 %s60, 1
        %s338 = sand.u32 %s60, 1
        %s339 = smul.addr %s338, 256
        %s340 = scalar_lea.vmem [#allocation2], %s339
        // Predicated region
        $region67: #{decoder_forward.9} parent=65 // pred_check
          %p341 = pneg %p73
        $region68: #{decoder_forward.9} parent=65 // pred_check_branch
          %343 = sbr.rel (%p341) target = $region70
        $region69: #{decoder_forward.9} parent=65 // pred_region
          _
        $region70: #{decoder_forward.9} parent=65 // pred_fallthru
          _
        %s344 = smul.u32 16, %s18
        %p345 = scmp.lt.s32.totalorder %s344, 15
        %s346 = scalar_select %p345, %s344, 15
        %s347 = smul.addr %s346, 2
        %s348 = smul.addr %s347, 4
        %s349 = scalar_lea.vmem %s0, %s348
        %p350 = pneg %p47
        %p351 = pneg %p44
        %s352 = sand.u32 %s60, 1
        %s353 = sand.u32 %s60, 1
        %s354 = smul.addr %s353, 256
        %s355 = scalar_lea.vmem [#allocation2], %s354
        %p356 = pneg %p73
        %p357 = pneg %p70
        %s358 = smul.u32 2, %s19
        %p359 = scmp.lt.s32.totalorder %s358, 3
        %s360 = scalar_select %p359, %s358, 3
        %s361 = scalar_lea.vmem %s2, %s360
        %p362 = pneg %p99
        %p363 = pneg %p96
        %p364 = pneg %p127
        %p365 = pneg %p124
        %s366 = sand.u32 %s114, 1
        %s367 = sand.u32 %s114, 1
        %s368 = smul.addr %s367, 128
        %s369 = scalar_lea.vmem [#allocation3], %s368
        %s370 = smul.u32 16, %s18
        %p371 = scmp.lt.s32.totalorder %s370, 15
        %s372 = scalar_select %p371, %s370, 15
        %s373 = smul.addr %s372, 2
        %s374 = smul.addr %s373, 4
        %s375 = scalar_lea.vmem %s0, %s374
        %s376 = smul.u32 16, %s18
        %s377 = smul.u32 2, %s19
        %s378 = smul.u32 2, %s19
        %p379 = scmp.lt.s32.totalorder %s378, 3
        %s380 = scalar_select %p379, %s378, 3
        %s381 = scalar_lea.vmem %s2, %s380
        %s382 = smul.u32 2, %s19
        %s383 = smul.u32 16, %s18
        %s384 = smul.u32 2, %s19
        %v385 = vld [vmem:[%s375] sm:$0xff]
        %v386 = vld [vmem:[%s375 + $0x8] sm:$0xff]
        %v387 = vld [vmem:[%s375 + $0x10] sm:$0xff]
        %v388 = vld [vmem:[%s375 + $0x18] sm:$0xff]
        %v389 = vld [vmem:[%s375 + $0x20] sm:$0xff]
        %v390 = vld [vmem:[%s375 + $0x28] sm:$0xff]
        %v391 = vld [vmem:[%s375 + $0x30] sm:$0xff]
        %v392 = vld [vmem:[%s375 + $0x38] sm:$0xff]
        %v393 = vld [vmem:[%s375 + $0x40] sm:$0xff]
        %v394 = vld [vmem:[%s375 + $0x48] sm:$0xff]
        %v395 = vld [vmem:[%s375 + $0x50] sm:$0xff]
        %v396 = vld [vmem:[%s375 + $0x58] sm:$0xff]
        %v397 = vld [vmem:[%s375 + $0x60] sm:$0xff]
        %v398 = vld [vmem:[%s375 + $0x68] sm:$0xff]
        %v399 = vld [vmem:[%s375 + $0x70] sm:$0xff]
        %v400 = vld [vmem:[%s375 + $0x78] sm:$0xff]
        %v401 = vld [vmem:[%s340] sm:$0xff]
        %v402 = vld [vmem:[%s340 + $0x8] sm:$0xff]
        %v403 = vld [vmem:[%s340 + $0x10] sm:$0xff]
        %v404 = vld [vmem:[%s340 + $0x18] sm:$0xff]
        %v405 = vld [vmem:[%s340 + $0x20] sm:$0xff]
        %v406 = vld [vmem:[%s340 + $0x28] sm:$0xff]
        %v407 = vld [vmem:[%s340 + $0x30] sm:$0xff]
        %v408 = vld [vmem:[%s340 + $0x38] sm:$0xff]
        %v409 = vld [vmem:[%s340 + $0x40] sm:$0xff]
        %v410 = vld [vmem:[%s340 + $0x48] sm:$0xff]
        %v411 = vld [vmem:[%s340 + $0x50] sm:$0xff]
        %v412 = vld [vmem:[%s340 + $0x58] sm:$0xff]
        %v413 = vld [vmem:[%s340 + $0x60] sm:$0xff]
        %v414 = vld [vmem:[%s340 + $0x68] sm:$0xff]
        %v415 = vld [vmem:[%s340 + $0x70] sm:$0xff]
        %v416 = vld [vmem:[%s340 + $0x78] sm:$0xff]
        %v417 = vld [vmem:[%s340 + $0x80] sm:$0xff]
        %v418 = vld [vmem:[%s340 + $0x88] sm:$0xff]
        %v419 = vld [vmem:[%s340 + $0x90] sm:$0xff]
        %v420 = vld [vmem:[%s340 + $0x98] sm:$0xff]
        %v421 = vld [vmem:[%s340 + $0xa0] sm:$0xff]
        %v422 = vld [vmem:[%s340 + $0xa8] sm:$0xff]
        %v423 = vld [vmem:[%s340 + $0xb0] sm:$0xff]
        %v424 = vld [vmem:[%s340 + $0xb8] sm:$0xff]
        %v425 = vld [vmem:[%s340 + $0xc0] sm:$0xff]
        %v426 = vld [vmem:[%s340 + $0xc8] sm:$0xff]
        %v427 = vld [vmem:[%s340 + $0xd0] sm:$0xff]
        %v428 = vld [vmem:[%s340 + $0xd8] sm:$0xff]
        %v429 = vld [vmem:[%s340 + $0xe0] sm:$0xff]
        %v430 = vld [vmem:[%s340 + $0xe8] sm:$0xff]
        %v431 = vld [vmem:[%s340 + $0xf0] sm:$0xff]
        %v432 = vld [vmem:[%s340 + $0xf8] sm:$0xff]
        %v433 = vld [vmem:[%s381] sm:$0x3]
        %v435 = vlaneseq
        %v436 = vshrl.u32 %v435, 7
        %v437 = vsub.s32 0, %v436
        %v438 = vrot.slane %v433, %v437
        %v439 = vlaneseq
        %v440 = vshrl.u32 %v439, 7
        %v441 = vsub.s32 1, %v440
        %v442 = vrot.slane %v433, %v441
        %v461 = vunpack.c.l.b16 %v385
        %v462 = vunpack.c.h.b16 %v385
        %v463 = vunpack.c.l.b16 %v386
        %v464 = vunpack.c.h.b16 %v386
        %v465 = vunpack.c.l.b16 %v387
        %v466 = vunpack.c.h.b16 %v387
        %v467 = vunpack.c.l.b16 %v388
        %v468 = vunpack.c.h.b16 %v388
        %v469 = vunpack.c.l.b16 %v389
        %v470 = vunpack.c.h.b16 %v389
        %v471 = vunpack.c.l.b16 %v390
        %v472 = vunpack.c.h.b16 %v390
        %v473 = vunpack.c.l.b16 %v391
        %v474 = vunpack.c.h.b16 %v391
        %v475 = vunpack.c.l.b16 %v392
        %v476 = vunpack.c.h.b16 %v392
        %v477 = vunpack.c.l.b16 %v393
        %v478 = vunpack.c.h.b16 %v393
        %v479 = vunpack.c.l.b16 %v394
        %v480 = vunpack.c.h.b16 %v394
        %v481 = vunpack.c.l.b16 %v395
        %v482 = vunpack.c.h.b16 %v395
        %v483 = vunpack.c.l.b16 %v396
        %v484 = vunpack.c.h.b16 %v396
        %v485 = vunpack.c.l.b16 %v397
        %v486 = vunpack.c.h.b16 %v397
        %v487 = vunpack.c.l.b16 %v398
        %v488 = vunpack.c.h.b16 %v398
        %v489 = vunpack.c.l.b16 %v399
        %v490 = vunpack.c.h.b16 %v399
        %v491 = vunpack.c.l.b16 %v400
        %v492 = vunpack.c.h.b16 %v400
        %v493 = vpack.c.b16 %v463, %v461
        %v494 = vpack.c.b16 %v464, %v462
        %v495 = vpack.c.b16 %v467, %v465
        %v496 = vpack.c.b16 %v468, %v466
        %v497 = vpack.c.b16 %v471, %v469
        %v498 = vpack.c.b16 %v472, %v470
        %v499 = vpack.c.b16 %v475, %v473
        %v500 = vpack.c.b16 %v476, %v474
        %v501 = vpack.c.b16 %v479, %v477
        %v502 = vpack.c.b16 %v480, %v478
        %v503 = vpack.c.b16 %v483, %v481
        %v504 = vpack.c.b16 %v484, %v482
        %v505 = vpack.c.b16 %v487, %v485
        %v506 = vpack.c.b16 %v488, %v486
        %v507 = vpack.c.b16 %v491, %v489
        %v508 = vpack.c.b16 %v492, %v490
        %v557 = vunpack.c.l.b16 %v401
        %v558 = vunpack.c.h.b16 %v401
        %v559 = vunpack.c.l.b16 %v402
        %v560 = vunpack.c.h.b16 %v402
        %v561 = vunpack.c.l.b16 %v403
        %v562 = vunpack.c.h.b16 %v403
        %v563 = vunpack.c.l.b16 %v404
        %v564 = vunpack.c.h.b16 %v404
        %v565 = vunpack.c.l.b16 %v405
        %v566 = vunpack.c.h.b16 %v405
        %v567 = vunpack.c.l.b16 %v406
        %v568 = vunpack.c.h.b16 %v406
        %v569 = vunpack.c.l.b16 %v407
        %v570 = vunpack.c.h.b16 %v407
        %v571 = vunpack.c.l.b16 %v408
        %v572 = vunpack.c.h.b16 %v408
        %v573 = vunpack.c.l.b16 %v409
        %v574 = vunpack.c.h.b16 %v409
        %v575 = vunpack.c.l.b16 %v410
        %v576 = vunpack.c.h.b16 %v410
        %v577 = vunpack.c.l.b16 %v411
        %v578 = vunpack.c.h.b16 %v411
        %v579 = vunpack.c.l.b16 %v412
        %v580 = vunpack.c.h.b16 %v412
        %v581 = vunpack.c.l.b16 %v413
        %v582 = vunpack.c.h.b16 %v413
        %v583 = vunpack.c.l.b16 %v414
        %v584 = vunpack.c.h.b16 %v414
        %v585 = vunpack.c.l.b16 %v415
        %v586 = vunpack.c.h.b16 %v415
        %v587 = vunpack.c.l.b16 %v416
        %v588 = vunpack.c.h.b16 %v416
        %v589 = vunpack.c.l.b16 %v417
        %v590 = vunpack.c.h.b16 %v417
        %v591 = vunpack.c.l.b16 %v418
        %v592 = vunpack.c.h.b16 %v418
        %v593 = vunpack.c.l.b16 %v419
        %v594 = vunpack.c.h.b16 %v419
        %v595 = vunpack.c.l.b16 %v420
        %v596 = vunpack.c.h.b16 %v420
        %v597 = vunpack.c.l.b16 %v421
        %v598 = vunpack.c.h.b16 %v421
        %v599 = vunpack.c.l.b16 %v422
        %v600 = vunpack.c.h.b16 %v422
        %v601 = vunpack.c.l.b16 %v423
        %v602 = vunpack.c.h.b16 %v423
        %v603 = vunpack.c.l.b16 %v424
        %v604 = vunpack.c.h.b16 %v424
        %v605 = vunpack.c.l.b16 %v425
        %v606 = vunpack.c.h.b16 %v425
        %v607 = vunpack.c.l.b16 %v426
        %v608 = vunpack.c.h.b16 %v426
        %v609 = vunpack.c.l.b16 %v427
        %v610 = vunpack.c.h.b16 %v427
        %v611 = vunpack.c.l.b16 %v428
        %v612 = vunpack.c.h.b16 %v428
        %v613 = vunpack.c.l.b16 %v429
        %v614 = vunpack.c.h.b16 %v429
        %v615 = vunpack.c.l.b16 %v430
        %v616 = vunpack.c.h.b16 %v430
        %v617 = vunpack.c.l.b16 %v431
        %v618 = vunpack.c.h.b16 %v431
        %v619 = vunpack.c.l.b16 %v432
        %v620 = vunpack.c.h.b16 %v432
        %v621 = vpack.c.b16 %v559, %v557
        %v622 = vpack.c.b16 %v560, %v558
        %v623 = vpack.c.b16 %v563, %v561
        %v624 = vpack.c.b16 %v564, %v562
        %v625 = vpack.c.b16 %v567, %v565
        %v626 = vpack.c.b16 %v568, %v566
        %v627 = vpack.c.b16 %v571, %v569
        %v628 = vpack.c.b16 %v572, %v570
        %v629 = vpack.c.b16 %v575, %v573
        %v630 = vpack.c.b16 %v576, %v574
        %v631 = vpack.c.b16 %v579, %v577
        %v632 = vpack.c.b16 %v580, %v578
        %v633 = vpack.c.b16 %v583, %v581
        %v634 = vpack.c.b16 %v584, %v582
        %v635 = vpack.c.b16 %v587, %v585
        %v636 = vpack.c.b16 %v588, %v586
        %v637 = vpack.c.b16 %v591, %v589
        %v638 = vpack.c.b16 %v592, %v590
        %v639 = vpack.c.b16 %v595, %v593
        %v640 = vpack.c.b16 %v596, %v594
        %v641 = vpack.c.b16 %v599, %v597
        %v642 = vpack.c.b16 %v600, %v598
        %v643 = vpack.c.b16 %v603, %v601
        %v644 = vpack.c.b16 %v604, %v602
        %v645 = vpack.c.b16 %v607, %v605
        %v646 = vpack.c.b16 %v608, %v606
        %v647 = vpack.c.b16 %v611, %v609
        %v648 = vpack.c.b16 %v612, %v610
        %v649 = vpack.c.b16 %v615, %v613
        %v650 = vpack.c.b16 %v616, %v614
        %v651 = vpack.c.b16 %v619, %v617
        %v652 = vpack.c.b16 %v620, %v618
        %685 = vmatprep.subr.bf16.mxu0 %v622
        %686 = vmatpush1.bf16.msra.mxu0 %v621
        %687 = vmatprep.subr.bf16.mxu0 %v624
        %688 = vmatpush1.bf16.msra.mxu0 %v623
        %689 = vmatprep.subr.bf16.mxu0 %v626
        %690 = vmatpush1.bf16.msra.mxu0 %v625
        %691 = vmatprep.subr.bf16.mxu0 %v628
        %692 = vmatpush1.bf16.msra.mxu0 %v627
        %693 = vmatprep.subr.bf16.mxu0 %v630
        %694 = vmatpush1.bf16.msra.mxu0 %v629
        %695 = vmatprep.subr.bf16.mxu0 %v632
        %696 = vmatpush1.bf16.msra.mxu0 %v631
        %697 = vmatprep.subr.bf16.mxu0 %v634
        %698 = vmatpush1.bf16.msra.mxu0 %v633
        %699 = vmatprep.subr.bf16.mxu0 %v636
        %700 = vmatpush1.bf16.msra.mxu0 %v635
        %701 = vmatprep.subr.bf16.mxu0 %v638
        %702 = vmatpush1.bf16.msra.mxu0 %v637
        %703 = vmatprep.subr.bf16.mxu0 %v640
        %704 = vmatpush1.bf16.msra.mxu0 %v639
        %705 = vmatprep.subr.bf16.mxu0 %v642
        %706 = vmatpush1.bf16.msra.mxu0 %v641
        %707 = vmatprep.subr.bf16.mxu0 %v644
        %708 = vmatpush1.bf16.msra.mxu0 %v643
        %709 = vmatprep.subr.bf16.mxu0 %v646
        %710 = vmatpush1.bf16.msra.mxu0 %v645
        %711 = vmatprep.subr.bf16.mxu0 %v648
        %712 = vmatpush1.bf16.msra.mxu0 %v647
        %713 = vmatprep.subr.bf16.mxu0 %v650
        %714 = vmatpush1.bf16.msra.mxu0 %v649
        %715 = vmatprep.subr.bf16.mxu0 %v652
        %716 = vmatpush1.bf16.msra.mxu0 %v651
        %717 = vmatprep.mubr.bf16.mxu0 %v494
        %718 = vmatmul.mubr.bf16.gmra.mrb[0].mxu0 %v493
        %v719 = vpop.f32.mrb[0].mxu0
        %v720 = vadd.f32 %v438, %v719
        %v721 = vpop.f32.mrb[0].mxu0
        %v722 = vadd.f32 %v442, %v721
        %v723 = vpop.f32.mrb[0].mxu0
        %v724 = vadd.f32 %v438, %v723
        %v725 = vpop.f32.mrb[0].mxu0
        %v726 = vadd.f32 %v442, %v725
        %727 = vmatprep.mubr.bf16.mxu0 %v496
        %728 = vmatmul.mubr.bf16.gmra.mrb[0].mxu0 %v495
        %v729 = vpop.f32.mrb[0].mxu0
        %v730 = vadd.f32 %v438, %v729
        %v731 = vpop.f32.mrb[0].mxu0
        %v732 = vadd.f32 %v442, %v731
        %v733 = vpop.f32.mrb[0].mxu0
        %v734 = vadd.f32 %v438, %v733
        %v735 = vpop.f32.mrb[0].mxu0
        %v736 = vadd.f32 %v442, %v735
        %737 = vmatprep.mubr.bf16.mxu0 %v498
        %738 = vmatmul.mubr.bf16.gmra.mrb[0].mxu0 %v497
        %v739 = vpop.f32.mrb[0].mxu0
        %v740 = vadd.f32 %v438, %v739
        %v741 = vpop.f32.mrb[0].mxu0
        %v742 = vadd.f32 %v442, %v741
        %v743 = vpop.f32.mrb[0].mxu0
        %v744 = vadd.f32 %v438, %v743
        %v745 = vpop.f32.mrb[0].mxu0
        %v746 = vadd.f32 %v442, %v745
        %747 = vmatprep.mubr.bf16.mxu0 %v500
        %748 = vmatmul.mubr.bf16.gmra.mrb[0].mxu0 %v499
        %v749 = vpop.f32.mrb[0].mxu0
        %v750 = vadd.f32 %v438, %v749
        %v751 = vpop.f32.mrb[0].mxu0
        %v752 = vadd.f32 %v442, %v751
        %v753 = vpop.f32.mrb[0].mxu0
        %v754 = vadd.f32 %v438, %v753
        %v755 = vpop.f32.mrb[0].mxu0
        %v756 = vadd.f32 %v442, %v755
        %757 = vmatprep.mubr.bf16.mxu0 %v502
        %758 = vmatmul.mubr.bf16.gmra.mrb[0].mxu0 %v501
        %v759 = vpop.f32.mrb[0].mxu0
        %v760 = vadd.f32 %v438, %v759
        %v761 = vpop.f32.mrb[0].mxu0
        %v762 = vadd.f32 %v442, %v761
        %v763 = vpop.f32.mrb[0].mxu0
        %v764 = vadd.f32 %v438, %v763
        %v765 = vpop.f32.mrb[0].mxu0
        %v766 = vadd.f32 %v442, %v765
        %767 = vmatprep.mubr.bf16.mxu0 %v504
        %768 = vmatmul.mubr.bf16.gmra.mrb[0].mxu0 %v503
        %v769 = vpop.f32.mrb[0].mxu0
        %v770 = vadd.f32 %v438, %v769
        %v771 = vpop.f32.mrb[0].mxu0
        %v772 = vadd.f32 %v442, %v771
        %v773 = vpop.f32.mrb[0].mxu0
        %v774 = vadd.f32 %v438, %v773
        %v775 = vpop.f32.mrb[0].mxu0
        %v776 = vadd.f32 %v442, %v775
        %777 = vmatprep.mubr.bf16.mxu0 %v506
        %778 = vmatmul.mubr.bf16.gmra.mrb[0].mxu0 %v505
        %v779 = vpop.f32.mrb[0].mxu0
        %v780 = vadd.f32 %v438, %v779
        %v781 = vpop.f32.mrb[0].mxu0
        %v782 = vadd.f32 %v442, %v781
        %v783 = vpop.f32.mrb[0].mxu0
        %v784 = vadd.f32 %v438, %v783
        %v785 = vpop.f32.mrb[0].mxu0
        %v786 = vadd.f32 %v442, %v785
        %787 = vmatprep.mubr.bf16.mxu0 %v508
        %788 = vmatmul.mubr.bf16.gmra.mrb[0].mxu0 %v507
        %v789 = vpop.f32.mrb[0].mxu0
        %v790 = vadd.f32 %v438, %v789
        %v791 = vpop.f32.mrb[0].mxu0
        %v792 = vadd.f32 %v442, %v791
        %v793 = vpop.f32.mrb[0].mxu0
        %v794 = vadd.f32 %v438, %v793
        %v795 = vpop.f32.mrb[0].mxu0
        %v796 = vadd.f32 %v442, %v795
        %797 = vdwg.mxu0
        %v798 = vmul.f32 %v720, 0.2
        %v799 = vmul.f32 %v722, 0.2
        %v800 = vmul.f32 %v724, 0.2
        %v801 = vmul.f32 %v726, 0.2
        %v802 = vmul.f32 %v730, 0.2
        %v803 = vmul.f32 %v732, 0.2
        %v804 = vmul.f32 %v734, 0.2
        %v805 = vmul.f32 %v736, 0.2
        %v806 = vmul.f32 %v740, 0.2
        %v807 = vmul.f32 %v742, 0.2
        %v808 = vmul.f32 %v744, 0.2
        %v809 = vmul.f32 %v746, 0.2
        %v810 = vmul.f32 %v750, 0.2
        %v811 = vmul.f32 %v752, 0.2
        %v812 = vmul.f32 %v754, 0.2
        %v813 = vmul.f32 %v756, 0.2
        %v814 = vmul.f32 %v760, 0.2
        %v815 = vmul.f32 %v762, 0.2
        %v816 = vmul.f32 %v764, 0.2
        %v817 = vmul.f32 %v766, 0.2
        %v818 = vmul.f32 %v770, 0.2
        %v819 = vmul.f32 %v772, 0.2
        %v820 = vmul.f32 %v774, 0.2
        %v821 = vmul.f32 %v776, 0.2
        %v822 = vmul.f32 %v780, 0.2
        %v823 = vmul.f32 %v782, 0.2
        %v824 = vmul.f32 %v784, 0.2
        %v825 = vmul.f32 %v786, 0.2
        %v826 = vmul.f32 %v790, 0.2
        %v827 = vmul.f32 %v792, 0.2
        %v828 = vmul.f32 %v794, 0.2
        %v829 = vmul.f32 %v796, 0.2
        %v830 = vmax.f32 %v720, %v798
        %v831 = vmax.f32 %v722, %v799
        %v832 = vmax.f32 %v724, %v800
        %v833 = vmax.f32 %v726, %v801
        %v834 = vmax.f32 %v730, %v802
        %v835 = vmax.f32 %v732, %v803
        %v836 = vmax.f32 %v734, %v804
        %v837 = vmax.f32 %v736, %v805
        %v838 = vmax.f32 %v740, %v806
        %v839 = vmax.f32 %v742, %v807
        %v840 = vmax.f32 %v744, %v808
        %v841 = vmax.f32 %v746, %v809
        %v842 = vmax.f32 %v750, %v810
        %v843 = vmax.f32 %v752, %v811
        %v844 = vmax.f32 %v754, %v812
        %v845 = vmax.f32 %v756, %v813
        %v846 = vmax.f32 %v760, %v814
        %v847 = vmax.f32 %v762, %v815
        %v848 = vmax.f32 %v764, %v816
        %v849 = vmax.f32 %v766, %v817
        %v850 = vmax.f32 %v770, %v818
        %v851 = vmax.f32 %v772, %v819
        %v852 = vmax.f32 %v774, %v820
        %v853 = vmax.f32 %v776, %v821
        %v854 = vmax.f32 %v780, %v822
        %v855 = vmax.f32 %v782, %v823
        %v856 = vmax.f32 %v784, %v824
        %v857 = vmax.f32 %v786, %v825
        %v858 = vmax.f32 %v790, %v826
        %v859 = vmax.f32 %v792, %v827
        %v860 = vmax.f32 %v794, %v828
        %v861 = vmax.f32 %v796, %v829
        %v862 = vpack.c.bf16 %v832, %v830
        %v863 = vpack.c.bf16 %v833, %v831
        %v864 = vpack.c.bf16 %v836, %v834
        %v865 = vpack.c.bf16 %v837, %v835
        %v866 = vpack.c.bf16 %v840, %v838
        %v867 = vpack.c.bf16 %v841, %v839
        %v868 = vpack.c.bf16 %v844, %v842
        %v869 = vpack.c.bf16 %v845, %v843
        %v870 = vpack.c.bf16 %v848, %v846
        %v871 = vpack.c.bf16 %v849, %v847
        %v872 = vpack.c.bf16 %v852, %v850
        %v873 = vpack.c.bf16 %v853, %v851
        %v874 = vpack.c.bf16 %v856, %v854
        %v875 = vpack.c.bf16 %v857, %v855
        %v876 = vpack.c.bf16 %v860, %v858
        %v877 = vpack.c.bf16 %v861, %v859
        %v894 = vunpack.c.l.b16 %v862
        %v895 = vunpack.c.l.b16 %v863
        %v896 = vunpack.c.h.b16 %v862
        %v897 = vunpack.c.h.b16 %v863
        %v898 = vunpack.c.l.b16 %v864
        %v899 = vunpack.c.l.b16 %v865
        %v900 = vunpack.c.h.b16 %v864
        %v901 = vunpack.c.h.b16 %v865
        %v902 = vunpack.c.l.b16 %v866
        %v903 = vunpack.c.l.b16 %v867
        %v904 = vunpack.c.h.b16 %v866
        %v905 = vunpack.c.h.b16 %v867
        %v906 = vunpack.c.l.b16 %v868
        %v907 = vunpack.c.l.b16 %v869
        %v908 = vunpack.c.h.b16 %v868
        %v909 = vunpack.c.h.b16 %v869
        %v910 = vunpack.c.l.b16 %v870
        %v911 = vunpack.c.l.b16 %v871
        %v912 = vunpack.c.h.b16 %v870
        %v913 = vunpack.c.h.b16 %v871
        %v914 = vunpack.c.l.b16 %v872
        %v915 = vunpack.c.l.b16 %v873
        %v916 = vunpack.c.h.b16 %v872
        %v917 = vunpack.c.h.b16 %v873
        %v918 = vunpack.c.l.b16 %v874
        %v919 = vunpack.c.l.b16 %v875
        %v920 = vunpack.c.h.b16 %v874
        %v921 = vunpack.c.h.b16 %v875
        %v922 = vunpack.c.l.b16 %v876
        %v923 = vunpack.c.l.b16 %v877
        %v924 = vunpack.c.h.b16 %v876
        %v925 = vunpack.c.h.b16 %v877
        %v926 = vpack.c.b16 %v895, %v894
        %v927 = vpack.c.b16 %v897, %v896
        %v928 = vpack.c.b16 %v899, %v898
        %v929 = vpack.c.b16 %v901, %v900
        %v930 = vpack.c.b16 %v903, %v902
        %v931 = vpack.c.b16 %v905, %v904
        %v932 = vpack.c.b16 %v907, %v906
        %v933 = vpack.c.b16 %v909, %v908
        %v934 = vpack.c.b16 %v911, %v910
        %v935 = vpack.c.b16 %v913, %v912
        %v936 = vpack.c.b16 %v915, %v914
        %v937 = vpack.c.b16 %v917, %v916
        %v938 = vpack.c.b16 %v919, %v918
        %v939 = vpack.c.b16 %v921, %v920
        %v940 = vpack.c.b16 %v923, %v922
        %v941 = vpack.c.b16 %v925, %v924
        %958 = vst [vmem:[%s369] sm:$0xff] %v926
        %959 = vst [vmem:[%s369 + $0x8] sm:$0xff] %v927
        %960 = vst [vmem:[%s369 + $0x10] sm:$0xff] %v928
        %961 = vst [vmem:[%s369 + $0x18] sm:$0xff] %v929
        %962 = vst [vmem:[%s369 + $0x20] sm:$0xff] %v930
        %963 = vst [vmem:[%s369 + $0x28] sm:$0xff] %v931
        %964 = vst [vmem:[%s369 + $0x30] sm:$0xff] %v932
        %965 = vst [vmem:[%s369 + $0x38] sm:$0xff] %v933
        %966 = vst [vmem:[%s369 + $0x40] sm:$0xff] %v934
        %967 = vst [vmem:[%s369 + $0x48] sm:$0xff] %v935
        %968 = vst [vmem:[%s369 + $0x50] sm:$0xff] %v936
        %969 = vst [vmem:[%s369 + $0x58] sm:$0xff] %v937
        %970 = vst [vmem:[%s369 + $0x60] sm:$0xff] %v938
        %971 = vst [vmem:[%s369 + $0x68] sm:$0xff] %v939
        %972 = vst [vmem:[%s369 + $0x70] sm:$0xff] %v940
        %973 = vst [vmem:[%s369 + $0x78] sm:$0xff] %v941
        %s974 = sand.u32 %s114, 1
        %s975 = sand.u32 %s114, 1
        %s976 = smul.addr %s975, 128
        %s977 = scalar_lea.vmem [#allocation3], %s976
        // Predicated region
        $region71: #{decoder_forward.9} parent=65 // pred_check
          %p978 = pneg %p124
        $region72: #{decoder_forward.9} parent=65 // pred_check_branch
          %980 = sbr.rel (%p978) target = $region74
        $region73: #{decoder_forward.9} parent=65 // pred_region
          %s981 = smul.u32 16, %s18
          %s982 = smul.u32 2, %s19
          %s983 = smul.addr %s981, 4
          %s984 = sadd.s32 %s982, %s983
          %s985 = smul.addr %s984, 4
          %s986 = scalar_lea.vmem %s3, %s985
          // Predicated region
          $region75: #{decoder_forward.9} parent=73 // pred_check
            _
          $region76: #{decoder_forward.9} parent=73 // pred_check_branch
            %988 = sbr.rel (0) target = $region78
          $region77: #{decoder_forward.9} parent=73 // pred_region
            // Predicated region
            $region79: #{decoder_forward.9} parent=77 // pred_check
              _
            $region80: #{decoder_forward.9} parent=77 // pred_check_branch
              %990 = sbr.rel (0) target = $region82
            $region81: #{decoder_forward.9} parent=77 // pred_region
              // Predicated region
              $region94: #{decoder_forward.9} parent=81 // pred_check
                _
              $region95: #{decoder_forward.9} parent=81 // pred_check_branch
                %1035 = sbr.rel (0) target = $region97
              $region96: #{decoder_forward.9} parent=81 // pred_region
                loop: start=0, step=1, limit=1
                $region98: #{decoder_forward.9} parent=96 // loop_pre_header
                  _
                $region99: #{decoder_forward.9} parent=96 // loop_header
                  %s1037 = sphi 0, %s1041
                  %p1038 = scmp.ge.s32.totalorder %s1037, 1
                  %s1042 = sphi %s977, %s977
                  %s1043 = sphi %s986, %s986
                $region100: #{decoder_forward.9} parent=96 // loop_header_branch
                  %1040 = sbr.rel (%p1038) target = $region104
                $region101: #{decoder_forward.9} parent=96 // loop_body
                  %v1044 = vld [vmem:[%s1042] sm:$0xff]
                  %1045 = vst [vmem:[%s1043] sm:$0xff] %v1044
                  %v1046 = vld [vmem:[%s1042 + $0x8] sm:$0xff]
                  %1047 = vst [vmem:[%s1043 + $0x10] sm:$0xff] %v1046
                  %v1048 = vld [vmem:[%s1042 + $0x10] sm:$0xff]
                  %1049 = vst [vmem:[%s1043 + $0x20] sm:$0xff] %v1048
                  %v1050 = vld [vmem:[%s1042 + $0x18] sm:$0xff]
                  %1051 = vst [vmem:[%s1043 + $0x30] sm:$0xff] %v1050
                  %v1052 = vld [vmem:[%s1042 + $0x20] sm:$0xff]
                  %1053 = vst [vmem:[%s1043 + $0x40] sm:$0xff] %v1052
                  %v1054 = vld [vmem:[%s1042 + $0x28] sm:$0xff]
                  %1055 = vst [vmem:[%s1043 + $0x50] sm:$0xff] %v1054
                  %v1056 = vld [vmem:[%s1042 + $0x30] sm:$0xff]
                  %1057 = vst [vmem:[%s1043 + $0x60] sm:$0xff] %v1056
                  %v1058 = vld [vmem:[%s1042 + $0x38] sm:$0xff]
                  %1059 = vst [vmem:[%s1043 + $0x70] sm:$0xff] %v1058
                  %v1060 = vld [vmem:[%s1042 + $0x40] sm:$0xff]
                  %1061 = vst [vmem:[%s1043 + $0x80] sm:$0xff] %v1060
                  %v1062 = vld [vmem:[%s1042 + $0x48] sm:$0xff]
                  %1063 = vst [vmem:[%s1043 + $0x90] sm:$0xff] %v1062
                  %v1064 = vld [vmem:[%s1042 + $0x50] sm:$0xff]
                  %1065 = vst [vmem:[%s1043 + $0xa0] sm:$0xff] %v1064
                  %v1066 = vld [vmem:[%s1042 + $0x58] sm:$0xff]
                  %1067 = vst [vmem:[%s1043 + $0xb0] sm:$0xff] %v1066
                  %v1068 = vld [vmem:[%s1042 + $0x60] sm:$0xff]
                  %1069 = vst [vmem:[%s1043 + $0xc0] sm:$0xff] %v1068
                  %v1070 = vld [vmem:[%s1042 + $0x68] sm:$0xff]
                  %1071 = vst [vmem:[%s1043 + $0xd0] sm:$0xff] %v1070
                  %v1072 = vld [vmem:[%s1042 + $0x70] sm:$0xff]
                  %1073 = vst [vmem:[%s1043 + $0xe0] sm:$0xff] %v1072
                  %v1074 = vld [vmem:[%s1042 + $0x78] sm:$0xff]
                  %1075 = vst [vmem:[%s1043 + $0xf0] sm:$0xff] %v1074
                $region102: #{decoder_forward.9} parent=96 // loop_footer
                  %s1041 = sadd.s32 1, %s1037
                $region103: #{decoder_forward.9} parent=96 // loop_footer_branch
                  %1036 = sbr.rel target = $region99
                $region104: #{decoder_forward.9} parent=96 // loop_exit
                  _
              $region97: #{decoder_forward.9} parent=81 // pred_fallthru
                _
              // Predicated region
              $region105: #{decoder_forward.9} parent=81 // pred_check
                _
              $region106: #{decoder_forward.9} parent=81 // pred_check_branch
                %1077 = sbr.rel target = $region108
              $region107: #{decoder_forward.9} parent=81 // pred_region
                _
              $region108: #{decoder_forward.9} parent=81 // pred_fallthru
                _
            $region82: #{decoder_forward.9} parent=77 // pred_fallthru
              _
            // Predicated region
            $region83: #{decoder_forward.9} parent=77 // pred_check
              _
            $region84: #{decoder_forward.9} parent=77 // pred_check_branch
              %992 = sbr.rel target = $region86
            $region85: #{decoder_forward.9} parent=77 // pred_region
              loop: start=0, step=1, limit=1
              $region87: #{decoder_forward.9} parent=85 // loop_pre_header
                _
              $region88: #{decoder_forward.9} parent=85 // loop_header
                %s995 = sphi 0, %s999
                %p996 = scmp.ge.s32.totalorder %s995, 1
                %s1000 = sphi %s977, %s977
                %s1001 = sphi %s986, %s986
              $region89: #{decoder_forward.9} parent=85 // loop_header_branch
                %998 = sbr.rel (%p996) target = $region93
              $region90: #{decoder_forward.9} parent=85 // loop_body
                %v1002 = vld [vmem:[%s1000] sm:$0xff]
                %1003 = vst [vmem:[%s1001] sm:$0xff] %v1002
                %v1004 = vld [vmem:[%s1000 + $0x8] sm:$0xff]
                %1005 = vst [vmem:[%s1001 + $0x10] sm:$0xff] %v1004
                %v1006 = vld [vmem:[%s1000 + $0x10] sm:$0xff]
                %1007 = vst [vmem:[%s1001 + $0x20] sm:$0xff] %v1006
                %v1008 = vld [vmem:[%s1000 + $0x18] sm:$0xff]
                %1009 = vst [vmem:[%s1001 + $0x30] sm:$0xff] %v1008
                %v1010 = vld [vmem:[%s1000 + $0x20] sm:$0xff]
                %1011 = vst [vmem:[%s1001 + $0x40] sm:$0xff] %v1010
                %v1012 = vld [vmem:[%s1000 + $0x28] sm:$0xff]
                %1013 = vst [vmem:[%s1001 + $0x50] sm:$0xff] %v1012
                %v1014 = vld [vmem:[%s1000 + $0x30] sm:$0xff]
                %1015 = vst [vmem:[%s1001 + $0x60] sm:$0xff] %v1014
                %v1016 = vld [vmem:[%s1000 + $0x38] sm:$0xff]
                %1017 = vst [vmem:[%s1001 + $0x70] sm:$0xff] %v1016
                %v1018 = vld [vmem:[%s1000 + $0x40] sm:$0xff]
                %1019 = vst [vmem:[%s1001 + $0x80] sm:$0xff] %v1018
                %v1020 = vld [vmem:[%s1000 + $0x48] sm:$0xff]
                %1021 = vst [vmem:[%s1001 + $0x90] sm:$0xff] %v1020
                %v1022 = vld [vmem:[%s1000 + $0x50] sm:$0xff]
                %1023 = vst [vmem:[%s1001 + $0xa0] sm:$0xff] %v1022
                %v1024 = vld [vmem:[%s1000 + $0x58] sm:$0xff]
                %1025 = vst [vmem:[%s1001 + $0xb0] sm:$0xff] %v1024
                %v1026 = vld [vmem:[%s1000 + $0x60] sm:$0xff]
                %1027 = vst [vmem:[%s1001 + $0xc0] sm:$0xff] %v1026
                %v1028 = vld [vmem:[%s1000 + $0x68] sm:$0xff]
                %1029 = vst [vmem:[%s1001 + $0xd0] sm:$0xff] %v1028
                %v1030 = vld [vmem:[%s1000 + $0x70] sm:$0xff]
                %1031 = vst [vmem:[%s1001 + $0xe0] sm:$0xff] %v1030
                %v1032 = vld [vmem:[%s1000 + $0x78] sm:$0xff]
                %1033 = vst [vmem:[%s1001 + $0xf0] sm:$0xff] %v1032
              $region91: #{decoder_forward.9} parent=85 // loop_footer
                %s999 = sadd.s32 1, %s995
              $region92: #{decoder_forward.9} parent=85 // loop_footer_branch
                %994 = sbr.rel target = $region88
              $region93: #{decoder_forward.9} parent=85 // loop_exit
                _
            $region86: #{decoder_forward.9} parent=77 // pred_fallthru
              _
          $region78: #{decoder_forward.9} parent=73 // pred_fallthru
            _
          %1078 = vnop
        $region74: #{decoder_forward.9} parent=65 // pred_fallthru
          _
      $region66: #{decoder_forward.9} parent=5 // pred_fallthru
        _
      %p1079 = scmp.le.s32.totalorder 2, %s9
      // Predicated region
      $region109: #{decoder_forward.9} parent=5 // pred_check
        %p1080 = pneg %p1079
      $region110: #{decoder_forward.9} parent=5 // pred_check_branch
        %1082 = sbr.rel (%p1080) target = $region112
      $region111: #{decoder_forward.9} parent=5 // pred_region
        %s1083 = ssub.s32 %s9, 2
        // Predicated region
        $region113: #{decoder_forward.9} parent=111 // pred_check
          %p1084 = pneg %p130
        $region114: #{decoder_forward.9} parent=111 // pred_check_branch
          %1086 = sbr.rel (%p1084) target = $region116
        $region115: #{decoder_forward.9} parent=111 // pred_region
          %s1087 = sand.u32 %s115, 1
          %s1088 = sand.u32 %s115, 1
          %s1089 = smul.addr %s1088, 128
          %s1090 = scalar_lea.vmem [#allocation3], %s1089
        $region116: #{decoder_forward.9} parent=111 // pred_fallthru
          _
      $region112: #{decoder_forward.9} parent=5 // pred_fallthru
        _
    $region6: #{decoder_forward.9} parent=1 // loop_footer
      %s13 = sadd.s32 1, %s9
    $region7: #{decoder_forward.9} parent=1 // loop_footer_branch
      %8 = sbr.rel target = $region3
    $region8: #{decoder_forward.9} parent=1 // loop_exit
      _

// kernel: decoder_forward.10
$region0: #{decoder_forward.10}
  #allocation0 [shape = 'u32[]', space=smem, size = 0x4, offset = 0x4, fixed_abs, tag = 'smem constant byte address 0x4 - core index']
  #allocation1 [shape = 'u32[144,128]{1,0:T(1,128)}', space=vmem, size = 0x12000, scoped, tag = 'internal scratch']
  %s0 = inlined_call_operand.vmem [shape: bf16[512,128], index: 0, kind: input, shape index: {}]
  %s1 = inlined_call_operand.vmem [shape: bf16[128,256], index: 1, kind: input, shape index: {}]
  %s2 = inlined_call_operand.vmem [shape: f32[1,256], index: 2, kind: input, shape index: {}]
  %s3 = inlined_call_operand.vmem [shape: bf16[512,256], index: 3, kind: output, shape index: {}]
  %s4 = sld [smem:[#allocation0]]
  $region45: #{decoder_forward.10} parent=0
    _
  %s6 = ssub.s32 1, %s4
  %s7 = scalar_select 0, %s6, %s4
  loop: start=0, step=1, limit=4
  $region2: #{decoder_forward.10} parent=0 // loop_pre_header
    _
  $region3: #{decoder_forward.10} parent=0 // loop_header
    %s9 = sphi 0, %s13
    %p10 = scmp.ge.s32.totalorder %s9, 4
    %s16 = sphi 0, %s28
    %s17 = sphi 0, %s24
    %s18 = sphi 0, %s16
    %s19 = sphi 0, %s17
    %s20 = sphi 0, %s18
    %s21 = sphi 0, %s19
    %s31 = sphi 0, %s33
    %s34 = sphi 0, %s31
    %s35 = sphi 0, %s34
    %s51 = sphi 0, %s35
    %s57 = sphi 0, %s59
    %s60 = sphi 0, %s57
    %s61 = sphi 0, %s60
    %s77 = sphi 0, %s61
    %s83 = sphi 0, %s85
    %s86 = sphi 0, %s83
    %s87 = sphi 0, %s86
    %s103 = sphi 0, %s87
    %s111 = sphi 0, %s113
    %s114 = sphi 0, %s111
    %s115 = sphi 0, %s114
    %s131 = sphi 0, %s115
  $region4: #{decoder_forward.10} parent=0 // loop_header_branch
    %12 = sbr.rel (%p10) target = $region8
  $region5: #{decoder_forward.10} parent=0 // loop_body
    %s14 = ssub.s32 %s9, 1
    %s15 = ssub.s32 %s9, 2
    %s22 = sadd.s32 1, %s17
    %p23 = scmp.ge.s32.totalorder %s22, 1
    %s24 = scalar_select %p23, 0, %s22
    %s25 = sadd.s32 1, %s16
    %s26 = scalar_select %p23, %s25, %s16
    %p27 = scmp.ge.s32.totalorder %s26, 2
    %s28 = scalar_select %p27, 0, %s26
    %s29 = ssub.s32 %s16, %s28
    %p30 = scmp.eq.s32.totalorder %s29, 0
    %s32 = sadd.s32 %s31, 1
    %s33 = scalar_select %p30, %s31, %s32
    %p36 = pneg %p30
    %p37 = scmp.eq.s32.totalorder %s9, 1
    %p38 = por %p36, %p37
    %p39 = scmp.ne.s32.totalorder %s31, %s34
    %p40 = scmp.eq.s32.totalorder %s9, 0
    %p41 = por %p39, %p40
    %p42 = scmp.ne.s32.totalorder %s31, %s34
    %p43 = scmp.eq.s32.totalorder %s14, 1
    %p44 = por %p42, %p43
    %p45 = scmp.ne.s32.totalorder %s34, %s35
    %p46 = scmp.eq.s32.totalorder %s14, 0
    %p47 = por %p45, %p46
    %p48 = scmp.ne.s32.totalorder %s34, %s35
    %p49 = scmp.eq.s32.totalorder %s15, 1
    %p50 = por %p48, %p49
    %p52 = scmp.ne.s32.totalorder %s35, %s51
    %p53 = scmp.eq.s32.totalorder %s15, 0
    %p54 = por %p52, %p53
    %s55 = ssub.s32 %s17, %s24
    %p56 = scmp.eq.s32.totalorder %s55, 0
    %s58 = sadd.s32 %s57, 1
    %s59 = scalar_select %p56, %s57, %s58
    %p62 = pneg %p56
    %p63 = scmp.eq.s32.totalorder %s9, 1
    %p64 = por %p62, %p63
    %p65 = scmp.ne.s32.totalorder %s57, %s60
    %p66 = scmp.eq.s32.totalorder %s9, 0
    %p67 = por %p65, %p66
    %p68 = scmp.ne.s32.totalorder %s57, %s60
    %p69 = scmp.eq.s32.totalorder %s14, 1
    %p70 = por %p68, %p69
    %p71 = scmp.ne.s32.totalorder %s60, %s61
    %p72 = scmp.eq.s32.totalorder %s14, 0
    %p73 = por %p71, %p72
    %p74 = scmp.ne.s32.totalorder %s60, %s61
    %p75 = scmp.eq.s32.totalorder %s15, 1
    %p76 = por %p74, %p75
    %p78 = scmp.ne.s32.totalorder %s61, %s77
    %p79 = scmp.eq.s32.totalorder %s15, 0
    %p80 = por %p78, %p79
    %s81 = ssub.s32 %s17, %s24
    %p82 = scmp.eq.s32.totalorder %s81, 0
    %s84 = sadd.s32 %s83, 1
    %s85 = scalar_select %p82, %s83, %s84
    %p88 = pneg %p82
    %p89 = scmp.eq.s32.totalorder %s9, 1
    %p90 = por %p88, %p89
    %p91 = scmp.ne.s32.totalorder %s83, %s86
    %p92 = scmp.eq.s32.totalorder %s9, 0
    %p93 = por %p91, %p92
    %p94 = scmp.ne.s32.totalorder %s83, %s86
    %p95 = scmp.eq.s32.totalorder %s14, 1
    %p96 = por %p94, %p95
    %p97 = scmp.ne.s32.totalorder %s86, %s87
    %p98 = scmp.eq.s32.totalorder %s14, 0
    %p99 = por %p97, %p98
    %p100 = scmp.ne.s32.totalorder %s86, %s87
    %p101 = scmp.eq.s32.totalorder %s15, 1
    %p102 = por %p100, %p101
    %p104 = scmp.ne.s32.totalorder %s87, %s103
    %p105 = scmp.eq.s32.totalorder %s15, 0
    %p106 = por %p104, %p105
    %s107 = ssub.s32 %s16, %s28
    %s108 = ssub.s32 %s17, %s24
    %s109 = sor.u32 %s107, %s108
    %p110 = scmp.eq.s32.totalorder %s109, 0
    %s112 = sadd.s32 %s111, 1
    %s113 = scalar_select %p110, %s111, %s112
    %p116 = pneg %p110
    %p117 = scmp.eq.s32.totalorder %s9, 1
    %p118 = por %p116, %p117
    %p119 = scmp.ne.s32.totalorder %s111, %s114
    %p120 = scmp.eq.s32.totalorder %s9, 0
    %p121 = por %p119, %p120
    %p122 = scmp.ne.s32.totalorder %s111, %s114
    %p123 = scmp.eq.s32.totalorder %s14, 1
    %p124 = por %p122, %p123
    %p125 = scmp.ne.s32.totalorder %s114, %s115
    %p126 = scmp.eq.s32.totalorder %s14, 0
    %p127 = por %p125, %p126
    %p128 = scmp.ne.s32.totalorder %s114, %s115
    %p129 = scmp.eq.s32.totalorder %s15, 1
    %p130 = por %p128, %p129
    %p132 = scmp.ne.s32.totalorder %s115, %s131
    %p133 = scmp.eq.s32.totalorder %s15, 0
    %p134 = por %p132, %p133
    %p135 = scmp.le.s32.totalorder 1, %s9
    %p136 = scmp.lt.s32.totalorder %s9, 3
    %p137 = pnand %p135, %p136
    %p138 = pneg %p137
    // Predicated region
    $region9: #{decoder_forward.10} parent=5 // pred_check
      _
    $region10: #{decoder_forward.10} parent=5 // pred_check_branch
      %140 = sbr.rel (%p137) target = $region12
    $region11: #{decoder_forward.10} parent=5 // pred_region
      %s141 = ssub.s32 %s9, 1
      // Predicated region
      $region13: #{decoder_forward.10} parent=11 // pred_check
        %p142 = pneg %p73
      $region14: #{decoder_forward.10} parent=11 // pred_check_branch
        %144 = sbr.rel (%p142) target = $region16
      $region15: #{decoder_forward.10} parent=11 // pred_region
        %s145 = smul.u32 2, %s19
        %p146 = scmp.lt.s32.totalorder %s145, 1
        %s147 = scalar_select %p146, %s145, 1
        %s148 = smul.addr %s147, 4
        %s149 = scalar_lea.vmem %s1, %s148
        %s150 = smul.u32 2, %s19
      $region16: #{decoder_forward.10} parent=11 // pred_fallthru
        _
      // Predicated region
      $region17: #{decoder_forward.10} parent=11 // pred_check
        %p151 = pneg %p99
      $region18: #{decoder_forward.10} parent=11 // pred_check_branch
        %153 = sbr.rel (%p151) target = $region20
      $region19: #{decoder_forward.10} parent=11 // pred_region
        %s154 = smul.u32 2, %s19
        %p155 = scmp.lt.s32.totalorder %s154, 1
        %s156 = scalar_select %p155, %s154, 1
        %s157 = scalar_lea.vmem %s2, %s156
        %s158 = smul.u32 2, %s19
      $region20: #{decoder_forward.10} parent=11 // pred_fallthru
        _
    $region12: #{decoder_forward.10} parent=5 // pred_fallthru
      _
    %p159 = scmp.lt.s32.totalorder %s9, 2
    // Predicated region
    $region21: #{decoder_forward.10} parent=5 // pred_check
      %p160 = pneg %p159
    $region22: #{decoder_forward.10} parent=5 // pred_check_branch
      %162 = sbr.rel (%p160) target = $region24
    $region23: #{decoder_forward.10} parent=5 // pred_region
      // Predicated region
      $region25: #{decoder_forward.10} parent=23 // pred_check
        %p163 = pneg %p41
      $region26: #{decoder_forward.10} parent=23 // pred_check_branch
        %165 = sbr.rel (%p163) target = $region28
      $region27: #{decoder_forward.10} parent=23 // pred_region
        %s166 = smul.u32 32, %s16
        %p167 = scmp.lt.s32.totalorder %s166, 63
        %s168 = scalar_select %p167, %s166, 63
        %s169 = smul.addr %s168, 4
        %s170 = scalar_lea.vmem %s0, %s169
        %s171 = smul.u32 32, %s16
      $region28: #{decoder_forward.10} parent=23 // pred_fallthru
        _
    $region24: #{decoder_forward.10} parent=5 // pred_fallthru
      _
    %p172 = scmp.le.s32.totalorder 1, %s9
    %p173 = scmp.lt.s32.totalorder %s9, 3
    %p174 = pnand %p172, %p173
    %p175 = pneg %p174
    // Predicated region
    $region29: #{decoder_forward.10} parent=5 // pred_check
      _
    $region30: #{decoder_forward.10} parent=5 // pred_check_branch
      %177 = sbr.rel (%p174) target = $region32
    $region31: #{decoder_forward.10} parent=5 // pred_region
      %s178 = ssub.s32 %s9, 1
      %s179 = smul.u32 32, %s18
      %p180 = scmp.lt.s32.totalorder %s179, 63
      %s181 = scalar_select %p180, %s179, 63
      %s182 = smul.addr %s181, 4
      %s183 = scalar_lea.vmem %s0, %s182
      %p184 = pneg %p47
      %p185 = pneg %p44
      %s186 = smul.u32 2, %s19
      %p187 = scmp.lt.s32.totalorder %s186, 1
      %s188 = scalar_select %p187, %s186, 1
      %s189 = smul.addr %s188, 4
      %s190 = scalar_lea.vmem %s1, %s189
      %p191 = pneg %p73
      %p192 = pneg %p70
      %s193 = smul.u32 2, %s19
      %p194 = scmp.lt.s32.totalorder %s193, 1
      %s195 = scalar_select %p194, %s193, 1
      %s196 = scalar_lea.vmem %s2, %s195
      %p197 = pneg %p99
      %p198 = pneg %p96
      %p199 = pneg %p127
      %p200 = pneg %p124
      %s201 = smul.u32 32, %s18
      %s202 = smul.u32 2, %s19
      %p203 = scmp.lt.s32.totalorder %s201, 63
      %s204 = scalar_select %p203, %s201, 63
      %p205 = scmp.lt.s32.totalorder %s202, 1
      %s206 = scalar_select %p205, %s202, 1
      %s207 = smul.addr %s204, 2
      %s208 = sadd.s32 %s206, %s207
      %s209 = smul.addr %s208, 4
      %s210 = scalar_lea.vmem %s3, %s209
      %s211 = smul.u32 32, %s18
      %p212 = scmp.lt.s32.totalorder %s211, 63
      %s213 = scalar_select %p212, %s211, 63
      %s214 = smul.addr %s213, 4
      %s215 = scalar_lea.vmem %s0, %s214
      %s216 = smul.u32 32, %s18
      %s217 = smul.u32 2, %s19
      %p218 = scmp.lt.s32.totalorder %s217, 1
      %s219 = scalar_select %p218, %s217, 1
      %s220 = smul.addr %s219, 4
      %s221 = scalar_lea.vmem %s1, %s220
      %s222 = smul.u32 2, %s19
      %s223 = smul.u32 2, %s19
      %p224 = scmp.lt.s32.totalorder %s223, 1
      %s225 = scalar_select %p224, %s223, 1
      %s226 = scalar_lea.vmem %s2, %s225
      %s227 = smul.u32 2, %s19
      %s228 = smul.u32 32, %s18
      %s229 = smul.u32 2, %s19
      %p230 = scmp.lt.s32.totalorder %s228, 63
      %s231 = scalar_select %p230, %s228, 63
      %p232 = scmp.lt.s32.totalorder %s229, 1
      %s233 = scalar_select %p232, %s229, 1
      %s234 = smul.addr %s231, 2
      %s235 = sadd.s32 %s233, %s234
      %s236 = smul.addr %s235, 4
      %s237 = scalar_lea.vmem %s3, %s236
      %s238 = smul.u32 32, %s18
      %s239 = smul.u32 2, %s19
      %v241 = vld [vmem:[%s215] sm:$0xf]
      %v242 = vld [vmem:[%s215 + $0x4] sm:$0xf]
      %v243 = vld [vmem:[%s215 + $0x8] sm:$0xf]
      %v244 = vld [vmem:[%s215 + $0xc] sm:$0xf]
      %v245 = vld [vmem:[%s215 + $0x10] sm:$0xf]
      %v246 = vld [vmem:[%s215 + $0x14] sm:$0xf]
      %v247 = vld [vmem:[%s215 + $0x18] sm:$0xf]
      %v248 = vld [vmem:[%s215 + $0x1c] sm:$0xf]
      %v249 = vld [vmem:[%s215 + $0x20] sm:$0xf]
      %v250 = vld [vmem:[%s215 + $0x24] sm:$0xf]
      %v251 = vld [vmem:[%s215 + $0x28] sm:$0xf]
      %v252 = vld [vmem:[%s215 + $0x2c] sm:$0xf]
      %v253 = vld [vmem:[%s215 + $0x30] sm:$0xf]
      %v254 = vld [vmem:[%s215 + $0x34] sm:$0xf]
      %v255 = vld [vmem:[%s215 + $0x38] sm:$0xf]
      %v256 = vld [vmem:[%s215 + $0x3c] sm:$0xf]
      %v257 = vld [vmem:[%s215 + $0x40] sm:$0xf]
      %v258 = vld [vmem:[%s215 + $0x44] sm:$0xf]
      %v259 = vld [vmem:[%s215 + $0x48] sm:$0xf]
      %v260 = vld [vmem:[%s215 + $0x4c] sm:$0xf]
      %v261 = vld [vmem:[%s215 + $0x50] sm:$0xf]
      %v262 = vld [vmem:[%s215 + $0x54] sm:$0xf]
      %v263 = vld [vmem:[%s215 + $0x58] sm:$0xf]
      %v264 = vld [vmem:[%s215 + $0x5c] sm:$0xf]
      %v265 = vld [vmem:[%s215 + $0x60] sm:$0xf]
      %v266 = vld [vmem:[%s215 + $0x64] sm:$0xf]
      %v267 = vld [vmem:[%s215 + $0x68] sm:$0xf]
      %v268 = vld [vmem:[%s215 + $0x6c] sm:$0xf]
      %v269 = vld [vmem:[%s215 + $0x70] sm:$0xf]
      %v270 = vld [vmem:[%s215 + $0x74] sm:$0xf]
      %v271 = vld [vmem:[%s215 + $0x78] sm:$0xf]
      %v272 = vld [vmem:[%s215 + $0x7c] sm:$0xf]
      %v273 = vld [vmem:[%s221] sm:$0xff]
      %v274 = vld [vmem:[%s221 + $0x8] sm:$0xff]
      %v275 = vld [vmem:[%s221 + $0x10] sm:$0xff]
      %v276 = vld [vmem:[%s221 + $0x18] sm:$0xff]
      %v277 = vld [vmem:[%s221 + $0x20] sm:$0xff]
      %v278 = vld [vmem:[%s221 + $0x28] sm:$0xff]
      %v279 = vld [vmem:[%s221 + $0x30] sm:$0xff]
      %v280 = vld [vmem:[%s221 + $0x38] sm:$0xff]
      %v281 = vld [vmem:[%s221 + $0x40] sm:$0xff]
      %v282 = vld [vmem:[%s221 + $0x48] sm:$0xff]
      %v283 = vld [vmem:[%s221 + $0x50] sm:$0xff]
      %v284 = vld [vmem:[%s221 + $0x58] sm:$0xff]
      %v285 = vld [vmem:[%s221 + $0x60] sm:$0xff]
      %v286 = vld [vmem:[%s221 + $0x68] sm:$0xff]
      %v287 = vld [vmem:[%s221 + $0x70] sm:$0xff]
      %v288 = vld [vmem:[%s221 + $0x78] sm:$0xff]
      %v289 = vld [vmem:[%s226] sm:$0x3]
      %v291 = vlaneseq
      %v292 = vshrl.u32 %v291, 7
      %v293 = vsub.s32 0, %v292
      %v294 = vrot.slane %v289, %v293
      %v295 = vlaneseq
      %v296 = vshrl.u32 %v295, 7
      %v297 = vsub.s32 1, %v296
      %v298 = vrot.slane %v289, %v297
      %v333 = vunpack.c.l.b16 %v241
      %v334 = vunpack.c.l.b16 %v242
      %v335 = vunpack.c.l.b16 %v243
      %v336 = vunpack.c.l.b16 %v244
      %v337 = vunpack.c.l.b16 %v245
      %v338 = vunpack.c.l.b16 %v246
      %v339 = vunpack.c.l.b16 %v247
      %v340 = vunpack.c.l.b16 %v248
      %v341 = vunpack.c.l.b16 %v249
      %v342 = vunpack.c.l.b16 %v250
      %v343 = vunpack.c.l.b16 %v251
      %v344 = vunpack.c.l.b16 %v252
      %v345 = vunpack.c.l.b16 %v253
      %v346 = vunpack.c.l.b16 %v254
      %v347 = vunpack.c.l.b16 %v255
      %v348 = vunpack.c.l.b16 %v256
      %v349 = vunpack.c.l.b16 %v257
      %v350 = vunpack.c.l.b16 %v258
      %v351 = vunpack.c.l.b16 %v259
      %v352 = vunpack.c.l.b16 %v260
      %v353 = vunpack.c.l.b16 %v261
      %v354 = vunpack.c.l.b16 %v262
      %v355 = vunpack.c.l.b16 %v263
      %v356 = vunpack.c.l.b16 %v264
      %v357 = vunpack.c.l.b16 %v265
      %v358 = vunpack.c.l.b16 %v266
      %v359 = vunpack.c.l.b16 %v267
      %v360 = vunpack.c.l.b16 %v268
      %v361 = vunpack.c.l.b16 %v269
      %v362 = vunpack.c.l.b16 %v270
      %v363 = vunpack.c.l.b16 %v271
      %v364 = vunpack.c.l.b16 %v272
      %v365 = vpack.c.b16 %v334, %v333
      %v366 = vpack.c.b16 %v336, %v335
      %v367 = vpack.c.b16 %v338, %v337
      %v368 = vpack.c.b16 %v340, %v339
      %v369 = vpack.c.b16 %v342, %v341
      %v370 = vpack.c.b16 %v344, %v343
      %v371 = vpack.c.b16 %v346, %v345
      %v372 = vpack.c.b16 %v348, %v347
      %v373 = vpack.c.b16 %v350, %v349
      %v374 = vpack.c.b16 %v352, %v351
      %v375 = vpack.c.b16 %v354, %v353
      %v376 = vpack.c.b16 %v356, %v355
      %v377 = vpack.c.b16 %v358, %v357
      %v378 = vpack.c.b16 %v360, %v359
      %v379 = vpack.c.b16 %v362, %v361
      %v380 = vpack.c.b16 %v364, %v363
      %v413 = vunpack.c.l.b16 %v273
      %v414 = vunpack.c.h.b16 %v273
      %v415 = vunpack.c.l.b16 %v274
      %v416 = vunpack.c.h.b16 %v274
      %v417 = vunpack.c.l.b16 %v275
      %v418 = vunpack.c.h.b16 %v275
      %v419 = vunpack.c.l.b16 %v276
      %v420 = vunpack.c.h.b16 %v276
      %v421 = vunpack.c.l.b16 %v277
      %v422 = vunpack.c.h.b16 %v277
      %v423 = vunpack.c.l.b16 %v278
      %v424 = vunpack.c.h.b16 %v278
      %v425 = vunpack.c.l.b16 %v279
      %v426 = vunpack.c.h.b16 %v279
      %v427 = vunpack.c.l.b16 %v280
      %v428 = vunpack.c.h.b16 %v280
      %v429 = vunpack.c.l.b16 %v281
      %v430 = vunpack.c.h.b16 %v281
      %v431 = vunpack.c.l.b16 %v282
      %v432 = vunpack.c.h.b16 %v282
      %v433 = vunpack.c.l.b16 %v283
      %v434 = vunpack.c.h.b16 %v283
      %v435 = vunpack.c.l.b16 %v284
      %v436 = vunpack.c.h.b16 %v284
      %v437 = vunpack.c.l.b16 %v285
      %v438 = vunpack.c.h.b16 %v285
      %v439 = vunpack.c.l.b16 %v286
      %v440 = vunpack.c.h.b16 %v286
      %v441 = vunpack.c.l.b16 %v287
      %v442 = vunpack.c.h.b16 %v287
      %v443 = vunpack.c.l.b16 %v288
      %v444 = vunpack.c.h.b16 %v288
      %v445 = vpack.c.b16 %v415, %v413
      %v446 = vpack.c.b16 %v416, %v414
      %v447 = vpack.c.b16 %v419, %v417
      %v448 = vpack.c.b16 %v420, %v418
      %v449 = vpack.c.b16 %v423, %v421
      %v450 = vpack.c.b16 %v424, %v422
      %v451 = vpack.c.b16 %v427, %v425
      %v452 = vpack.c.b16 %v428, %v426
      %v453 = vpack.c.b16 %v431, %v429
      %v454 = vpack.c.b16 %v432, %v430
      %v455 = vpack.c.b16 %v435, %v433
      %v456 = vpack.c.b16 %v436, %v434
      %v457 = vpack.c.b16 %v439, %v437
      %v458 = vpack.c.b16 %v440, %v438
      %v459 = vpack.c.b16 %v443, %v441
      %v460 = vpack.c.b16 %v444, %v442
      %477 = vmatprep.subr.bf16.mxu0 %v446
      %478 = vmatpush1.bf16.msra.mxu0 %v445
      %479 = vmatprep.subr.bf16.mxu0 %v448
      %480 = vmatpush1.bf16.msra.mxu0 %v447
      %481 = vmatprep.subr.bf16.mxu0 %v450
      %482 = vmatpush1.bf16.msra.mxu0 %v449
      %483 = vmatprep.subr.bf16.mxu0 %v452
      %484 = vmatpush1.bf16.msra.mxu0 %v451
      %485 = vmatprep.subr.bf16.mxu0 %v454
      %486 = vmatpush1.bf16.msra.mxu0 %v453
      %487 = vmatprep.subr.bf16.mxu0 %v456
      %488 = vmatpush1.bf16.msra.mxu0 %v455
      %489 = vmatprep.subr.bf16.mxu0 %v458
      %490 = vmatpush1.bf16.msra.mxu0 %v457
      %491 = vmatprep.subr.bf16.mxu0 %v460
      %492 = vmatpush1.bf16.msra.mxu0 %v459
      %493 = vmatprep.subr.bf16.mxu0 0
      %494 = vmatpush1.bf16.msra.mxu0 0
      %495 = vmatprep.subr.bf16.mxu0 0
      %496 = vmatpush1.bf16.msra.mxu0 0
      %497 = vmatprep.subr.bf16.mxu0 0
      %498 = vmatpush1.bf16.msra.mxu0 0
      %499 = vmatprep.subr.bf16.mxu0 0
      %500 = vmatpush1.bf16.msra.mxu0 0
      %501 = vmatprep.subr.bf16.mxu0 0
      %502 = vmatpush1.bf16.msra.mxu0 0
      %503 = vmatprep.subr.bf16.mxu0 0
      %504 = vmatpush1.bf16.msra.mxu0 0
      %505 = vmatprep.subr.bf16.mxu0 0
      %506 = vmatpush1.bf16.msra.mxu0 0
      %507 = vmatprep.subr.bf16.mxu0 0
      %508 = vmatpush1.bf16.msra.mxu0 0
      %509 = vmatprep.mubr.bf16.mxu0 0
      %510 = vmatmul.mubr.bf16.gmra.mrb[0].mxu0 %v365
      %v511 = vpop.f32.mrb[0].mxu0
      %v512 = vadd.f32 %v294, %v511
      %v513 = vpop.f32.mrb[0].mxu0
      %v514 = vadd.f32 %v298, %v513
      %v515 = vpop.f32.mrb[0].mxu0
      %v516 = vadd.f32 %v294, %v515
      %v517 = vpop.f32.mrb[0].mxu0
      %v518 = vadd.f32 %v298, %v517
      %519 = vmatprep.mubr.bf16.mxu0 0
      %520 = vmatmul.mubr.bf16.gmra.mrb[0].mxu0 %v366
      %v521 = vpop.f32.mrb[0].mxu0
      %v522 = vadd.f32 %v294, %v521
      %v523 = vpop.f32.mrb[0].mxu0
      %v524 = vadd.f32 %v298, %v523
      %v525 = vpop.f32.mrb[0].mxu0
      %v526 = vadd.f32 %v294, %v525
      %v527 = vpop.f32.mrb[0].mxu0
      %v528 = vadd.f32 %v298, %v527
      %529 = vmatprep.mubr.bf16.mxu0 0
      %530 = vmatmul.mubr.bf16.gmra.mrb[0].mxu0 %v367
      %v531 = vpop.f32.mrb[0].mxu0
      %v532 = vadd.f32 %v294, %v531
      %v533 = vpop.f32.mrb[0].mxu0
      %v534 = vadd.f32 %v298, %v533
      %v535 = vpop.f32.mrb[0].mxu0
      %v536 = vadd.f32 %v294, %v535
      %v537 = vpop.f32.mrb[0].mxu0
      %v538 = vadd.f32 %v298, %v537
      %539 = vmatprep.mubr.bf16.mxu0 0
      %540 = vmatmul.mubr.bf16.gmra.mrb[0].mxu0 %v368
      %v541 = vpop.f32.mrb[0].mxu0
      %v542 = vadd.f32 %v294, %v541
      %v543 = vpop.f32.mrb[0].mxu0
      %v544 = vadd.f32 %v298, %v543
      %v545 = vpop.f32.mrb[0].mxu0
      %v546 = vadd.f32 %v294, %v545
      %v547 = vpop.f32.mrb[0].mxu0
      %v548 = vadd.f32 %v298, %v547
      %549 = vmatprep.mubr.bf16.mxu0 0
      %550 = vmatmul.mubr.bf16.gmra.mrb[0].mxu0 %v369
      %v551 = vpop.f32.mrb[0].mxu0
      %v552 = vadd.f32 %v294, %v551
      %v553 = vpop.f32.mrb[0].mxu0
      %v554 = vadd.f32 %v298, %v553
      %v555 = vpop.f32.mrb[0].mxu0
      %v556 = vadd.f32 %v294, %v555
      %v557 = vpop.f32.mrb[0].mxu0
      %v558 = vadd.f32 %v298, %v557
      %559 = vmatprep.mubr.bf16.mxu0 0
      %560 = vmatmul.mubr.bf16.gmra.mrb[0].mxu0 %v370
      %v561 = vpop.f32.mrb[0].mxu0
      %v562 = vadd.f32 %v294, %v561
      %v563 = vpop.f32.mrb[0].mxu0
      %v564 = vadd.f32 %v298, %v563
      %v565 = vpop.f32.mrb[0].mxu0
      %v566 = vadd.f32 %v294, %v565
      %v567 = vpop.f32.mrb[0].mxu0
      %v568 = vadd.f32 %v298, %v567
      %569 = vmatprep.mubr.bf16.mxu0 0
      %570 = vmatmul.mubr.bf16.gmra.mrb[0].mxu0 %v371
      %v571 = vpop.f32.mrb[0].mxu0
      %v572 = vadd.f32 %v294, %v571
      %v573 = vpop.f32.mrb[0].mxu0
      %v574 = vadd.f32 %v298, %v573
      %v575 = vpop.f32.mrb[0].mxu0
      %v576 = vadd.f32 %v294, %v575
      %v577 = vpop.f32.mrb[0].mxu0
      %v578 = vadd.f32 %v298, %v577
      %579 = vmatprep.mubr.bf16.mxu0 0
      %580 = vmatmul.mubr.bf16.gmra.mrb[0].mxu0 %v372
      %v581 = vpop.f32.mrb[0].mxu0
      %v582 = vadd.f32 %v294, %v581
      %v583 = vpop.f32.mrb[0].mxu0
      %v584 = vadd.f32 %v298, %v583
      %v585 = vpop.f32.mrb[0].mxu0
      %v586 = vadd.f32 %v294, %v585
      %v587 = vpop.f32.mrb[0].mxu0
      %v588 = vadd.f32 %v298, %v587
      %589 = vmatprep.mubr.bf16.mxu0 0
      %590 = vmatmul.mubr.bf16.gmra.mrb[0].mxu0 %v373
      %v591 = vpop.f32.mrb[0].mxu0
      %v592 = vadd.f32 %v294, %v591
      %v593 = vpop.f32.mrb[0].mxu0
      %v594 = vadd.f32 %v298, %v593
      %v595 = vpop.f32.mrb[0].mxu0
      %v596 = vadd.f32 %v294, %v595
      %v597 = vpop.f32.mrb[0].mxu0
      %v598 = vadd.f32 %v298, %v597
      %599 = vmatprep.mubr.bf16.mxu0 0
      %600 = vmatmul.mubr.bf16.gmra.mrb[0].mxu0 %v374
      %v601 = vpop.f32.mrb[0].mxu0
      %v602 = vadd.f32 %v294, %v601
      %v603 = vpop.f32.mrb[0].mxu0
      %v604 = vadd.f32 %v298, %v603
      %v605 = vpop.f32.mrb[0].mxu0
      %v606 = vadd.f32 %v294, %v605
      %v607 = vpop.f32.mrb[0].mxu0
      %v608 = vadd.f32 %v298, %v607
      %609 = vmatprep.mubr.bf16.mxu0 0
      %610 = vmatmul.mubr.bf16.gmra.mrb[0].mxu0 %v375
      %v611 = vpop.f32.mrb[0].mxu0
      %v612 = vadd.f32 %v294, %v611
      %v613 = vpop.f32.mrb[0].mxu0
      %v614 = vadd.f32 %v298, %v613
      %v615 = vpop.f32.mrb[0].mxu0
      %v616 = vadd.f32 %v294, %v615
      %v617 = vpop.f32.mrb[0].mxu0
      %v618 = vadd.f32 %v298, %v617
      %619 = vmatprep.mubr.bf16.mxu0 0
      %620 = vmatmul.mubr.bf16.gmra.mrb[0].mxu0 %v376
      %v621 = vpop.f32.mrb[0].mxu0
      %v622 = vadd.f32 %v294, %v621
      %v623 = vpop.f32.mrb[0].mxu0
      %v624 = vadd.f32 %v298, %v623
      %v625 = vpop.f32.mrb[0].mxu0
      %v626 = vadd.f32 %v294, %v625
      %v627 = vpop.f32.mrb[0].mxu0
      %v628 = vadd.f32 %v298, %v627
      %629 = vmatprep.mubr.bf16.mxu0 0
      %630 = vmatmul.mubr.bf16.gmra.mrb[0].mxu0 %v377
      %v631 = vpop.f32.mrb[0].mxu0
      %v632 = vadd.f32 %v294, %v631
      %v633 = vpop.f32.mrb[0].mxu0
      %v634 = vadd.f32 %v298, %v633
      %v635 = vpop.f32.mrb[0].mxu0
      %v636 = vadd.f32 %v294, %v635
      %v637 = vpop.f32.mrb[0].mxu0
      %v638 = vadd.f32 %v298, %v637
      %639 = vmatprep.mubr.bf16.mxu0 0
      %640 = vmatmul.mubr.bf16.gmra.mrb[0].mxu0 %v378
      %v641 = vpop.f32.mrb[0].mxu0
      %v642 = vadd.f32 %v294, %v641
      %v643 = vpop.f32.mrb[0].mxu0
      %v644 = vadd.f32 %v298, %v643
      %v645 = vpop.f32.mrb[0].mxu0
      %v646 = vadd.f32 %v294, %v645
      %v647 = vpop.f32.mrb[0].mxu0
      %v648 = vadd.f32 %v298, %v647
      %649 = vmatprep.mubr.bf16.mxu0 0
      %650 = vmatmul.mubr.bf16.gmra.mrb[0].mxu0 %v379
      %v651 = vpop.f32.mrb[0].mxu0
      %v652 = vadd.f32 %v294, %v651
      %v653 = vpop.f32.mrb[0].mxu0
      %v654 = vadd.f32 %v298, %v653
      %v655 = vpop.f32.mrb[0].mxu0
      %v656 = vadd.f32 %v294, %v655
      %v657 = vpop.f32.mrb[0].mxu0
      %v658 = vadd.f32 %v298, %v657
      %659 = vmatprep.mubr.bf16.mxu0 0
      %660 = vmatmul.mubr.bf16.gmra.mrb[0].mxu0 %v380
      %v661 = vpop.f32.mrb[0].mxu0
      %v662 = vadd.f32 %v294, %v661
      %v663 = vpop.f32.mrb[0].mxu0
      %v664 = vadd.f32 %v298, %v663
      %v665 = vpop.f32.mrb[0].mxu0
      %v666 = vadd.f32 %v294, %v665
      %v667 = vpop.f32.mrb[0].mxu0
      %v668 = vadd.f32 %v298, %v667
      %669 = vdwg.mxu0
      %v670 = vmul.f32 %v512, 0.2
      %v671 = vmul.f32 %v514, 0.2
      %v672 = vmul.f32 %v516, 0.2
      %v673 = vmul.f32 %v518, 0.2
      %v674 = vmul.f32 %v522, 0.2
      %v675 = vmul.f32 %v524, 0.2
      %v676 = vmul.f32 %v526, 0.2
      %v677 = vmul.f32 %v528, 0.2
      %v678 = vmul.f32 %v532, 0.2
      %v679 = vmul.f32 %v534, 0.2
      %v680 = vmul.f32 %v536, 0.2
      %v681 = vmul.f32 %v538, 0.2
      %v682 = vmul.f32 %v542, 0.2
      %v683 = vmul.f32 %v544, 0.2
      %v684 = vmul.f32 %v546, 0.2
      %v685 = vmul.f32 %v548, 0.2
      %v686 = vmul.f32 %v552, 0.2
      %v687 = vmul.f32 %v554, 0.2
      %v688 = vmul.f32 %v556, 0.2
      %v689 = vmul.f32 %v558, 0.2
      %v690 = vmul.f32 %v562, 0.2
      %v691 = vmul.f32 %v564, 0.2
      %v692 = vmul.f32 %v566, 0.2
      %v693 = vmul.f32 %v568, 0.2
      %v694 = vmul.f32 %v572, 0.2
      %v695 = vmul.f32 %v574, 0.2
      %v696 = vmul.f32 %v576, 0.2
      %v697 = vmul.f32 %v578, 0.2
      %v698 = vmul.f32 %v582, 0.2
      %v699 = vmul.f32 %v584, 0.2
      %v700 = vmul.f32 %v586, 0.2
      %v701 = vmul.f32 %v588, 0.2
      %v702 = vmul.f32 %v592, 0.2
      %v703 = vmul.f32 %v594, 0.2
      %v704 = vmul.f32 %v596, 0.2
      %v705 = vmul.f32 %v598, 0.2
      %v706 = vmul.f32 %v602, 0.2
      %v707 = vmul.f32 %v604, 0.2
      %v708 = vmul.f32 %v606, 0.2
      %v709 = vmul.f32 %v608, 0.2
      %v710 = vmul.f32 %v612, 0.2
      %v711 = vmul.f32 %v614, 0.2
      %v712 = vmul.f32 %v616, 0.2
      %v713 = vmul.f32 %v618, 0.2
      %v714 = vmul.f32 %v622, 0.2
      %v715 = vmul.f32 %v624, 0.2
      %v716 = vmul.f32 %v626, 0.2
      %v717 = vmul.f32 %v628, 0.2
      %v718 = vmul.f32 %v632, 0.2
      %v719 = vmul.f32 %v634, 0.2
      %v720 = vmul.f32 %v636, 0.2
      %v721 = vmul.f32 %v638, 0.2
      %v722 = vmul.f32 %v642, 0.2
      %v723 = vmul.f32 %v644, 0.2
      %v724 = vmul.f32 %v646, 0.2
      %v725 = vmul.f32 %v648, 0.2
      %v726 = vmul.f32 %v652, 0.2
      %v727 = vmul.f32 %v654, 0.2
      %v728 = vmul.f32 %v656, 0.2
      %v729 = vmul.f32 %v658, 0.2
      %v730 = vmul.f32 %v662, 0.2
      %v731 = vmul.f32 %v664, 0.2
      %v732 = vmul.f32 %v666, 0.2
      %v733 = vmul.f32 %v668, 0.2
      %v734 = vmax.f32 %v512, %v670
      %v735 = vmax.f32 %v514, %v671
      %v736 = vmax.f32 %v516, %v672
      %v737 = vmax.f32 %v518, %v673
      %v738 = vmax.f32 %v522, %v674
      %v739 = vmax.f32 %v524, %v675
      %v740 = vmax.f32 %v526, %v676
      %v741 = vmax.f32 %v528, %v677
      %v742 = vmax.f32 %v532, %v678
      %v743 = vmax.f32 %v534, %v679
      %v744 = vmax.f32 %v536, %v680
      %v745 = vmax.f32 %v538, %v681
      %v746 = vmax.f32 %v542, %v682
      %v747 = vmax.f32 %v544, %v683
      %v748 = vmax.f32 %v546, %v684
      %v749 = vmax.f32 %v548, %v685
      %v750 = vmax.f32 %v552, %v686
      %v751 = vmax.f32 %v554, %v687
      %v752 = vmax.f32 %v556, %v688
      %v753 = vmax.f32 %v558, %v689
      %v754 = vmax.f32 %v562, %v690
      %v755 = vmax.f32 %v564, %v691
      %v756 = vmax.f32 %v566, %v692
      %v757 = vmax.f32 %v568, %v693
      %v758 = vmax.f32 %v572, %v694
      %v759 = vmax.f32 %v574, %v695
      %v760 = vmax.f32 %v576, %v696
      %v761 = vmax.f32 %v578, %v697
      %v762 = vmax.f32 %v582, %v698
      %v763 = vmax.f32 %v584, %v699
      %v764 = vmax.f32 %v586, %v700
      %v765 = vmax.f32 %v588, %v701
      %v766 = vmax.f32 %v592, %v702
      %v767 = vmax.f32 %v594, %v703
      %v768 = vmax.f32 %v596, %v704
      %v769 = vmax.f32 %v598, %v705
      %v770 = vmax.f32 %v602, %v706
      %v771 = vmax.f32 %v604, %v707
      %v772 = vmax.f32 %v606, %v708
      %v773 = vmax.f32 %v608, %v709
      %v774 = vmax.f32 %v612, %v710
      %v775 = vmax.f32 %v614, %v711
      %v776 = vmax.f32 %v616, %v712
      %v777 = vmax.f32 %v618, %v713
      %v778 = vmax.f32 %v622, %v714
      %v779 = vmax.f32 %v624, %v715
      %v780 = vmax.f32 %v626, %v716
      %v781 = vmax.f32 %v628, %v717
      %v782 = vmax.f32 %v632, %v718
      %v783 = vmax.f32 %v634, %v719
      %v784 = vmax.f32 %v636, %v720
      %v785 = vmax.f32 %v638, %v721
      %v786 = vmax.f32 %v642, %v722
      %v787 = vmax.f32 %v644, %v723
      %v788 = vmax.f32 %v646, %v724
      %v789 = vmax.f32 %v648, %v725
      %v790 = vmax.f32 %v652, %v726
      %v791 = vmax.f32 %v654, %v727
      %v792 = vmax.f32 %v656, %v728
      %v793 = vmax.f32 %v658, %v729
      %v794 = vmax.f32 %v662, %v730
      %v795 = vmax.f32 %v664, %v731
      %v796 = vmax.f32 %v666, %v732
      %v797 = vmax.f32 %v668, %v733
      %v798 = vpack.c.bf16 %v736, %v734
      %v799 = vpack.c.bf16 %v737, %v735
      %v800 = vpack.c.bf16 %v740, %v738
      %v801 = vpack.c.bf16 %v741, %v739
      %v802 = vpack.c.bf16 %v744, %v742
      %v803 = vpack.c.bf16 %v745, %v743
      %v804 = vpack.c.bf16 %v748, %v746
      %v805 = vpack.c.bf16 %v749, %v747
      %v806 = vpack.c.bf16 %v752, %v750
      %v807 = vpack.c.bf16 %v753, %v751
      %v808 = vpack.c.bf16 %v756, %v754
      %v809 = vpack.c.bf16 %v757, %v755
      %v810 = vpack.c.bf16 %v760, %v758
      %v811 = vpack.c.bf16 %v761, %v759
      %v812 = vpack.c.bf16 %v764, %v762
      %v813 = vpack.c.bf16 %v765, %v763
      %v814 = vpack.c.bf16 %v768, %v766
      %v815 = vpack.c.bf16 %v769, %v767
      %v816 = vpack.c.bf16 %v772, %v770
      %v817 = vpack.c.bf16 %v773, %v771
      %v818 = vpack.c.bf16 %v776, %v774
      %v819 = vpack.c.bf16 %v777, %v775
      %v820 = vpack.c.bf16 %v780, %v778
      %v821 = vpack.c.bf16 %v781, %v779
      %v822 = vpack.c.bf16 %v784, %v782
      %v823 = vpack.c.bf16 %v785, %v783
      %v824 = vpack.c.bf16 %v788, %v786
      %v825 = vpack.c.bf16 %v789, %v787
      %v826 = vpack.c.bf16 %v792, %v790
      %v827 = vpack.c.bf16 %v793, %v791
      %v828 = vpack.c.bf16 %v796, %v794
      %v829 = vpack.c.bf16 %v797, %v795
      %v862 = vunpack.c.l.b16 %v798
      %v863 = vunpack.c.l.b16 %v799
      %v864 = vunpack.c.h.b16 %v798
      %v865 = vunpack.c.h.b16 %v799
      %v866 = vunpack.c.l.b16 %v800
      %v867 = vunpack.c.l.b16 %v801
      %v868 = vunpack.c.h.b16 %v800
      %v869 = vunpack.c.h.b16 %v801
      %v870 = vunpack.c.l.b16 %v802
      %v871 = vunpack.c.l.b16 %v803
      %v872 = vunpack.c.h.b16 %v802
      %v873 = vunpack.c.h.b16 %v803
      %v874 = vunpack.c.l.b16 %v804
      %v875 = vunpack.c.l.b16 %v805
      %v876 = vunpack.c.h.b16 %v804
      %v877 = vunpack.c.h.b16 %v805
      %v878 = vunpack.c.l.b16 %v806
      %v879 = vunpack.c.l.b16 %v807
      %v880 = vunpack.c.h.b16 %v806
      %v881 = vunpack.c.h.b16 %v807
      %v882 = vunpack.c.l.b16 %v808
      %v883 = vunpack.c.l.b16 %v809
      %v884 = vunpack.c.h.b16 %v808
      %v885 = vunpack.c.h.b16 %v809
      %v886 = vunpack.c.l.b16 %v810
      %v887 = vunpack.c.l.b16 %v811
      %v888 = vunpack.c.h.b16 %v810
      %v889 = vunpack.c.h.b16 %v811
      %v890 = vunpack.c.l.b16 %v812
      %v891 = vunpack.c.l.b16 %v813
      %v892 = vunpack.c.h.b16 %v812
      %v893 = vunpack.c.h.b16 %v813
      %v894 = vunpack.c.l.b16 %v814
      %v895 = vunpack.c.l.b16 %v815
      %v896 = vunpack.c.h.b16 %v814
      %v897 = vunpack.c.h.b16 %v815
      %v898 = vunpack.c.l.b16 %v816
      %v899 = vunpack.c.l.b16 %v817
      %v900 = vunpack.c.h.b16 %v816
      %v901 = vunpack.c.h.b16 %v817
      %v902 = vunpack.c.l.b16 %v818
      %v903 = vunpack.c.l.b16 %v819
      %v904 = vunpack.c.h.b16 %v818
      %v905 = vunpack.c.h.b16 %v819
      %v906 = vunpack.c.l.b16 %v820
      %v907 = vunpack.c.l.b16 %v821
      %v908 = vunpack.c.h.b16 %v820
      %v909 = vunpack.c.h.b16 %v821
      %v910 = vunpack.c.l.b16 %v822
      %v911 = vunpack.c.l.b16 %v823
      %v912 = vunpack.c.h.b16 %v822
      %v913 = vunpack.c.h.b16 %v823
      %v914 = vunpack.c.l.b16 %v824
      %v915 = vunpack.c.l.b16 %v825
      %v916 = vunpack.c.h.b16 %v824
      %v917 = vunpack.c.h.b16 %v825
      %v918 = vunpack.c.l.b16 %v826
      %v919 = vunpack.c.l.b16 %v827
      %v920 = vunpack.c.h.b16 %v826
      %v921 = vunpack.c.h.b16 %v827
      %v922 = vunpack.c.l.b16 %v828
      %v923 = vunpack.c.l.b16 %v829
      %v924 = vunpack.c.h.b16 %v828
      %v925 = vunpack.c.h.b16 %v829
      %v926 = vpack.c.b16 %v863, %v862
      %v927 = vpack.c.b16 %v865, %v864
      %v928 = vpack.c.b16 %v867, %v866
      %v929 = vpack.c.b16 %v869, %v868
      %v930 = vpack.c.b16 %v871, %v870
      %v931 = vpack.c.b16 %v873, %v872
      %v932 = vpack.c.b16 %v875, %v874
      %v933 = vpack.c.b16 %v877, %v876
      %v934 = vpack.c.b16 %v879, %v878
      %v935 = vpack.c.b16 %v881, %v880
      %v936 = vpack.c.b16 %v883, %v882
      %v937 = vpack.c.b16 %v885, %v884
      %v938 = vpack.c.b16 %v887, %v886
      %v939 = vpack.c.b16 %v889, %v888
      %v940 = vpack.c.b16 %v891, %v890
      %v941 = vpack.c.b16 %v893, %v892
      %v942 = vpack.c.b16 %v895, %v894
      %v943 = vpack.c.b16 %v897, %v896
      %v944 = vpack.c.b16 %v899, %v898
      %v945 = vpack.c.b16 %v901, %v900
      %v946 = vpack.c.b16 %v903, %v902
      %v947 = vpack.c.b16 %v905, %v904
      %v948 = vpack.c.b16 %v907, %v906
      %v949 = vpack.c.b16 %v909, %v908
      %v950 = vpack.c.b16 %v911, %v910
      %v951 = vpack.c.b16 %v913, %v912
      %v952 = vpack.c.b16 %v915, %v914
      %v953 = vpack.c.b16 %v917, %v916
      %v954 = vpack.c.b16 %v919, %v918
      %v955 = vpack.c.b16 %v921, %v920
      %v956 = vpack.c.b16 %v923, %v922
      %v957 = vpack.c.b16 %v925, %v924
      %990 = vst [vmem:[%s237] sm:$0xff] %v926
      %991 = vst [vmem:[%s237 + $0x8] sm:$0xff] %v927
      %992 = vst [vmem:[%s237 + $0x10] sm:$0xff] %v928
      %993 = vst [vmem:[%s237 + $0x18] sm:$0xff] %v929
      %994 = vst [vmem:[%s237 + $0x20] sm:$0xff] %v930
      %995 = vst [vmem:[%s237 + $0x28] sm:$0xff] %v931
      %996 = vst [vmem:[%s237 + $0x30] sm:$0xff] %v932
      %997 = vst [vmem:[%s237 + $0x38] sm:$0xff] %v933
      %998 = vst [vmem:[%s237 + $0x40] sm:$0xff] %v934
      %999 = vst [vmem:[%s237 + $0x48] sm:$0xff] %v935
      %1000 = vst [vmem:[%s237 + $0x50] sm:$0xff] %v936
      %1001 = vst [vmem:[%s237 + $0x58] sm:$0xff] %v937
      %1002 = vst [vmem:[%s237 + $0x60] sm:$0xff] %v938
      %1003 = vst [vmem:[%s237 + $0x68] sm:$0xff] %v939
      %1004 = vst [vmem:[%s237 + $0x70] sm:$0xff] %v940
      %1005 = vst [vmem:[%s237 + $0x78] sm:$0xff] %v941
      %1006 = vst [vmem:[%s237 + $0x80] sm:$0xff] %v942
      %1007 = vst [vmem:[%s237 + $0x88] sm:$0xff] %v943
      %1008 = vst [vmem:[%s237 + $0x90] sm:$0xff] %v944
      %1009 = vst [vmem:[%s237 + $0x98] sm:$0xff] %v945
      %1010 = vst [vmem:[%s237 + $0xa0] sm:$0xff] %v946
      %1011 = vst [vmem:[%s237 + $0xa8] sm:$0xff] %v947
      %1012 = vst [vmem:[%s237 + $0xb0] sm:$0xff] %v948
      %1013 = vst [vmem:[%s237 + $0xb8] sm:$0xff] %v949
      %1014 = vst [vmem:[%s237 + $0xc0] sm:$0xff] %v950
      %1015 = vst [vmem:[%s237 + $0xc8] sm:$0xff] %v951
      %1016 = vst [vmem:[%s237 + $0xd0] sm:$0xff] %v952
      %1017 = vst [vmem:[%s237 + $0xd8] sm:$0xff] %v953
      %1018 = vst [vmem:[%s237 + $0xe0] sm:$0xff] %v954
      %1019 = vst [vmem:[%s237 + $0xe8] sm:$0xff] %v955
      %1020 = vst [vmem:[%s237 + $0xf0] sm:$0xff] %v956
      %1021 = vst [vmem:[%s237 + $0xf8] sm:$0xff] %v957
      %s1022 = smul.u32 32, %s18
      %s1023 = smul.u32 2, %s19
      %p1024 = scmp.lt.s32.totalorder %s1022, 63
      %s1025 = scalar_select %p1024, %s1022, 63
      %p1026 = scmp.lt.s32.totalorder %s1023, 1
      %s1027 = scalar_select %p1026, %s1023, 1
      %s1028 = smul.addr %s1025, 2
      %s1029 = sadd.s32 %s1027, %s1028
      %s1030 = smul.addr %s1029, 4
      %s1031 = scalar_lea.vmem %s3, %s1030
      // Predicated region
      $region33: #{decoder_forward.10} parent=31 // pred_check
        %p1032 = pneg %p124
      $region34: #{decoder_forward.10} parent=31 // pred_check_branch
        %1034 = sbr.rel (%p1032) target = $region36
      $region35: #{decoder_forward.10} parent=31 // pred_region
        %s1035 = smul.u32 32, %s18
        %s1036 = smul.u32 2, %s19
      $region36: #{decoder_forward.10} parent=31 // pred_fallthru
        _
    $region32: #{decoder_forward.10} parent=5 // pred_fallthru
      _
    %p1037 = scmp.le.s32.totalorder 2, %s9
    // Predicated region
    $region37: #{decoder_forward.10} parent=5 // pred_check
      %p1038 = pneg %p1037
    $region38: #{decoder_forward.10} parent=5 // pred_check_branch
      %1040 = sbr.rel (%p1038) target = $region40
    $region39: #{decoder_forward.10} parent=5 // pred_region
      %s1041 = ssub.s32 %s9, 2
      // Predicated region
      $region41: #{decoder_forward.10} parent=39 // pred_check
        %p1042 = pneg %p130
      $region42: #{decoder_forward.10} parent=39 // pred_check_branch
        %1044 = sbr.rel (%p1042) target = $region44
      $region43: #{decoder_forward.10} parent=39 // pred_region
        %s1045 = smul.u32 32, %s20
        %s1046 = smul.u32 2, %s21
        %p1047 = scmp.lt.s32.totalorder %s1045, 63
        %s1048 = scalar_select %p1047, %s1045, 63
        %p1049 = scmp.lt.s32.totalorder %s1046, 1
        %s1050 = scalar_select %p1049, %s1046, 1
        %s1051 = smul.addr %s1048, 2
        %s1052 = sadd.s32 %s1050, %s1051
        %s1053 = smul.addr %s1052, 4
        %s1054 = scalar_lea.vmem %s3, %s1053
      $region44: #{decoder_forward.10} parent=39 // pred_fallthru
        _
    $region40: #{decoder_forward.10} parent=5 // pred_fallthru
      _
  $region6: #{decoder_forward.10} parent=0 // loop_footer
    %s13 = sadd.s32 1, %s9
  $region7: #{decoder_forward.10} parent=0 // loop_footer_branch
    %8 = sbr.rel target = $region3
  $region8: #{decoder_forward.10} parent=0 // loop_exit
    _

// kernel: decoder_forward.11
$region0: #{decoder_forward.11}
  #allocation0 [shape = 'u32[]', space=smem, size = 0x4, offset = 0x4, fixed_abs, tag = 'smem constant byte address 0x4 - core index']
  #allocation1 [shape = 'u32[144,128]{1,0:T(1,128)}', space=vmem, size = 0x12000, scoped, tag = 'internal scratch']
  %s0 = inlined_call_operand.vmem [shape: bf16[2048,64], index: 0, kind: input, shape index: {}]
  %s1 = inlined_call_operand.vmem [shape: bf16[64,128], index: 1, kind: input, shape index: {}]
  %s2 = inlined_call_operand.vmem [shape: f32[1,128], index: 2, kind: input, shape index: {}]
  %s3 = inlined_call_operand.vmem [shape: f32[2048,128], index: 3, kind: output, shape index: {}]
  %s4 = sld [smem:[#allocation0]]
  $region45: #{decoder_forward.11} parent=0
    _
  %s6 = ssub.s32 1, %s4
  %s7 = scalar_select 0, %s6, %s4
  loop: start=0, step=1, limit=10
  $region2: #{decoder_forward.11} parent=0 // loop_pre_header
    _
  $region3: #{decoder_forward.11} parent=0 // loop_header
    %s9 = sphi 0, %s13
    %p10 = scmp.ge.s32.totalorder %s9, 10
    %s16 = sphi 0, %s28
    %s17 = sphi 0, %s24
    %s18 = sphi 0, %s16
    %s19 = sphi 0, %s17
    %s20 = sphi 0, %s18
    %s21 = sphi 0, %s19
    %s31 = sphi 0, %s33
    %s34 = sphi 0, %s31
    %s35 = sphi 0, %s34
    %s51 = sphi 0, %s35
    %s57 = sphi 0, %s59
    %s60 = sphi 0, %s57
    %s61 = sphi 0, %s60
    %s77 = sphi 0, %s61
    %s83 = sphi 0, %s85
    %s86 = sphi 0, %s83
    %s87 = sphi 0, %s86
    %s103 = sphi 0, %s87
    %s111 = sphi 0, %s113
    %s114 = sphi 0, %s111
    %s115 = sphi 0, %s114
    %s131 = sphi 0, %s115
  $region4: #{decoder_forward.11} parent=0 // loop_header_branch
    %12 = sbr.rel (%p10) target = $region8
  $region5: #{decoder_forward.11} parent=0 // loop_body
    %s14 = ssub.s32 %s9, 1
    %s15 = ssub.s32 %s9, 2
    %s22 = sadd.s32 1, %s17
    %p23 = scmp.ge.s32.totalorder %s22, 1
    %s24 = scalar_select %p23, 0, %s22
    %s25 = sadd.s32 1, %s16
    %s26 = scalar_select %p23, %s25, %s16
    %p27 = scmp.ge.s32.totalorder %s26, 8
    %s28 = scalar_select %p27, 0, %s26
    %s29 = ssub.s32 %s16, %s28
    %p30 = scmp.eq.s32.totalorder %s29, 0
    %s32 = sadd.s32 %s31, 1
    %s33 = scalar_select %p30, %s31, %s32
    %p36 = pneg %p30
    %p37 = scmp.eq.s32.totalorder %s9, 7
    %p38 = por %p36, %p37
    %p39 = scmp.ne.s32.totalorder %s31, %s34
    %p40 = scmp.eq.s32.totalorder %s9, 0
    %p41 = por %p39, %p40
    %p42 = scmp.ne.s32.totalorder %s31, %s34
    %p43 = scmp.eq.s32.totalorder %s14, 7
    %p44 = por %p42, %p43
    %p45 = scmp.ne.s32.totalorder %s34, %s35
    %p46 = scmp.eq.s32.totalorder %s14, 0
    %p47 = por %p45, %p46
    %p48 = scmp.ne.s32.totalorder %s34, %s35
    %p49 = scmp.eq.s32.totalorder %s15, 7
    %p50 = por %p48, %p49
    %p52 = scmp.ne.s32.totalorder %s35, %s51
    %p53 = scmp.eq.s32.totalorder %s15, 0
    %p54 = por %p52, %p53
    %s55 = ssub.s32 %s17, %s24
    %p56 = scmp.eq.s32.totalorder %s55, 0
    %s58 = sadd.s32 %s57, 1
    %s59 = scalar_select %p56, %s57, %s58
    %p62 = pneg %p56
    %p63 = scmp.eq.s32.totalorder %s9, 7
    %p64 = por %p62, %p63
    %p65 = scmp.ne.s32.totalorder %s57, %s60
    %p66 = scmp.eq.s32.totalorder %s9, 0
    %p67 = por %p65, %p66
    %p68 = scmp.ne.s32.totalorder %s57, %s60
    %p69 = scmp.eq.s32.totalorder %s14, 7
    %p70 = por %p68, %p69
    %p71 = scmp.ne.s32.totalorder %s60, %s61
    %p72 = scmp.eq.s32.totalorder %s14, 0
    %p73 = por %p71, %p72
    %p74 = scmp.ne.s32.totalorder %s60, %s61
    %p75 = scmp.eq.s32.totalorder %s15, 7
    %p76 = por %p74, %p75
    %p78 = scmp.ne.s32.totalorder %s61, %s77
    %p79 = scmp.eq.s32.totalorder %s15, 0
    %p80 = por %p78, %p79
    %s81 = ssub.s32 %s17, %s24
    %p82 = scmp.eq.s32.totalorder %s81, 0
    %s84 = sadd.s32 %s83, 1
    %s85 = scalar_select %p82, %s83, %s84
    %p88 = pneg %p82
    %p89 = scmp.eq.s32.totalorder %s9, 7
    %p90 = por %p88, %p89
    %p91 = scmp.ne.s32.totalorder %s83, %s86
    %p92 = scmp.eq.s32.totalorder %s9, 0
    %p93 = por %p91, %p92
    %p94 = scmp.ne.s32.totalorder %s83, %s86
    %p95 = scmp.eq.s32.totalorder %s14, 7
    %p96 = por %p94, %p95
    %p97 = scmp.ne.s32.totalorder %s86, %s87
    %p98 = scmp.eq.s32.totalorder %s14, 0
    %p99 = por %p97, %p98
    %p100 = scmp.ne.s32.totalorder %s86, %s87
    %p101 = scmp.eq.s32.totalorder %s15, 7
    %p102 = por %p100, %p101
    %p104 = scmp.ne.s32.totalorder %s87, %s103
    %p105 = scmp.eq.s32.totalorder %s15, 0
    %p106 = por %p104, %p105
    %s107 = ssub.s32 %s16, %s28
    %s108 = ssub.s32 %s17, %s24
    %s109 = sor.u32 %s107, %s108
    %p110 = scmp.eq.s32.totalorder %s109, 0
    %s112 = sadd.s32 %s111, 1
    %s113 = scalar_select %p110, %s111, %s112
    %p116 = pneg %p110
    %p117 = scmp.eq.s32.totalorder %s9, 7
    %p118 = por %p116, %p117
    %p119 = scmp.ne.s32.totalorder %s111, %s114
    %p120 = scmp.eq.s32.totalorder %s9, 0
    %p121 = por %p119, %p120
    %p122 = scmp.ne.s32.totalorder %s111, %s114
    %p123 = scmp.eq.s32.totalorder %s14, 7
    %p124 = por %p122, %p123
    %p125 = scmp.ne.s32.totalorder %s114, %s115
    %p126 = scmp.eq.s32.totalorder %s14, 0
    %p127 = por %p125, %p126
    %p128 = scmp.ne.s32.totalorder %s114, %s115
    %p129 = scmp.eq.s32.totalorder %s15, 7
    %p130 = por %p128, %p129
    %p132 = scmp.ne.s32.totalorder %s115, %s131
    %p133 = scmp.eq.s32.totalorder %s15, 0
    %p134 = por %p132, %p133
    %p135 = scmp.le.s32.totalorder 1, %s9
    %p136 = scmp.lt.s32.totalorder %s9, 9
    %p137 = pnand %p135, %p136
    %p138 = pneg %p137
    // Predicated region
    $region9: #{decoder_forward.11} parent=5 // pred_check
      _
    $region10: #{decoder_forward.11} parent=5 // pred_check_branch
      %140 = sbr.rel (%p137) target = $region12
    $region11: #{decoder_forward.11} parent=5 // pred_region
      %s141 = ssub.s32 %s9, 1
      // Predicated region
      $region13: #{decoder_forward.11} parent=11 // pred_check
        %p142 = pneg %p73
      $region14: #{decoder_forward.11} parent=11 // pred_check_branch
        %144 = sbr.rel (%p142) target = $region16
      $region15: #{decoder_forward.11} parent=11 // pred_region
        %p145 = scmp.lt.s32.totalorder %s19, 0
        %s146 = scalar_select %p145, %s19, 0
        %s147 = smul.addr %s146, 4
        %s148 = scalar_lea.vmem %s1, %s147
      $region16: #{decoder_forward.11} parent=11 // pred_fallthru
        _
      // Predicated region
      $region17: #{decoder_forward.11} parent=11 // pred_check
        %p149 = pneg %p99
      $region18: #{decoder_forward.11} parent=11 // pred_check_branch
        %151 = sbr.rel (%p149) target = $region20
      $region19: #{decoder_forward.11} parent=11 // pred_region
        %p152 = scmp.lt.s32.totalorder %s19, 0
        %s153 = scalar_select %p152, %s19, 0
        %s154 = scalar_lea.vmem %s2, %s153
      $region20: #{decoder_forward.11} parent=11 // pred_fallthru
        _
    $region12: #{decoder_forward.11} parent=5 // pred_fallthru
      _
    %p155 = scmp.lt.s32.totalorder %s9, 8
    // Predicated region
    $region21: #{decoder_forward.11} parent=5 // pred_check
      %p156 = pneg %p155
    $region22: #{decoder_forward.11} parent=5 // pred_check_branch
      %158 = sbr.rel (%p156) target = $region24
    $region23: #{decoder_forward.11} parent=5 // pred_region
      // Predicated region
      $region25: #{decoder_forward.11} parent=23 // pred_check
        %p159 = pneg %p41
      $region26: #{decoder_forward.11} parent=23 // pred_check_branch
        %161 = sbr.rel (%p159) target = $region28
      $region27: #{decoder_forward.11} parent=23 // pred_region
        %s162 = smul.u32 32, %s16
        %p163 = scmp.lt.s32.totalorder %s162, 255
        %s164 = scalar_select %p163, %s162, 255
        %s165 = smul.addr %s164, 4
        %s166 = scalar_lea.vmem %s0, %s165
        %s167 = smul.u32 32, %s16
      $region28: #{decoder_forward.11} parent=23 // pred_fallthru
        _
    $region24: #{decoder_forward.11} parent=5 // pred_fallthru
      _
    %p168 = scmp.le.s32.totalorder 1, %s9
    %p169 = scmp.lt.s32.totalorder %s9, 9
    %p170 = pnand %p168, %p169
    %p171 = pneg %p170
    // Predicated region
    $region29: #{decoder_forward.11} parent=5 // pred_check
      _
    $region30: #{decoder_forward.11} parent=5 // pred_check_branch
      %173 = sbr.rel (%p170) target = $region32
    $region31: #{decoder_forward.11} parent=5 // pred_region
      %s174 = ssub.s32 %s9, 1
      %s175 = smul.u32 32, %s18
      %p176 = scmp.lt.s32.totalorder %s175, 255
      %s177 = scalar_select %p176, %s175, 255
      %s178 = smul.addr %s177, 4
      %s179 = scalar_lea.vmem %s0, %s178
      %p180 = pneg %p47
      %p181 = pneg %p44
      %p182 = scmp.lt.s32.totalorder %s19, 0
      %s183 = scalar_select %p182, %s19, 0
      %s184 = smul.addr %s183, 4
      %s185 = scalar_lea.vmem %s1, %s184
      %p186 = pneg %p73
      %p187 = pneg %p70
      %p188 = scmp.lt.s32.totalorder %s19, 0
      %s189 = scalar_select %p188, %s19, 0
      %s190 = scalar_lea.vmem %s2, %s189
      %p191 = pneg %p99
      %p192 = pneg %p96
      %p193 = pneg %p127
      %p194 = pneg %p124
      %s195 = smul.u32 32, %s18
      %p196 = scmp.lt.s32.totalorder %s195, 255
      %s197 = scalar_select %p196, %s195, 255
      %p198 = scmp.lt.s32.totalorder %s19, 0
      %s199 = scalar_select %p198, %s19, 0
      %s200 = sadd.s32 %s199, %s197
      %s201 = smul.addr %s200, 8
      %s202 = scalar_lea.vmem %s3, %s201
      %s203 = smul.u32 32, %s18
      %p204 = scmp.lt.s32.totalorder %s203, 255
      %s205 = scalar_select %p204, %s203, 255
      %s206 = smul.addr %s205, 4
      %s207 = scalar_lea.vmem %s0, %s206
      %s208 = smul.u32 32, %s18
      %p209 = scmp.lt.s32.totalorder %s19, 0
      %s210 = scalar_select %p209, %s19, 0
      %s211 = smul.addr %s210, 4
      %s212 = scalar_lea.vmem %s1, %s211
      %p213 = scmp.lt.s32.totalorder %s19, 0
      %s214 = scalar_select %p213, %s19, 0
      %s215 = scalar_lea.vmem %s2, %s214
      %s216 = smul.u32 32, %s18
      %p217 = scmp.lt.s32.totalorder %s216, 255
      %s218 = scalar_select %p217, %s216, 255
      %p219 = scmp.lt.s32.totalorder %s19, 0
      %s220 = scalar_select %p219, %s19, 0
      %s221 = sadd.s32 %s220, %s218
      %s222 = smul.addr %s221, 8
      %s223 = scalar_lea.vmem %s3, %s222
      %s224 = smul.u32 32, %s18
      %v226 = vld [vmem:[%s207] sm:$0xf]
      %v227 = vld [vmem:[%s207 + $0x4] sm:$0xf]
      %v228 = vld [vmem:[%s207 + $0x8] sm:$0xf]
      %v229 = vld [vmem:[%s207 + $0xc] sm:$0xf]
      %v230 = vld [vmem:[%s207 + $0x10] sm:$0xf]
      %v231 = vld [vmem:[%s207 + $0x14] sm:$0xf]
      %v232 = vld [vmem:[%s207 + $0x18] sm:$0xf]
      %v233 = vld [vmem:[%s207 + $0x1c] sm:$0xf]
      %v234 = vld [vmem:[%s207 + $0x20] sm:$0xf]
      %v235 = vld [vmem:[%s207 + $0x24] sm:$0xf]
      %v236 = vld [vmem:[%s207 + $0x28] sm:$0xf]
      %v237 = vld [vmem:[%s207 + $0x2c] sm:$0xf]
      %v238 = vld [vmem:[%s207 + $0x30] sm:$0xf]
      %v239 = vld [vmem:[%s207 + $0x34] sm:$0xf]
      %v240 = vld [vmem:[%s207 + $0x38] sm:$0xf]
      %v241 = vld [vmem:[%s207 + $0x3c] sm:$0xf]
      %v242 = vld [vmem:[%s207 + $0x40] sm:$0xf]
      %v243 = vld [vmem:[%s207 + $0x44] sm:$0xf]
      %v244 = vld [vmem:[%s207 + $0x48] sm:$0xf]
      %v245 = vld [vmem:[%s207 + $0x4c] sm:$0xf]
      %v246 = vld [vmem:[%s207 + $0x50] sm:$0xf]
      %v247 = vld [vmem:[%s207 + $0x54] sm:$0xf]
      %v248 = vld [vmem:[%s207 + $0x58] sm:$0xf]
      %v249 = vld [vmem:[%s207 + $0x5c] sm:$0xf]
      %v250 = vld [vmem:[%s207 + $0x60] sm:$0xf]
      %v251 = vld [vmem:[%s207 + $0x64] sm:$0xf]
      %v252 = vld [vmem:[%s207 + $0x68] sm:$0xf]
      %v253 = vld [vmem:[%s207 + $0x6c] sm:$0xf]
      %v254 = vld [vmem:[%s207 + $0x70] sm:$0xf]
      %v255 = vld [vmem:[%s207 + $0x74] sm:$0xf]
      %v256 = vld [vmem:[%s207 + $0x78] sm:$0xf]
      %v257 = vld [vmem:[%s207 + $0x7c] sm:$0xf]
      %v258 = vld [vmem:[%s212] sm:$0xf]
      %v259 = vld [vmem:[%s212 + $0x4] sm:$0xf]
      %v260 = vld [vmem:[%s212 + $0x8] sm:$0xf]
      %v261 = vld [vmem:[%s212 + $0xc] sm:$0xf]
      %v262 = vld [vmem:[%s212 + $0x10] sm:$0xf]
      %v263 = vld [vmem:[%s212 + $0x14] sm:$0xf]
      %v264 = vld [vmem:[%s212 + $0x18] sm:$0xf]
      %v265 = vld [vmem:[%s212 + $0x1c] sm:$0xf]
      %v266 = vld [vmem:[%s215] sm:$0x1]
      %v268 = vlaneseq
      %v269 = vshrl.u32 %v268, 7
      %v270 = vsub.s32 0, %v269
      %v271 = vrot.slane %v266, %v270
      %v305 = vunpack.c.l.b16 %v226
      %v306 = vunpack.c.l.b16 %v227
      %v307 = vunpack.c.l.b16 %v228
      %v308 = vunpack.c.l.b16 %v229
      %v309 = vunpack.c.l.b16 %v230
      %v310 = vunpack.c.l.b16 %v231
      %v311 = vunpack.c.l.b16 %v232
      %v312 = vunpack.c.l.b16 %v233
      %v313 = vunpack.c.l.b16 %v234
      %v314 = vunpack.c.l.b16 %v235
      %v315 = vunpack.c.l.b16 %v236
      %v316 = vunpack.c.l.b16 %v237
      %v317 = vunpack.c.l.b16 %v238
      %v318 = vunpack.c.l.b16 %v239
      %v319 = vunpack.c.l.b16 %v240
      %v320 = vunpack.c.l.b16 %v241
      %v321 = vunpack.c.l.b16 %v242
      %v322 = vunpack.c.l.b16 %v243
      %v323 = vunpack.c.l.b16 %v244
      %v324 = vunpack.c.l.b16 %v245
      %v325 = vunpack.c.l.b16 %v246
      %v326 = vunpack.c.l.b16 %v247
      %v327 = vunpack.c.l.b16 %v248
      %v328 = vunpack.c.l.b16 %v249
      %v329 = vunpack.c.l.b16 %v250
      %v330 = vunpack.c.l.b16 %v251
      %v331 = vunpack.c.l.b16 %v252
      %v332 = vunpack.c.l.b16 %v253
      %v333 = vunpack.c.l.b16 %v254
      %v334 = vunpack.c.l.b16 %v255
      %v335 = vunpack.c.l.b16 %v256
      %v336 = vunpack.c.l.b16 %v257
      %v337 = vpack.c.b16 %v306, %v305
      %v338 = vpack.c.b16 %v308, %v307
      %v339 = vpack.c.b16 %v310, %v309
      %v340 = vpack.c.b16 %v312, %v311
      %v341 = vpack.c.b16 %v314, %v313
      %v342 = vpack.c.b16 %v316, %v315
      %v343 = vpack.c.b16 %v318, %v317
      %v344 = vpack.c.b16 %v320, %v319
      %v345 = vpack.c.b16 %v322, %v321
      %v346 = vpack.c.b16 %v324, %v323
      %v347 = vpack.c.b16 %v326, %v325
      %v348 = vpack.c.b16 %v328, %v327
      %v349 = vpack.c.b16 %v330, %v329
      %v350 = vpack.c.b16 %v332, %v331
      %v351 = vpack.c.b16 %v334, %v333
      %v352 = vpack.c.b16 %v336, %v335
      %v361 = vunpack.c.l.b16 %v258
      %v362 = vunpack.c.l.b16 %v259
      %v363 = vunpack.c.l.b16 %v260
      %v364 = vunpack.c.l.b16 %v261
      %v365 = vunpack.c.l.b16 %v262
      %v366 = vunpack.c.l.b16 %v263
      %v367 = vunpack.c.l.b16 %v264
      %v368 = vunpack.c.l.b16 %v265
      %v369 = vpack.c.b16 %v362, %v361
      %v370 = vpack.c.b16 %v364, %v363
      %v371 = vpack.c.b16 %v366, %v365
      %v372 = vpack.c.b16 %v368, %v367
      %vm377 = vcmask 523264
      %v379 = vsel %vm377, %v337, 0
      %v382 = vsel %vm377, %v338, 0
      %v385 = vsel %vm377, %v339, 0
      %v388 = vsel %vm377, %v340, 0
      %v391 = vsel %vm377, %v341, 0
      %v394 = vsel %vm377, %v342, 0
      %v397 = vsel %vm377, %v343, 0
      %v400 = vsel %vm377, %v344, 0
      %v403 = vsel %vm377, %v345, 0
      %v406 = vsel %vm377, %v346, 0
      %v409 = vsel %vm377, %v347, 0
      %v412 = vsel %vm377, %v348, 0
      %v415 = vsel %vm377, %v349, 0
      %v418 = vsel %vm377, %v350, 0
      %v421 = vsel %vm377, %v351, 0
      %v424 = vsel %vm377, %v352, 0
      %426 = vmatprep.subr.bf16.mxu0 0
      %427 = vmatpush1.bf16.msra.mxu0 %v369
      %428 = vmatprep.subr.bf16.mxu0 0
      %429 = vmatpush1.bf16.msra.mxu0 %v370
      %430 = vmatprep.subr.bf16.mxu0 0
      %431 = vmatpush1.bf16.msra.mxu0 %v371
      %432 = vmatprep.subr.bf16.mxu0 0
      %433 = vmatpush1.bf16.msra.mxu0 %v372
      %434 = vmatprep.subr.bf16.mxu0 0
      %435 = vmatpush1.bf16.msra.mxu0 0
      %436 = vmatprep.subr.bf16.mxu0 0
      %437 = vmatpush1.bf16.msra.mxu0 0
      %438 = vmatprep.subr.bf16.mxu0 0
      %439 = vmatpush1.bf16.msra.mxu0 0
      %440 = vmatprep.subr.bf16.mxu0 0
      %441 = vmatpush1.bf16.msra.mxu0 0
      %442 = vmatprep.subr.bf16.mxu0 0
      %443 = vmatpush1.bf16.msra.mxu0 0
      %444 = vmatprep.subr.bf16.mxu0 0
      %445 = vmatpush1.bf16.msra.mxu0 0
      %446 = vmatprep.subr.bf16.mxu0 0
      %447 = vmatpush1.bf16.msra.mxu0 0
      %448 = vmatprep.subr.bf16.mxu0 0
      %449 = vmatpush1.bf16.msra.mxu0 0
      %450 = vmatprep.subr.bf16.mxu0 0
      %451 = vmatpush1.bf16.msra.mxu0 0
      %452 = vmatprep.subr.bf16.mxu0 0
      %453 = vmatpush1.bf16.msra.mxu0 0
      %454 = vmatprep.subr.bf16.mxu0 0
      %455 = vmatpush1.bf16.msra.mxu0 0
      %456 = vmatprep.subr.bf16.mxu0 0
      %457 = vmatpush1.bf16.msra.mxu0 0
      %458 = vmatprep.mubr.bf16.mxu0 0
      %459 = vmatmul.mubr.bf16.gmra.mrb[0].mxu0 %v379
      %v460 = vpop.f32.mrb[0].mxu0
      %v461 = vadd.f32 %v271, %v460
      %v462 = vpop.f32.mrb[0].mxu0
      %v463 = vpop.f32.mrb[0].mxu0
      %v464 = vadd.f32 %v271, %v463
      %v465 = vpop.f32.mrb[0].mxu0
      %466 = vmatprep.mubr.bf16.mxu0 0
      %467 = vmatmul.mubr.bf16.gmra.mrb[0].mxu0 %v382
      %v468 = vpop.f32.mrb[0].mxu0
      %v469 = vadd.f32 %v271, %v468
      %v470 = vpop.f32.mrb[0].mxu0
      %v471 = vpop.f32.mrb[0].mxu0
      %v472 = vadd.f32 %v271, %v471
      %v473 = vpop.f32.mrb[0].mxu0
      %474 = vmatprep.mubr.bf16.mxu0 0
      %475 = vmatmul.mubr.bf16.gmra.mrb[0].mxu0 %v385
      %v476 = vpop.f32.mrb[0].mxu0
      %v477 = vadd.f32 %v271, %v476
      %v478 = vpop.f32.mrb[0].mxu0
      %v479 = vpop.f32.mrb[0].mxu0
      %v480 = vadd.f32 %v271, %v479
      %v481 = vpop.f32.mrb[0].mxu0
      %482 = vmatprep.mubr.bf16.mxu0 0
      %483 = vmatmul.mubr.bf16.gmra.mrb[0].mxu0 %v388
      %v484 = vpop.f32.mrb[0].mxu0
      %v485 = vadd.f32 %v271, %v484
      %v486 = vpop.f32.mrb[0].mxu0
      %v487 = vpop.f32.mrb[0].mxu0
      %v488 = vadd.f32 %v271, %v487
      %v489 = vpop.f32.mrb[0].mxu0
      %490 = vmatprep.mubr.bf16.mxu0 0
      %491 = vmatmul.mubr.bf16.gmra.mrb[0].mxu0 %v391
      %v492 = vpop.f32.mrb[0].mxu0
      %v493 = vadd.f32 %v271, %v492
      %v494 = vpop.f32.mrb[0].mxu0
      %v495 = vpop.f32.mrb[0].mxu0
      %v496 = vadd.f32 %v271, %v495
      %v497 = vpop.f32.mrb[0].mxu0
      %498 = vmatprep.mubr.bf16.mxu0 0
      %499 = vmatmul.mubr.bf16.gmra.mrb[0].mxu0 %v394
      %v500 = vpop.f32.mrb[0].mxu0
      %v501 = vadd.f32 %v271, %v500
      %v502 = vpop.f32.mrb[0].mxu0
      %v503 = vpop.f32.mrb[0].mxu0
      %v504 = vadd.f32 %v271, %v503
      %v505 = vpop.f32.mrb[0].mxu0
      %506 = vmatprep.mubr.bf16.mxu0 0
      %507 = vmatmul.mubr.bf16.gmra.mrb[0].mxu0 %v397
      %v508 = vpop.f32.mrb[0].mxu0
      %v509 = vadd.f32 %v271, %v508
      %v510 = vpop.f32.mrb[0].mxu0
      %v511 = vpop.f32.mrb[0].mxu0
      %v512 = vadd.f32 %v271, %v511
      %v513 = vpop.f32.mrb[0].mxu0
      %514 = vmatprep.mubr.bf16.mxu0 0
      %515 = vmatmul.mubr.bf16.gmra.mrb[0].mxu0 %v400
      %v516 = vpop.f32.mrb[0].mxu0
      %v517 = vadd.f32 %v271, %v516
      %v518 = vpop.f32.mrb[0].mxu0
      %v519 = vpop.f32.mrb[0].mxu0
      %v520 = vadd.f32 %v271, %v519
      %v521 = vpop.f32.mrb[0].mxu0
      %522 = vmatprep.mubr.bf16.mxu0 0
      %523 = vmatmul.mubr.bf16.gmra.mrb[0].mxu0 %v403
      %v524 = vpop.f32.mrb[0].mxu0
      %v525 = vadd.f32 %v271, %v524
      %v526 = vpop.f32.mrb[0].mxu0
      %v527 = vpop.f32.mrb[0].mxu0
      %v528 = vadd.f32 %v271, %v527
      %v529 = vpop.f32.mrb[0].mxu0
      %530 = vmatprep.mubr.bf16.mxu0 0
      %531 = vmatmul.mubr.bf16.gmra.mrb[0].mxu0 %v406
      %v532 = vpop.f32.mrb[0].mxu0
      %v533 = vadd.f32 %v271, %v532
      %v534 = vpop.f32.mrb[0].mxu0
      %v535 = vpop.f32.mrb[0].mxu0
      %v536 = vadd.f32 %v271, %v535
      %v537 = vpop.f32.mrb[0].mxu0
      %538 = vmatprep.mubr.bf16.mxu0 0
      %539 = vmatmul.mubr.bf16.gmra.mrb[0].mxu0 %v409
      %v540 = vpop.f32.mrb[0].mxu0
      %v541 = vadd.f32 %v271, %v540
      %v542 = vpop.f32.mrb[0].mxu0
      %v543 = vpop.f32.mrb[0].mxu0
      %v544 = vadd.f32 %v271, %v543
      %v545 = vpop.f32.mrb[0].mxu0
      %546 = vmatprep.mubr.bf16.mxu0 0
      %547 = vmatmul.mubr.bf16.gmra.mrb[0].mxu0 %v412
      %v548 = vpop.f32.mrb[0].mxu0
      %v549 = vadd.f32 %v271, %v548
      %v550 = vpop.f32.mrb[0].mxu0
      %v551 = vpop.f32.mrb[0].mxu0
      %v552 = vadd.f32 %v271, %v551
      %v553 = vpop.f32.mrb[0].mxu0
      %554 = vmatprep.mubr.bf16.mxu0 0
      %555 = vmatmul.mubr.bf16.gmra.mrb[0].mxu0 %v415
      %v556 = vpop.f32.mrb[0].mxu0
      %v557 = vadd.f32 %v271, %v556
      %v558 = vpop.f32.mrb[0].mxu0
      %v559 = vpop.f32.mrb[0].mxu0
      %v560 = vadd.f32 %v271, %v559
      %v561 = vpop.f32.mrb[0].mxu0
      %562 = vmatprep.mubr.bf16.mxu0 0
      %563 = vmatmul.mubr.bf16.gmra.mrb[0].mxu0 %v418
      %v564 = vpop.f32.mrb[0].mxu0
      %v565 = vadd.f32 %v271, %v564
      %v566 = vpop.f32.mrb[0].mxu0
      %v567 = vpop.f32.mrb[0].mxu0
      %v568 = vadd.f32 %v271, %v567
      %v569 = vpop.f32.mrb[0].mxu0
      %570 = vmatprep.mubr.bf16.mxu0 0
      %571 = vmatmul.mubr.bf16.gmra.mrb[0].mxu0 %v421
      %v572 = vpop.f32.mrb[0].mxu0
      %v573 = vadd.f32 %v271, %v572
      %v574 = vpop.f32.mrb[0].mxu0
      %v575 = vpop.f32.mrb[0].mxu0
      %v576 = vadd.f32 %v271, %v575
      %v577 = vpop.f32.mrb[0].mxu0
      %578 = vmatprep.mubr.bf16.mxu0 0
      %579 = vmatmul.mubr.bf16.gmra.mrb[0].mxu0 %v424
      %v580 = vpop.f32.mrb[0].mxu0
      %v581 = vadd.f32 %v271, %v580
      %v582 = vpop.f32.mrb[0].mxu0
      %v583 = vpop.f32.mrb[0].mxu0
      %v584 = vadd.f32 %v271, %v583
      %v585 = vpop.f32.mrb[0].mxu0
      %586 = vdwg.mxu0
      %v587 = vtanh.pop %v461
      %v588 = vtanh.pop %v464
      %v589 = vtanh.pop %v469
      %v590 = vtanh.pop %v472
      %v591 = vtanh.pop %v477
      %v592 = vtanh.pop %v480
      %v593 = vtanh.pop %v485
      %v594 = vtanh.pop %v488
      %v595 = vtanh.pop %v493
      %v596 = vtanh.pop %v496
      %v597 = vtanh.pop %v501
      %v598 = vtanh.pop %v504
      %v599 = vtanh.pop %v509
      %v600 = vtanh.pop %v512
      %v601 = vtanh.pop %v517
      %v602 = vtanh.pop %v520
      %v603 = vtanh.pop %v525
      %v604 = vtanh.pop %v528
      %v605 = vtanh.pop %v533
      %v606 = vtanh.pop %v536
      %v607 = vtanh.pop %v541
      %v608 = vtanh.pop %v544
      %v609 = vtanh.pop %v549
      %v610 = vtanh.pop %v552
      %v611 = vtanh.pop %v557
      %v612 = vtanh.pop %v560
      %v613 = vtanh.pop %v565
      %v614 = vtanh.pop %v568
      %v615 = vtanh.pop %v573
      %v616 = vtanh.pop %v576
      %v617 = vtanh.pop %v581
      %v618 = vtanh.pop %v584
      %619 = vst [vmem:[%s223] sm:$0xff] %v587
      %620 = vst [vmem:[%s223 + $0x8] sm:$0xff] %v588
      %621 = vst [vmem:[%s223 + $0x10] sm:$0xff] %v589
      %622 = vst [vmem:[%s223 + $0x18] sm:$0xff] %v590
      %623 = vst [vmem:[%s223 + $0x20] sm:$0xff] %v591
      %624 = vst [vmem:[%s223 + $0x28] sm:$0xff] %v592
      %625 = vst [vmem:[%s223 + $0x30] sm:$0xff] %v593
      %626 = vst [vmem:[%s223 + $0x38] sm:$0xff] %v594
      %627 = vst [vmem:[%s223 + $0x40] sm:$0xff] %v595
      %628 = vst [vmem:[%s223 + $0x48] sm:$0xff] %v596
      %629 = vst [vmem:[%s223 + $0x50] sm:$0xff] %v597
      %630 = vst [vmem:[%s223 + $0x58] sm:$0xff] %v598
      %631 = vst [vmem:[%s223 + $0x60] sm:$0xff] %v599
      %632 = vst [vmem:[%s223 + $0x68] sm:$0xff] %v600
      %633 = vst [vmem:[%s223 + $0x70] sm:$0xff] %v601
      %634 = vst [vmem:[%s223 + $0x78] sm:$0xff] %v602
      %635 = vst [vmem:[%s223 + $0x80] sm:$0xff] %v603
      %636 = vst [vmem:[%s223 + $0x88] sm:$0xff] %v604
      %637 = vst [vmem:[%s223 + $0x90] sm:$0xff] %v605
      %638 = vst [vmem:[%s223 + $0x98] sm:$0xff] %v606
      %639 = vst [vmem:[%s223 + $0xa0] sm:$0xff] %v607
      %640 = vst [vmem:[%s223 + $0xa8] sm:$0xff] %v608
      %641 = vst [vmem:[%s223 + $0xb0] sm:$0xff] %v609
      %642 = vst [vmem:[%s223 + $0xb8] sm:$0xff] %v610
      %643 = vst [vmem:[%s223 + $0xc0] sm:$0xff] %v611
      %644 = vst [vmem:[%s223 + $0xc8] sm:$0xff] %v612
      %645 = vst [vmem:[%s223 + $0xd0] sm:$0xff] %v613
      %646 = vst [vmem:[%s223 + $0xd8] sm:$0xff] %v614
      %647 = vst [vmem:[%s223 + $0xe0] sm:$0xff] %v615
      %648 = vst [vmem:[%s223 + $0xe8] sm:$0xff] %v616
      %649 = vst [vmem:[%s223 + $0xf0] sm:$0xff] %v617
      %650 = vst [vmem:[%s223 + $0xf8] sm:$0xff] %v618
      %s651 = smul.u32 32, %s18
      %p652 = scmp.lt.s32.totalorder %s651, 255
      %s653 = scalar_select %p652, %s651, 255
      %p654 = scmp.lt.s32.totalorder %s19, 0
      %s655 = scalar_select %p654, %s19, 0
      %s656 = sadd.s32 %s655, %s653
      %s657 = smul.addr %s656, 8
      %s658 = scalar_lea.vmem %s3, %s657
      // Predicated region
      $region33: #{decoder_forward.11} parent=31 // pred_check
        %p659 = pneg %p124
      $region34: #{decoder_forward.11} parent=31 // pred_check_branch
        %661 = sbr.rel (%p659) target = $region36
      $region35: #{decoder_forward.11} parent=31 // pred_region
        %s662 = smul.u32 32, %s18
      $region36: #{decoder_forward.11} parent=31 // pred_fallthru
        _
    $region32: #{decoder_forward.11} parent=5 // pred_fallthru
      _
    %p663 = scmp.le.s32.totalorder 2, %s9
    // Predicated region
    $region37: #{decoder_forward.11} parent=5 // pred_check
      %p664 = pneg %p663
    $region38: #{decoder_forward.11} parent=5 // pred_check_branch
      %666 = sbr.rel (%p664) target = $region40
    $region39: #{decoder_forward.11} parent=5 // pred_region
      %s667 = ssub.s32 %s9, 2
      // Predicated region
      $region41: #{decoder_forward.11} parent=39 // pred_check
        %p668 = pneg %p130
      $region42: #{decoder_forward.11} parent=39 // pred_check_branch
        %670 = sbr.rel (%p668) target = $region44
      $region43: #{decoder_forward.11} parent=39 // pred_region
        %s671 = smul.u32 32, %s20
        %p672 = scmp.lt.s32.totalorder %s671, 255
        %s673 = scalar_select %p672, %s671, 255
        %p674 = scmp.lt.s32.totalorder %s21, 0
        %s675 = scalar_select %p674, %s21, 0
        %s676 = sadd.s32 %s675, %s673
        %s677 = smul.addr %s676, 8
        %s678 = scalar_lea.vmem %s3, %s677
      $region44: #{decoder_forward.11} parent=39 // pred_fallthru
        _
    $region40: #{decoder_forward.11} parent=5 // pred_fallthru
      _
  $region6: #{decoder_forward.11} parent=0 // loop_footer
    %s13 = sadd.s32 1, %s9
  $region7: #{decoder_forward.11} parent=0 // loop_footer_branch
    %8 = sbr.rel target = $region3
  $region8: #{decoder_forward.11} parent=0 // loop_exit
    _

</llo_original>
